<compile_context>
chip_gen: v5e
topology: v5e:2x2
jax: 0.10.0
libtpu: 0.0.40
codegen_flags: <defaults>
</compile_context>

<pallas_src>
import functools

import jax
import jax.numpy as jnp
from jax.experimental import pallas as pl
from jax.experimental.pallas import tpu as pltpu

# ----------------------------- model config ---------------------------------
VOCAB = 100
HIDDEN = 32
N_HEADS = 2
HEAD_DIM = HIDDEN // N_HEADS
FFN = 64
N_LAYERS = 2
NUM_LABELS = 5
PAD_IDX = 1
LN_EPS = 1e-5
LANE = 128           # lane-dense padding width for kernel outputs / packed params


def _full_spec(shape):
    """BlockSpec covering the full array (tiny shapes -> single block)."""
    nd = len(shape)
    return pl.BlockSpec(shape, lambda i, _nd=nd: (0,) * _nd)


# ------------------------------- fused kernel --------------------------------
def _layernorm(x, g, b):
    mu = jnp.mean(x, axis=-1, keepdims=True)
    var = jnp.mean((x - mu) * (x - mu), axis=-1, keepdims=True)
    return (x - mu) * jax.lax.rsqrt(var + LN_EPS) * g + b


def _fused_kernel(emb_ref, mask_ref, labels_ref,
                  wqkv_ref, wo_ref, w1_ref, w2_ref, lsmall_ref,
                  head_small_ref, cls_dense_w_ref, cls_out_w_ref,
                  logits_ref, loss_ref, *, n_rows, seq_len):
    N, S = n_rows, seq_len
    scale = 1.0 / (HEAD_DIM ** 0.5)

    head_small = head_small_ref[...]                       # (8, 128)
    emb_ln_g = head_small[0:1, 0:HIDDEN]
    emb_ln_b = head_small[1:2, 0:HIDDEN]
    cls_dense_b = head_small[2:3, 0:HIDDEN]
    cls_out_b = head_small[3:4, :]                         # (1, 128), zero-padded

    add_mask = mask_ref[...]                               # (N, S) additive mask

    # embeddings LayerNorm; residual stream h stays VMEM/vreg-resident below.
    h = _layernorm(emb_ref[...], emb_ln_g, emb_ln_b)       # (N*S, HIDDEN)

    for l in range(N_LAYERS):                              # static unroll (2 layers)
        wqkv = wqkv_ref[l]                                 # (HIDDEN, 3*HIDDEN)
        wo = wo_ref[l]                                     # (HIDDEN, HIDDEN)
        w1 = w1_ref[l]                                     # (HIDDEN, FFN)
        w2 = w2_ref[l]                                     # (FFN, HIDDEN)
        small = lsmall_ref[l]                              # (8, 128) packed vectors
        bqkv = small[0:1, 0:3 * HIDDEN]
        bo = small[1:2, 0:HIDDEN]
        ln1_g = small[2:3, 0:HIDDEN]
        ln1_b = small[3:4, 0:HIDDEN]
        b1 = small[4:5, 0:FFN]
        b2 = small[5:6, 0:HIDDEN]
        ln2_g = small[6:7, 0:HIDDEN]
        ln2_b = small[7:8, 0:HIDDEN]

        # fused Q|K|V projection: one MXU pass, one bias add
        qkv = jnp.dot(h, wqkv, preferred_element_type=jnp.float32) + bqkv  # (N*S, 96)

        # multi-head attention; heads are static lane-slices of the QKV block
        ctx_heads = []
        for hd in range(N_HEADS):
            qo = hd * HEAD_DIM
            ko = HIDDEN + hd * HEAD_DIM
            vo = 2 * HIDDEN + hd * HEAD_DIM
            qh = qkv[:, qo:qo + HEAD_DIM].reshape(N, S, HEAD_DIM)
            kh = qkv[:, ko:ko + HEAD_DIM].reshape(N, S, HEAD_DIM)
            vh = qkv[:, vo:vo + HEAD_DIM].reshape(N, S, HEAD_DIM)
            s = jnp.einsum("bqd,bkd->bqk", qh, kh,
                           preferred_element_type=jnp.float32) * scale
            s = s + add_mask[:, None, :]
            s = s - jnp.max(s, axis=-1, keepdims=True)
            p = jnp.exp(s)
            p = p / jnp.sum(p, axis=-1, keepdims=True)
            ch = jnp.einsum("bqk,bkd->bqd", p, vh,
                            preferred_element_type=jnp.float32)
            ctx_heads.append(ch.reshape(N * S, HEAD_DIM))
        ctx = jnp.concatenate(ctx_heads, axis=-1)                          # (N*S, HIDDEN)

        attn_out = jnp.dot(ctx, wo, preferred_element_type=jnp.float32) + bo
        h = _layernorm(h + attn_out, ln1_g, ln1_b)

        # TODO(synk): exact (erf) GELU of HF RoBERTa replaced by tanh approximation.
        ff = jnp.dot(h, w1, preferred_element_type=jnp.float32) + b1
        ff = jax.nn.gelu(ff, approximate=True)
        ff = jnp.dot(ff, w2, preferred_element_type=jnp.float32) + b2
        h = _layernorm(h + ff, ln2_g, ln2_b)

    # --- classification head: pick <s> (token 0 of each sequence) with a
    #     selection matmul (avoids strided sublane gathers).
    row = jax.lax.broadcasted_iota(jnp.int32, (N, N * S), 0)
    col = jax.lax.broadcasted_iota(jnp.int32, (N, N * S), 1)
    sel = (col == row * S).astype(jnp.float32)                 # (N, N*S)
    cls = jnp.dot(sel, h, preferred_element_type=jnp.float32)  # (N, HIDDEN)

    x = jnp.tanh(jnp.dot(cls, cls_dense_w_ref[...],
                         preferred_element_type=jnp.float32) + cls_dense_b)
    logits = jnp.dot(x, cls_out_w_ref[...],
                     preferred_element_type=jnp.float32) + cls_out_b       # (N, 128)
    logits_ref[...] = logits                                   # lane-dense store

    # --- cross entropy over the first NUM_LABELS columns (padding masked)
    lane_idx = jax.lax.broadcasted_iota(jnp.int32, (N, LANE), 1)
    valid = lane_idx < NUM_LABELS
    masked_logits = jnp.where(valid, logits, jnp.float32(-1e30))
    m = jnp.max(masked_logits, axis=-1, keepdims=True)
    exp = jnp.where(valid, jnp.exp(masked_logits - m), 0.0)
    lse = jnp.log(jnp.sum(exp, axis=-1, keepdims=True)) + m
    labels = labels_ref[...]                                    # (N, 1) i32
    onehot = (lane_idx == labels).astype(jnp.float32)
    picked = jnp.sum(onehot * logits, axis=-1, keepdims=True)
    nll = lse - picked                                          # (N, 1)
    loss = jnp.sum(nll) * (1.0 / N)                             # mean reduction
    loss_ref[...] = jnp.zeros((1, LANE), jnp.float32) + loss    # lane-dense scalar


def roberta_fused_forward(packed, emb, add_mask, labels2):
    """emb: (N*S, H) f32, add_mask: (N, S) f32, labels2: (N, 1) i32."""
    NS, H = emb.shape
    N = labels2.shape[0]
    S = NS // N
    kernel = functools.partial(_fused_kernel, n_rows=N, seq_len=S)
    logits_pad, loss_vec = pl.pallas_call(
        kernel,
        grid=(1,),
        in_specs=[
            _full_spec((NS, H)),
            _full_spec((N, S)),
            _full_spec((N, 1)),
            _full_spec(packed["wqkv"].shape),
            _full_spec(packed["wo"].shape),
            _full_spec(packed["w1"].shape),
            _full_spec(packed["w2"].shape),
            _full_spec(packed["lsmall"].shape),
            _full_spec(packed["head_small"].shape),
            _full_spec(packed["cls_dense_w"].shape),
            _full_spec(packed["cls_out_w"].shape),
        ],
        out_specs=[_full_spec((N, LANE)), _full_spec((1, LANE))],
        out_shape=[jax.ShapeDtypeStruct((N, LANE), jnp.float32),
                   jax.ShapeDtypeStruct((1, LANE), jnp.float32)],
        compiler_params=pltpu.CompilerParams(
            dimension_semantics=("arbitrary",)),
    )(emb, add_mask, labels2,
      packed["wqkv"], packed["wo"], packed["w1"], packed["w2"],
      packed["lsmall"], packed["head_small"],
      packed["cls_dense_w"], packed["cls_out_w"])
    logits = logits_pad[:, :NUM_LABELS]
    loss = loss_vec[0, 0]
    return logits, loss


# --------------------------- parameter init / packing ------------------------
def init_params(key, seq_len):
    max_pos = seq_len + 4  # room for padding_idx offset
    ks = iter(jax.random.split(key, 64))

    def w(shape, scale=0.02):
        return (scale * jax.random.normal(next(ks), shape)).astype(jnp.float32)

    params = {
        "word_emb": w((VOCAB, HIDDEN)),
        "pos_emb": w((max_pos, HIDDEN)),
        "type_emb": w((1, HIDDEN)),
        "emb_ln_g": jnp.ones((HIDDEN,), jnp.float32),
        "emb_ln_b": jnp.zeros((HIDDEN,), jnp.float32),
        "layers": [],
        "cls_dense_w": w((HIDDEN, HIDDEN)),
        "cls_dense_b": jnp.zeros((HIDDEN,), jnp.float32),
        "cls_out_w": w((HIDDEN, NUM_LABELS)),
        "cls_out_b": jnp.zeros((NUM_LABELS,), jnp.float32),
    }
    for _ in range(N_LAYERS):
        params["layers"].append(
            {
                "wq": w((HIDDEN, HIDDEN)), "bq": jnp.zeros((HIDDEN,), jnp.float32),
                "wk": w((HIDDEN, HIDDEN)), "bk": jnp.zeros((HIDDEN,), jnp.float32),
                "wv": w((HIDDEN, HIDDEN)), "bv": jnp.zeros((HIDDEN,), jnp.float32),
                "wo": w((HIDDEN, HIDDEN)), "bo": jnp.zeros((HIDDEN,), jnp.float32),
                "ln1_g": jnp.ones((HIDDEN,), jnp.float32),
                "ln1_b": jnp.zeros((HIDDEN,), jnp.float32),
                "w1": w((HIDDEN, FFN)), "b1": jnp.zeros((FFN,), jnp.float32),
                "w2": w((FFN, HIDDEN)), "b2": jnp.zeros((HIDDEN,), jnp.float32),
                "ln2_g": jnp.ones((HIDDEN,), jnp.float32),
                "ln2_b": jnp.zeros((HIDDEN,), jnp.float32),
            }
        )
    return params


def pack_params(params):
    """Fuse QKV weights and pack all small 1-D params into lane-dense blocks."""
    layers = params["layers"]
    wqkv = jnp.stack(
        [jnp.concatenate([l["wq"], l["wk"], l["wv"]], axis=1) for l in layers])
    wo = jnp.stack([l["wo"] for l in layers])
    w1 = jnp.stack([l["w1"] for l in layers])
    w2 = jnp.stack([l["w2"] for l in layers])

    lsmall = jnp.zeros((N_LAYERS, 8, LANE), jnp.float32)
    for i, l in enumerate(layers):
        lsmall = lsmall.at[i, 0, :3 * HIDDEN].set(
            jnp.concatenate([l["bq"], l["bk"], l["bv"]]))
        lsmall = lsmall.at[i, 1, :HIDDEN].set(l["bo"])
        lsmall = lsmall.at[i, 2, :HIDDEN].set(l["ln1_g"])
        lsmall = lsmall.at[i, 3, :HIDDEN].set(l["ln1_b"])
        lsmall = lsmall.at[i, 4, :FFN].set(l["b1"])
        lsmall = lsmall.at[i, 5, :HIDDEN].set(l["b2"])
        lsmall = lsmall.at[i, 6, :HIDDEN].set(l["ln2_g"])
        lsmall = lsmall.at[i, 7, :HIDDEN].set(l["ln2_b"])

    head_small = jnp.zeros((8, LANE), jnp.float32)
    head_small = head_small.at[0, :HIDDEN].set(params["emb_ln_g"])
    head_small = head_small.at[1, :HIDDEN].set(params["emb_ln_b"])
    head_small = head_small.at[2, :HIDDEN].set(params["cls_dense_b"])
    head_small = head_small.at[3, :NUM_LABELS].set(params["cls_out_b"])

    cls_out_w = jnp.zeros((HIDDEN, LANE), jnp.float32)
    cls_out_w = cls_out_w.at[:, :NUM_LABELS].set(params["cls_out_w"])

    return {"wqkv": wqkv, "wo": wo, "w1": w1, "w2": w2, "lsmall": lsmall,
            "head_small": head_small, "cls_dense_w": params["cls_dense_w"],
            "cls_out_w": cls_out_w}


# --------------------------- forward (glue + kernel) --------------------------
def _embed(params, tok_ids, attn_mask):
    # TODO(synk): embedding gather / dropout left in plain JAX (no hot-path matmul).
    N, S = tok_ids.shape
    word = params["word_emb"][tok_ids]                              # (N, S, H)
    pos_ids = jnp.cumsum(attn_mask, axis=1) * attn_mask + PAD_IDX   # RoBERTa position ids
    pos = params["pos_emb"][pos_ids]                                # (N, S, H)
    tok_type = params["type_emb"][0]                                # (H,)
    emb = (word + pos + tok_type).reshape(N * S, HIDDEN).astype(jnp.float32)
    add_mask = (1.0 - attn_mask.astype(jnp.float32)) * -1e9         # (N, S)
    return emb, add_mask


@jax.jit
def _forward_core(params, packed, tok_ids, attn_mask, labels):
    emb, add_mask = _embed(params, tok_ids, attn_mask)
    labels2 = labels.reshape(-1, 1).astype(jnp.int32)
    logits, loss = roberta_fused_forward(packed, emb, add_mask, labels2)
    return logits, loss


def simple_evrel_roberta_forward(params, packed, inp):
    src_toks1 = inp["rob_full_evrel_seq_out"]       # (B, num_ev, num_seq_eg, seq_len)
    src_attn1 = inp["rob_full_evrel_seq_out_lens"]  # (B, num_ev, num_seq_eg, seq_len)
    B, num_ev, num_seq_eg, seq_len = src_toks1.shape

    src_toks = src_toks1.reshape(B * num_ev * num_seq_eg, seq_len)
    src_attn_mask = src_attn1.reshape(B * num_ev * num_seq_eg, seq_len)
    labels = inp["rob_full_evrel_labs"]

    logits, loss = _forward_core(params, packed, src_toks, src_attn_mask, labels)

    out = {}
    out["logits"] = logits
    out["gt_lst"] = inp["gt_lst"]
    out["loss"] = loss
    out["mdl_out"] = logits.reshape(B, num_ev, num_seq_eg, -1)
    return out


# ---------------------------------- main --------------------------------------
if __name__ == "__main__":
    key = jax.random.PRNGKey(0)
    k_par, k_tok, k_len, k_lab = jax.random.split(key, 4)

    B, num_ev, num_seq_eg, seq_len = 2, 2, 2, 8
    params = init_params(k_par, seq_len)
    packed = pack_params(params)

    # token ids (avoid pad id in content positions), attention mask from random lengths
    toks = jax.random.randint(k_tok, (B, num_ev, num_seq_eg, seq_len), 2, VOCAB, dtype=jnp.int32)
    lengths = jax.random.randint(k_len, (B, num_ev, num_seq_eg, 1), 3, seq_len + 1, dtype=jnp.int32)
    pos = jnp.arange(seq_len, dtype=jnp.int32)[None, None, None, :]
    attn = (pos < lengths).astype(jnp.int32)
    labels = jax.random.randint(k_lab, (B, num_ev, num_seq_eg), 0, NUM_LABELS, dtype=jnp.int32)

    inp = {
        "rob_full_evrel_seq_out": toks,
        "rob_full_evrel_seq_out_lens": attn,
        "rob_full_evrel_labs": labels,
        "gt_lst": list(range(B * num_ev * num_seq_eg)),
    }

    out = simple_evrel_roberta_forward(params, packed, inp)
    jax.block_until_ready(out["loss"])
    jax.block_until_ready(out["mdl_out"])

    assert out["mdl_out"].shape == (B, num_ev, num_seq_eg, NUM_LABELS)
    assert out["loss"].shape == ()
    assert bool(jnp.isfinite(out["loss"]))
    print("KERNEL_OK")
</pallas_src>

<mosaic_0001>
module attributes {stable_mosaic.version = 11 : i64} {
  func.func @_fused_kernel(%arg0: i32, %arg1: memref<64x32xf32, #tpu.memory_space<vmem>>, %arg2: memref<8x8xf32, #tpu.memory_space<vmem>>, %arg3: memref<8x1xi32, #tpu.memory_space<vmem>>, %arg4: memref<2x32x96xf32, #tpu.memory_space<vmem>>, %arg5: memref<2x32x32xf32, #tpu.memory_space<vmem>>, %arg6: memref<2x32x64xf32, #tpu.memory_space<vmem>>, %arg7: memref<2x64x32xf32, #tpu.memory_space<vmem>>, %arg8: memref<2x8x128xf32, #tpu.memory_space<vmem>>, %arg9: memref<8x128xf32, #tpu.memory_space<vmem>>, %arg10: memref<32x32xf32, #tpu.memory_space<vmem>>, %arg11: memref<32x128xf32, #tpu.memory_space<vmem>>, %arg12: memref<8x128xf32, #tpu.memory_space<vmem>>, %arg13: memref<1x128xf32, #tpu.memory_space<vmem>>) attributes {dimension_semantics = [#tpu.dimension_semantics<arbitrary>], iteration_bounds = array<i64: 1>, scalar_prefetch = 0 : i64, scratch_operands = 0 : i64, tpu.core_type = #tpu.core_type<tc>, window_params = [{pipeline_mode = #tpu.pipeline_mode<synchronous>, transform_indices = @transform_0, window_bounds = array<i64: 64, 32>}, {pipeline_mode = #tpu.pipeline_mode<synchronous>, transform_indices = @transform_1, window_bounds = array<i64: 8, 8>}, {pipeline_mode = #tpu.pipeline_mode<synchronous>, transform_indices = @transform_2, window_bounds = array<i64: 8, 1>}, {pipeline_mode = #tpu.pipeline_mode<synchronous>, transform_indices = @transform_3, window_bounds = array<i64: 2, 32, 96>}, {pipeline_mode = #tpu.pipeline_mode<synchronous>, transform_indices = @transform_4, window_bounds = array<i64: 2, 32, 32>}, {pipeline_mode = #tpu.pipeline_mode<synchronous>, transform_indices = @transform_5, window_bounds = array<i64: 2, 32, 64>}, {pipeline_mode = #tpu.pipeline_mode<synchronous>, transform_indices = @transform_6, window_bounds = array<i64: 2, 64, 32>}, {pipeline_mode = #tpu.pipeline_mode<synchronous>, transform_indices = @transform_7, window_bounds = array<i64: 2, 8, 128>}, {pipeline_mode = #tpu.pipeline_mode<synchronous>, transform_indices = @transform_8, window_bounds = array<i64: 8, 128>}, {pipeline_mode = #tpu.pipeline_mode<synchronous>, transform_indices = @transform_9, window_bounds = array<i64: 32, 32>}, {pipeline_mode = #tpu.pipeline_mode<synchronous>, transform_indices = @transform_10, window_bounds = array<i64: 32, 128>}, {pipeline_mode = #tpu.pipeline_mode<synchronous>, transform_indices = @transform_11, window_bounds = array<i64: 8, 128>}, {pipeline_mode = #tpu.pipeline_mode<synchronous>, transform_indices = @transform_12, window_bounds = array<i64: 1, 128>}]} {
    %c0 = arith.constant 0 : index
    %c0_0 = arith.constant 0 : index
    %0 = vector.load %arg9[%c0, %c0_0] : memref<8x128xf32, #tpu.memory_space<vmem>>, vector<8x128xf32>
    %1 = vector.extract_strided_slice %0 {offsets = [0, 0], sizes = [1, 32], strides = [1, 1]} : vector<8x128xf32> to vector<1x32xf32>
    %2 = vector.extract_strided_slice %0 {offsets = [1, 0], sizes = [1, 32], strides = [1, 1]} : vector<8x128xf32> to vector<1x32xf32>
    %3 = vector.extract_strided_slice %0 {offsets = [2, 0], sizes = [1, 32], strides = [1, 1]} : vector<8x128xf32> to vector<1x32xf32>
    %4 = vector.extract_strided_slice %0 {offsets = [3, 0], sizes = [1, 128], strides = [1, 1]} : vector<8x128xf32> to vector<1x128xf32>
    %c0_1 = arith.constant 0 : index
    %c0_2 = arith.constant 0 : index
    %5 = vector.load %arg2[%c0_1, %c0_2] : memref<8x8xf32, #tpu.memory_space<vmem>>, vector<8x8xf32>
    %c0_3 = arith.constant 0 : index
    %c0_4 = arith.constant 0 : index
    %6 = vector.load %arg1[%c0_3, %c0_4] : memref<64x32xf32, #tpu.memory_space<vmem>>, vector<64x32xf32>
    %cst = arith.constant dense<0.000000e+00> : vector<64xf32>
    %7 = vector.multi_reduction <add>, %6, %cst [1] : vector<64x32xf32> to vector<64xf32>
    %8 = vector.shape_cast %7 : vector<64xf32> to vector<64x1xf32>
    %cst_5 = arith.constant 3.200000e+01 : f32
    %9 = vector.broadcast %cst_5 : f32 to vector<64x1xf32>
    %10 = arith.divf %8, %9 : vector<64x1xf32>
    %11 = vector.broadcast %10 : vector<64x1xf32> to vector<64x32xf32>
    %12 = arith.subf %6, %11 : vector<64x32xf32>
    %13 = vector.broadcast %10 : vector<64x1xf32> to vector<64x32xf32>
    %14 = arith.subf %6, %13 : vector<64x32xf32>
    %15 = arith.mulf %12, %14 : vector<64x32xf32>
    %cst_6 = arith.constant dense<0.000000e+00> : vector<64xf32>
    %16 = vector.multi_reduction <add>, %15, %cst_6 [1] : vector<64x32xf32> to vector<64xf32>
    %17 = vector.shape_cast %16 : vector<64xf32> to vector<64x1xf32>
    %cst_7 = arith.constant 3.200000e+01 : f32
    %18 = vector.broadcast %cst_7 : f32 to vector<64x1xf32>
    %19 = arith.divf %17, %18 : vector<64x1xf32>
    %20 = vector.broadcast %10 : vector<64x1xf32> to vector<64x32xf32>
    %21 = arith.subf %6, %20 : vector<64x32xf32>
    %cst_8 = arith.constant 9.99999974E-6 : f32
    %22 = vector.broadcast %cst_8 : f32 to vector<64x1xf32>
    %23 = arith.addf %19, %22 : vector<64x1xf32>
    %24 = math.rsqrt %23 : vector<64x1xf32>
    %25 = vector.broadcast %24 : vector<64x1xf32> to vector<64x32xf32>
    %26 = arith.mulf %21, %25 : vector<64x32xf32>
    %27 = vector.broadcast %1 : vector<1x32xf32> to vector<64x32xf32>
    %28 = arith.mulf %26, %27 : vector<64x32xf32>
    %29 = vector.broadcast %2 : vector<1x32xf32> to vector<64x32xf32>
    %30 = arith.addf %28, %29 : vector<64x32xf32>
    %c0_9 = arith.constant 0 : index
    %c0_10 = arith.constant 0 : index
    %c0_11 = arith.constant 0 : index
    %31 = vector.load %arg4[%c0_9, %c0_10, %c0_11] : memref<2x32x96xf32, #tpu.memory_space<vmem>>, vector<1x32x96xf32>
    %32 = vector.shape_cast %31 : vector<1x32x96xf32> to vector<32x96xf32>
    %c0_12 = arith.constant 0 : index
    %c0_13 = arith.constant 0 : index
    %c0_14 = arith.constant 0 : index
    %33 = vector.load %arg5[%c0_12, %c0_13, %c0_14] : memref<2x32x32xf32, #tpu.memory_space<vmem>>, vector<1x32x32xf32>
    %34 = vector.shape_cast %33 : vector<1x32x32xf32> to vector<32x32xf32>
    %c0_15 = arith.constant 0 : index
    %c0_16 = arith.constant 0 : index
    %c0_17 = arith.constant 0 : index
    %35 = vector.load %arg6[%c0_15, %c0_16, %c0_17] : memref<2x32x64xf32, #tpu.memory_space<vmem>>, vector<1x32x64xf32>
    %36 = vector.shape_cast %35 : vector<1x32x64xf32> to vector<32x64xf32>
    %c0_18 = arith.constant 0 : index
    %c0_19 = arith.constant 0 : index
    %c0_20 = arith.constant 0 : index
    %37 = vector.load %arg7[%c0_18, %c0_19, %c0_20] : memref<2x64x32xf32, #tpu.memory_space<vmem>>, vector<1x64x32xf32>
    %38 = vector.shape_cast %37 : vector<1x64x32xf32> to vector<64x32xf32>
    %c0_21 = arith.constant 0 : index
    %c0_22 = arith.constant 0 : index
    %c0_23 = arith.constant 0 : index
    %39 = vector.load %arg8[%c0_21, %c0_22, %c0_23] : memref<2x8x128xf32, #tpu.memory_space<vmem>>, vector<1x8x128xf32>
    %40 = vector.shape_cast %39 : vector<1x8x128xf32> to vector<8x128xf32>
    %41 = vector.extract_strided_slice %40 {offsets = [0, 0], sizes = [1, 96], strides = [1, 1]} : vector<8x128xf32> to vector<1x96xf32>
    %42 = vector.extract_strided_slice %40 {offsets = [1, 0], sizes = [1, 32], strides = [1, 1]} : vector<8x128xf32> to vector<1x32xf32>
    %43 = vector.extract_strided_slice %40 {offsets = [2, 0], sizes = [1, 32], strides = [1, 1]} : vector<8x128xf32> to vector<1x32xf32>
    %44 = vector.extract_strided_slice %40 {offsets = [3, 0], sizes = [1, 32], strides = [1, 1]} : vector<8x128xf32> to vector<1x32xf32>
    %45 = vector.extract_strided_slice %40 {offsets = [4, 0], sizes = [1, 64], strides = [1, 1]} : vector<8x128xf32> to vector<1x64xf32>
    %46 = vector.extract_strided_slice %40 {offsets = [5, 0], sizes = [1, 32], strides = [1, 1]} : vector<8x128xf32> to vector<1x32xf32>
    %47 = vector.extract_strided_slice %40 {offsets = [6, 0], sizes = [1, 32], strides = [1, 1]} : vector<8x128xf32> to vector<1x32xf32>
    %48 = vector.extract_strided_slice %40 {offsets = [7, 0], sizes = [1, 32], strides = [1, 1]} : vector<8x128xf32> to vector<1x32xf32>
    %cst_24 = arith.constant dense<0.000000e+00> : vector<64x96xf32>
    %49 = tpu.matmul %30, %32, %cst_24 {dimension_numbers = #tpu.dot_dimension_numbers<[1], [0], [0], [1], [0, 0, 1, 1], [], []>} : vector<64x32xf32>, vector<32x96xf32>, vector<64x96xf32> -> vector<64x96xf32>
    %50 = vector.broadcast %41 : vector<1x96xf32> to vector<64x96xf32>
    %51 = arith.addf %49, %50 : vector<64x96xf32>
    %52 = vector.extract_strided_slice %51 {offsets = [0, 0], sizes = [64, 16], strides = [1, 1]} : vector<64x96xf32> to vector<64x16xf32>
    %53 = vector.shape_cast %52 : vector<64x16xf32> to vector<8x8x16xf32>
    %54 = vector.extract_strided_slice %51 {offsets = [0, 32], sizes = [64, 16], strides = [1, 1]} : vector<64x96xf32> to vector<64x16xf32>
    %55 = vector.shape_cast %54 : vector<64x16xf32> to vector<8x8x16xf32>
    %56 = vector.extract_strided_slice %51 {offsets = [0, 64], sizes = [64, 16], strides = [1, 1]} : vector<64x96xf32> to vector<64x16xf32>
    %57 = vector.shape_cast %56 : vector<64x16xf32> to vector<8x8x16xf32>
    "tpu.trace_start"() <{level = 10 : i32, message = "bqd,bkd->bqk"}> : () -> ()
    %cst_25 = arith.constant dense<0.000000e+00> : vector<8x8x8xf32>
    %58 = tpu.matmul %53, %55, %cst_25 {dimension_numbers = #tpu.dot_dimension_numbers<[2], [2], [1], [1], [0, 0, 0, 1, 1, 1], [0], [0]>} : vector<8x8x16xf32>, vector<8x8x16xf32>, vector<8x8x8xf32> -> vector<8x8x8xf32>
    "tpu.trace_stop"() : () -> ()
    %cst_26 = arith.constant 2.500000e-01 : f32
    %59 = vector.broadcast %cst_26 : f32 to vector<8x8x8xf32>
    %60 = arith.mulf %58, %59 : vector<8x8x8xf32>
    %61 = vector.shape_cast %5 : vector<8x8xf32> to vector<8x1x8xf32>
    %62 = vector.broadcast %61 : vector<8x1x8xf32> to vector<8x8x8xf32>
    %63 = arith.addf %60, %62 : vector<8x8x8xf32>
    %cst_27 = arith.constant dense<0xFF800000> : vector<8x8xf32>
    %64 = vector.multi_reduction <maximumf>, %63, %cst_27 [2] : vector<8x8x8xf32> to vector<8x8xf32>
    %65 = vector.shape_cast %64 : vector<8x8xf32> to vector<8x8x1xf32>
    %66 = vector.broadcast %65 : vector<8x8x1xf32> to vector<8x8x8xf32>
    %67 = arith.subf %63, %66 : vector<8x8x8xf32>
    %68 = math.exp %67 : vector<8x8x8xf32>
    %cst_28 = arith.constant dense<0.000000e+00> : vector<8x8xf32>
    %69 = vector.multi_reduction <add>, %68, %cst_28 [2] : vector<8x8x8xf32> to vector<8x8xf32>
    %70 = vector.shape_cast %69 : vector<8x8xf32> to vector<8x8x1xf32>
    %71 = vector.broadcast %70 : vector<8x8x1xf32> to vector<8x8x8xf32>
    %72 = arith.divf %68, %71 : vector<8x8x8xf32>
    "tpu.trace_start"() <{level = 10 : i32, message = "bqk,bkd->bqd"}> : () -> ()
    %cst_29 = arith.constant dense<0.000000e+00> : vector<8x8x16xf32>
    %73 = tpu.matmul %72, %57, %cst_29 {dimension_numbers = #tpu.dot_dimension_numbers<[2], [1], [1], [2], [0, 0, 0, 1, 1, 2], [0], [0]>} : vector<8x8x8xf32>, vector<8x8x16xf32>, vector<8x8x16xf32> -> vector<8x8x16xf32>
    "tpu.trace_stop"() : () -> ()
    %74 = vector.shape_cast %73 : vector<8x8x16xf32> to vector<64x16xf32>
    %75 = vector.extract_strided_slice %51 {offsets = [0, 16], sizes = [64, 16], strides = [1, 1]} : vector<64x96xf32> to vector<64x16xf32>
    %76 = vector.shape_cast %75 : vector<64x16xf32> to vector<8x8x16xf32>
    %77 = vector.extract_strided_slice %51 {offsets = [0, 48], sizes = [64, 16], strides = [1, 1]} : vector<64x96xf32> to vector<64x16xf32>
    %78 = vector.shape_cast %77 : vector<64x16xf32> to vector<8x8x16xf32>
    %79 = vector.extract_strided_slice %51 {offsets = [0, 80], sizes = [64, 16], strides = [1, 1]} : vector<64x96xf32> to vector<64x16xf32>
    %80 = vector.shape_cast %79 : vector<64x16xf32> to vector<8x8x16xf32>
    "tpu.trace_start"() <{level = 10 : i32, message = "bqd,bkd->bqk"}> : () -> ()
    %cst_30 = arith.constant dense<0.000000e+00> : vector<8x8x8xf32>
    %81 = tpu.matmul %76, %78, %cst_30 {dimension_numbers = #tpu.dot_dimension_numbers<[2], [2], [1], [1], [0, 0, 0, 1, 1, 1], [0], [0]>} : vector<8x8x16xf32>, vector<8x8x16xf32>, vector<8x8x8xf32> -> vector<8x8x8xf32>
    "tpu.trace_stop"() : () -> ()
    %cst_31 = arith.constant 2.500000e-01 : f32
    %82 = vector.broadcast %cst_31 : f32 to vector<8x8x8xf32>
    %83 = arith.mulf %81, %82 : vector<8x8x8xf32>
    %84 = vector.shape_cast %5 : vector<8x8xf32> to vector<8x1x8xf32>
    %85 = vector.broadcast %84 : vector<8x1x8xf32> to vector<8x8x8xf32>
    %86 = arith.addf %83, %85 : vector<8x8x8xf32>
    %cst_32 = arith.constant dense<0xFF800000> : vector<8x8xf32>
    %87 = vector.multi_reduction <maximumf>, %86, %cst_32 [2] : vector<8x8x8xf32> to vector<8x8xf32>
    %88 = vector.shape_cast %87 : vector<8x8xf32> to vector<8x8x1xf32>
    %89 = vector.broadcast %88 : vector<8x8x1xf32> to vector<8x8x8xf32>
    %90 = arith.subf %86, %89 : vector<8x8x8xf32>
    %91 = math.exp %90 : vector<8x8x8xf32>
    %cst_33 = arith.constant dense<0.000000e+00> : vector<8x8xf32>
    %92 = vector.multi_reduction <add>, %91, %cst_33 [2] : vector<8x8x8xf32> to vector<8x8xf32>
    %93 = vector.shape_cast %92 : vector<8x8xf32> to vector<8x8x1xf32>
    %94 = vector.broadcast %93 : vector<8x8x1xf32> to vector<8x8x8xf32>
    %95 = arith.divf %91, %94 : vector<8x8x8xf32>
    "tpu.trace_start"() <{level = 10 : i32, message = "bqk,bkd->bqd"}> : () -> ()
    %cst_34 = arith.constant dense<0.000000e+00> : vector<8x8x16xf32>
    %96 = tpu.matmul %95, %80, %cst_34 {dimension_numbers = #tpu.dot_dimension_numbers<[2], [1], [1], [2], [0, 0, 0, 1, 1, 2], [0], [0]>} : vector<8x8x8xf32>, vector<8x8x16xf32>, vector<8x8x16xf32> -> vector<8x8x16xf32>
    "tpu.trace_stop"() : () -> ()
    %97 = vector.shape_cast %96 : vector<8x8x16xf32> to vector<64x16xf32>
    %98 = tpu.concatenate %74, %97 in 1 : vector<64x16xf32>, vector<64x16xf32> -> vector<64x32xf32>
    %cst_35 = arith.constant dense<0.000000e+00> : vector<64x32xf32>
    %99 = tpu.matmul %98, %34, %cst_35 {dimension_numbers = #tpu.dot_dimension_numbers<[1], [0], [0], [1], [0, 0, 1, 1], [], []>} : vector<64x32xf32>, vector<32x32xf32>, vector<64x32xf32> -> vector<64x32xf32>
    %100 = vector.broadcast %42 : vector<1x32xf32> to vector<64x32xf32>
    %101 = arith.addf %99, %100 : vector<64x32xf32>
    %102 = arith.addf %30, %101 : vector<64x32xf32>
    %cst_36 = arith.constant dense<0.000000e+00> : vector<64xf32>
    %103 = vector.multi_reduction <add>, %102, %cst_36 [1] : vector<64x32xf32> to vector<64xf32>
    %104 = vector.shape_cast %103 : vector<64xf32> to vector<64x1xf32>
    %cst_37 = arith.constant 3.200000e+01 : f32
    %105 = vector.broadcast %cst_37 : f32 to vector<64x1xf32>
    %106 = arith.divf %104, %105 : vector<64x1xf32>
    %107 = vector.broadcast %106 : vector<64x1xf32> to vector<64x32xf32>
    %108 = arith.subf %102, %107 : vector<64x32xf32>
    %109 = vector.broadcast %106 : vector<64x1xf32> to vector<64x32xf32>
    %110 = arith.subf %102, %109 : vector<64x32xf32>
    %111 = arith.mulf %108, %110 : vector<64x32xf32>
    %cst_38 = arith.constant dense<0.000000e+00> : vector<64xf32>
    %112 = vector.multi_reduction <add>, %111, %cst_38 [1] : vector<64x32xf32> to vector<64xf32>
    %113 = vector.shape_cast %112 : vector<64xf32> to vector<64x1xf32>
    %cst_39 = arith.constant 3.200000e+01 : f32
    %114 = vector.broadcast %cst_39 : f32 to vector<64x1xf32>
    %115 = arith.divf %113, %114 : vector<64x1xf32>
    %116 = vector.broadcast %106 : vector<64x1xf32> to vector<64x32xf32>
    %117 = arith.subf %102, %116 : vector<64x32xf32>
    %cst_40 = arith.constant 9.99999974E-6 : f32
    %118 = vector.broadcast %cst_40 : f32 to vector<64x1xf32>
    %119 = arith.addf %115, %118 : vector<64x1xf32>
    %120 = math.rsqrt %119 : vector<64x1xf32>
    %121 = vector.broadcast %120 : vector<64x1xf32> to vector<64x32xf32>
    %122 = arith.mulf %117, %121 : vector<64x32xf32>
    %123 = vector.broadcast %43 : vector<1x32xf32> to vector<64x32xf32>
    %124 = arith.mulf %122, %123 : vector<64x32xf32>
    %125 = vector.broadcast %44 : vector<1x32xf32> to vector<64x32xf32>
    %126 = arith.addf %124, %125 : vector<64x32xf32>
    %cst_41 = arith.constant dense<0.000000e+00> : vector<64x64xf32>
    %127 = tpu.matmul %126, %36, %cst_41 {dimension_numbers = #tpu.dot_dimension_numbers<[1], [0], [0], [1], [0, 0, 1, 1], [], []>} : vector<64x32xf32>, vector<32x64xf32>, vector<64x64xf32> -> vector<64x64xf32>
    %128 = vector.broadcast %45 : vector<1x64xf32> to vector<64x64xf32>
    %129 = arith.addf %127, %128 : vector<64x64xf32>
    %130 = arith.mulf %129, %129 : vector<64x64xf32>
    %131 = arith.mulf %129, %130 : vector<64x64xf32>
    %cst_42 = arith.constant 4.471500e-02 : f32
    %132 = vector.broadcast %cst_42 : f32 to vector<64x64xf32>
    %133 = arith.mulf %132, %131 : vector<64x64xf32>
    %134 = arith.addf %129, %133 : vector<64x64xf32>
    %cst_43 = arith.constant 0.797884583 : f32
    %135 = vector.broadcast %cst_43 : f32 to vector<64x64xf32>
    %136 = arith.mulf %135, %134 : vector<64x64xf32>
    %137 = math.tanh %136 : vector<64x64xf32>
    %cst_44 = arith.constant 1.000000e+00 : f32
    %138 = vector.broadcast %cst_44 : f32 to vector<64x64xf32>
    %139 = arith.addf %138, %137 : vector<64x64xf32>
    %cst_45 = arith.constant 5.000000e-01 : f32
    %140 = vector.broadcast %cst_45 : f32 to vector<64x64xf32>
    %141 = arith.mulf %140, %139 : vector<64x64xf32>
    %142 = arith.mulf %129, %141 : vector<64x64xf32>
    %cst_46 = arith.constant dense<0.000000e+00> : vector<64x32xf32>
    %143 = tpu.matmul %142, %38, %cst_46 {dimension_numbers = #tpu.dot_dimension_numbers<[1], [0], [0], [1], [0, 0, 1, 1], [], []>} : vector<64x64xf32>, vector<64x32xf32>, vector<64x32xf32> -> vector<64x32xf32>
    %144 = vector.broadcast %46 : vector<1x32xf32> to vector<64x32xf32>
    %145 = arith.addf %143, %144 : vector<64x32xf32>
    %146 = arith.addf %126, %145 : vector<64x32xf32>
    %cst_47 = arith.constant dense<0.000000e+00> : vector<64xf32>
    %147 = vector.multi_reduction <add>, %146, %cst_47 [1] : vector<64x32xf32> to vector<64xf32>
    %148 = vector.shape_cast %147 : vector<64xf32> to vector<64x1xf32>
    %cst_48 = arith.constant 3.200000e+01 : f32
    %149 = vector.broadcast %cst_48 : f32 to vector<64x1xf32>
    %150 = arith.divf %148, %149 : vector<64x1xf32>
    %151 = vector.broadcast %150 : vector<64x1xf32> to vector<64x32xf32>
    %152 = arith.subf %146, %151 : vector<64x32xf32>
    %153 = vector.broadcast %150 : vector<64x1xf32> to vector<64x32xf32>
    %154 = arith.subf %146, %153 : vector<64x32xf32>
    %155 = arith.mulf %152, %154 : vector<64x32xf32>
    %cst_49 = arith.constant dense<0.000000e+00> : vector<64xf32>
    %156 = vector.multi_reduction <add>, %155, %cst_49 [1] : vector<64x32xf32> to vector<64xf32>
    %157 = vector.shape_cast %156 : vector<64xf32> to vector<64x1xf32>
    %cst_50 = arith.constant 3.200000e+01 : f32
    %158 = vector.broadcast %cst_50 : f32 to vector<64x1xf32>
    %159 = arith.divf %157, %158 : vector<64x1xf32>
    %160 = vector.broadcast %150 : vector<64x1xf32> to vector<64x32xf32>
    %161 = arith.subf %146, %160 : vector<64x32xf32>
    %cst_51 = arith.constant 9.99999974E-6 : f32
    %162 = vector.broadcast %cst_51 : f32 to vector<64x1xf32>
    %163 = arith.addf %159, %162 : vector<64x1xf32>
    %164 = math.rsqrt %163 : vector<64x1xf32>
    %165 = vector.broadcast %164 : vector<64x1xf32> to vector<64x32xf32>
    %166 = arith.mulf %161, %165 : vector<64x32xf32>
    %167 = vector.broadcast %47 : vector<1x32xf32> to vector<64x32xf32>
    %168 = arith.mulf %166, %167 : vector<64x32xf32>
    %169 = vector.broadcast %48 : vector<1x32xf32> to vector<64x32xf32>
    %170 = arith.addf %168, %169 : vector<64x32xf32>
    %c1 = arith.constant 1 : index
    %c0_52 = arith.constant 0 : index
    %c0_53 = arith.constant 0 : index
    %171 = vector.load %arg4[%c1, %c0_52, %c0_53] : memref<2x32x96xf32, #tpu.memory_space<vmem>>, vector<1x32x96xf32>
    %172 = vector.shape_cast %171 : vector<1x32x96xf32> to vector<32x96xf32>
    %c1_54 = arith.constant 1 : index
    %c0_55 = arith.constant 0 : index
    %c0_56 = arith.constant 0 : index
    %173 = vector.load %arg5[%c1_54, %c0_55, %c0_56] : memref<2x32x32xf32, #tpu.memory_space<vmem>>, vector<1x32x32xf32>
    %174 = vector.shape_cast %173 : vector<1x32x32xf32> to vector<32x32xf32>
    %c1_57 = arith.constant 1 : index
    %c0_58 = arith.constant 0 : index
    %c0_59 = arith.constant 0 : index
    %175 = vector.load %arg6[%c1_57, %c0_58, %c0_59] : memref<2x32x64xf32, #tpu.memory_space<vmem>>, vector<1x32x64xf32>
    %176 = vector.shape_cast %175 : vector<1x32x64xf32> to vector<32x64xf32>
    %c1_60 = arith.constant 1 : index
    %c0_61 = arith.constant 0 : index
    %c0_62 = arith.constant 0 : index
    %177 = vector.load %arg7[%c1_60, %c0_61, %c0_62] : memref<2x64x32xf32, #tpu.memory_space<vmem>>, vector<1x64x32xf32>
    %178 = vector.shape_cast %177 : vector<1x64x32xf32> to vector<64x32xf32>
    %c1_63 = arith.constant 1 : index
    %c0_64 = arith.constant 0 : index
    %c0_65 = arith.constant 0 : index
    %179 = vector.load %arg8[%c1_63, %c0_64, %c0_65] : memref<2x8x128xf32, #tpu.memory_space<vmem>>, vector<1x8x128xf32>
    %180 = vector.shape_cast %179 : vector<1x8x128xf32> to vector<8x128xf32>
    %181 = vector.extract_strided_slice %180 {offsets = [0, 0], sizes = [1, 96], strides = [1, 1]} : vector<8x128xf32> to vector<1x96xf32>
    %182 = vector.extract_strided_slice %180 {offsets = [1, 0], sizes = [1, 32], strides = [1, 1]} : vector<8x128xf32> to vector<1x32xf32>
    %183 = vector.extract_strided_slice %180 {offsets = [2, 0], sizes = [1, 32], strides = [1, 1]} : vector<8x128xf32> to vector<1x32xf32>
    %184 = vector.extract_strided_slice %180 {offsets = [3, 0], sizes = [1, 32], strides = [1, 1]} : vector<8x128xf32> to vector<1x32xf32>
    %185 = vector.extract_strided_slice %180 {offsets = [4, 0], sizes = [1, 64], strides = [1, 1]} : vector<8x128xf32> to vector<1x64xf32>
    %186 = vector.extract_strided_slice %180 {offsets = [5, 0], sizes = [1, 32], strides = [1, 1]} : vector<8x128xf32> to vector<1x32xf32>
    %187 = vector.extract_strided_slice %180 {offsets = [6, 0], sizes = [1, 32], strides = [1, 1]} : vector<8x128xf32> to vector<1x32xf32>
    %188 = vector.extract_strided_slice %180 {offsets = [7, 0], sizes = [1, 32], strides = [1, 1]} : vector<8x128xf32> to vector<1x32xf32>
    %cst_66 = arith.constant dense<0.000000e+00> : vector<64x96xf32>
    %189 = tpu.matmul %170, %172, %cst_66 {dimension_numbers = #tpu.dot_dimension_numbers<[1], [0], [0], [1], [0, 0, 1, 1], [], []>} : vector<64x32xf32>, vector<32x96xf32>, vector<64x96xf32> -> vector<64x96xf32>
    %190 = vector.broadcast %181 : vector<1x96xf32> to vector<64x96xf32>
    %191 = arith.addf %189, %190 : vector<64x96xf32>
    %192 = vector.extract_strided_slice %191 {offsets = [0, 0], sizes = [64, 16], strides = [1, 1]} : vector<64x96xf32> to vector<64x16xf32>
    %193 = vector.shape_cast %192 : vector<64x16xf32> to vector<8x8x16xf32>
    %194 = vector.extract_strided_slice %191 {offsets = [0, 32], sizes = [64, 16], strides = [1, 1]} : vector<64x96xf32> to vector<64x16xf32>
    %195 = vector.shape_cast %194 : vector<64x16xf32> to vector<8x8x16xf32>
    %196 = vector.extract_strided_slice %191 {offsets = [0, 64], sizes = [64, 16], strides = [1, 1]} : vector<64x96xf32> to vector<64x16xf32>
    %197 = vector.shape_cast %196 : vector<64x16xf32> to vector<8x8x16xf32>
    "tpu.trace_start"() <{level = 10 : i32, message = "bqd,bkd->bqk"}> : () -> ()
    %cst_67 = arith.constant dense<0.000000e+00> : vector<8x8x8xf32>
    %198 = tpu.matmul %193, %195, %cst_67 {dimension_numbers = #tpu.dot_dimension_numbers<[2], [2], [1], [1], [0, 0, 0, 1, 1, 1], [0], [0]>} : vector<8x8x16xf32>, vector<8x8x16xf32>, vector<8x8x8xf32> -> vector<8x8x8xf32>
    "tpu.trace_stop"() : () -> ()
    %cst_68 = arith.constant 2.500000e-01 : f32
    %199 = vector.broadcast %cst_68 : f32 to vector<8x8x8xf32>
    %200 = arith.mulf %198, %199 : vector<8x8x8xf32>
    %201 = vector.shape_cast %5 : vector<8x8xf32> to vector<8x1x8xf32>
    %202 = vector.broadcast %201 : vector<8x1x8xf32> to vector<8x8x8xf32>
    %203 = arith.addf %200, %202 : vector<8x8x8xf32>
    %cst_69 = arith.constant dense<0xFF800000> : vector<8x8xf32>
    %204 = vector.multi_reduction <maximumf>, %203, %cst_69 [2] : vector<8x8x8xf32> to vector<8x8xf32>
    %205 = vector.shape_cast %204 : vector<8x8xf32> to vector<8x8x1xf32>
    %206 = vector.broadcast %205 : vector<8x8x1xf32> to vector<8x8x8xf32>
    %207 = arith.subf %203, %206 : vector<8x8x8xf32>
    %208 = math.exp %207 : vector<8x8x8xf32>
    %cst_70 = arith.constant dense<0.000000e+00> : vector<8x8xf32>
    %209 = vector.multi_reduction <add>, %208, %cst_70 [2] : vector<8x8x8xf32> to vector<8x8xf32>
    %210 = vector.shape_cast %209 : vector<8x8xf32> to vector<8x8x1xf32>
    %211 = vector.broadcast %210 : vector<8x8x1xf32> to vector<8x8x8xf32>
    %212 = arith.divf %208, %211 : vector<8x8x8xf32>
    "tpu.trace_start"() <{level = 10 : i32, message = "bqk,bkd->bqd"}> : () -> ()
    %cst_71 = arith.constant dense<0.000000e+00> : vector<8x8x16xf32>
    %213 = tpu.matmul %212, %197, %cst_71 {dimension_numbers = #tpu.dot_dimension_numbers<[2], [1], [1], [2], [0, 0, 0, 1, 1, 2], [0], [0]>} : vector<8x8x8xf32>, vector<8x8x16xf32>, vector<8x8x16xf32> -> vector<8x8x16xf32>
    "tpu.trace_stop"() : () -> ()
    %214 = vector.shape_cast %213 : vector<8x8x16xf32> to vector<64x16xf32>
    %215 = vector.extract_strided_slice %191 {offsets = [0, 16], sizes = [64, 16], strides = [1, 1]} : vector<64x96xf32> to vector<64x16xf32>
    %216 = vector.shape_cast %215 : vector<64x16xf32> to vector<8x8x16xf32>
    %217 = vector.extract_strided_slice %191 {offsets = [0, 48], sizes = [64, 16], strides = [1, 1]} : vector<64x96xf32> to vector<64x16xf32>
    %218 = vector.shape_cast %217 : vector<64x16xf32> to vector<8x8x16xf32>
    %219 = vector.extract_strided_slice %191 {offsets = [0, 80], sizes = [64, 16], strides = [1, 1]} : vector<64x96xf32> to vector<64x16xf32>
    %220 = vector.shape_cast %219 : vector<64x16xf32> to vector<8x8x16xf32>
    "tpu.trace_start"() <{level = 10 : i32, message = "bqd,bkd->bqk"}> : () -> ()
    %cst_72 = arith.constant dense<0.000000e+00> : vector<8x8x8xf32>
    %221 = tpu.matmul %216, %218, %cst_72 {dimension_numbers = #tpu.dot_dimension_numbers<[2], [2], [1], [1], [0, 0, 0, 1, 1, 1], [0], [0]>} : vector<8x8x16xf32>, vector<8x8x16xf32>, vector<8x8x8xf32> -> vector<8x8x8xf32>
    "tpu.trace_stop"() : () -> ()
    %cst_73 = arith.constant 2.500000e-01 : f32
    %222 = vector.broadcast %cst_73 : f32 to vector<8x8x8xf32>
    %223 = arith.mulf %221, %222 : vector<8x8x8xf32>
    %224 = vector.shape_cast %5 : vector<8x8xf32> to vector<8x1x8xf32>
    %225 = vector.broadcast %224 : vector<8x1x8xf32> to vector<8x8x8xf32>
    %226 = arith.addf %223, %225 : vector<8x8x8xf32>
    %cst_74 = arith.constant dense<0xFF800000> : vector<8x8xf32>
    %227 = vector.multi_reduction <maximumf>, %226, %cst_74 [2] : vector<8x8x8xf32> to vector<8x8xf32>
    %228 = vector.shape_cast %227 : vector<8x8xf32> to vector<8x8x1xf32>
    %229 = vector.broadcast %228 : vector<8x8x1xf32> to vector<8x8x8xf32>
    %230 = arith.subf %226, %229 : vector<8x8x8xf32>
    %231 = math.exp %230 : vector<8x8x8xf32>
    %cst_75 = arith.constant dense<0.000000e+00> : vector<8x8xf32>
    %232 = vector.multi_reduction <add>, %231, %cst_75 [2] : vector<8x8x8xf32> to vector<8x8xf32>
    %233 = vector.shape_cast %232 : vector<8x8xf32> to vector<8x8x1xf32>
    %234 = vector.broadcast %233 : vector<8x8x1xf32> to vector<8x8x8xf32>
    %235 = arith.divf %231, %234 : vector<8x8x8xf32>
    "tpu.trace_start"() <{level = 10 : i32, message = "bqk,bkd->bqd"}> : () -> ()
    %cst_76 = arith.constant dense<0.000000e+00> : vector<8x8x16xf32>
    %236 = tpu.matmul %235, %220, %cst_76 {dimension_numbers = #tpu.dot_dimension_numbers<[2], [1], [1], [2], [0, 0, 0, 1, 1, 2], [0], [0]>} : vector<8x8x8xf32>, vector<8x8x16xf32>, vector<8x8x16xf32> -> vector<8x8x16xf32>
    "tpu.trace_stop"() : () -> ()
    %237 = vector.shape_cast %236 : vector<8x8x16xf32> to vector<64x16xf32>
    %238 = tpu.concatenate %214, %237 in 1 : vector<64x16xf32>, vector<64x16xf32> -> vector<64x32xf32>
    %cst_77 = arith.constant dense<0.000000e+00> : vector<64x32xf32>
    %239 = tpu.matmul %238, %174, %cst_77 {dimension_numbers = #tpu.dot_dimension_numbers<[1], [0], [0], [1], [0, 0, 1, 1], [], []>} : vector<64x32xf32>, vector<32x32xf32>, vector<64x32xf32> -> vector<64x32xf32>
    %240 = vector.broadcast %182 : vector<1x32xf32> to vector<64x32xf32>
    %241 = arith.addf %239, %240 : vector<64x32xf32>
    %242 = arith.addf %170, %241 : vector<64x32xf32>
    %cst_78 = arith.constant dense<0.000000e+00> : vector<64xf32>
    %243 = vector.multi_reduction <add>, %242, %cst_78 [1] : vector<64x32xf32> to vector<64xf32>
    %244 = vector.shape_cast %243 : vector<64xf32> to vector<64x1xf32>
    %cst_79 = arith.constant 3.200000e+01 : f32
    %245 = vector.broadcast %cst_79 : f32 to vector<64x1xf32>
    %246 = arith.divf %244, %245 : vector<64x1xf32>
    %247 = vector.broadcast %246 : vector<64x1xf32> to vector<64x32xf32>
    %248 = arith.subf %242, %247 : vector<64x32xf32>
    %249 = vector.broadcast %246 : vector<64x1xf32> to vector<64x32xf32>
    %250 = arith.subf %242, %249 : vector<64x32xf32>
    %251 = arith.mulf %248, %250 : vector<64x32xf32>
    %cst_80 = arith.constant dense<0.000000e+00> : vector<64xf32>
    %252 = vector.multi_reduction <add>, %251, %cst_80 [1] : vector<64x32xf32> to vector<64xf32>
    %253 = vector.shape_cast %252 : vector<64xf32> to vector<64x1xf32>
    %cst_81 = arith.constant 3.200000e+01 : f32
    %254 = vector.broadcast %cst_81 : f32 to vector<64x1xf32>
    %255 = arith.divf %253, %254 : vector<64x1xf32>
    %256 = vector.broadcast %246 : vector<64x1xf32> to vector<64x32xf32>
    %257 = arith.subf %242, %256 : vector<64x32xf32>
    %cst_82 = arith.constant 9.99999974E-6 : f32
    %258 = vector.broadcast %cst_82 : f32 to vector<64x1xf32>
    %259 = arith.addf %255, %258 : vector<64x1xf32>
    %260 = math.rsqrt %259 : vector<64x1xf32>
    %261 = vector.broadcast %260 : vector<64x1xf32> to vector<64x32xf32>
    %262 = arith.mulf %257, %261 : vector<64x32xf32>
    %263 = vector.broadcast %183 : vector<1x32xf32> to vector<64x32xf32>
    %264 = arith.mulf %262, %263 : vector<64x32xf32>
    %265 = vector.broadcast %184 : vector<1x32xf32> to vector<64x32xf32>
    %266 = arith.addf %264, %265 : vector<64x32xf32>
    %cst_83 = arith.constant dense<0.000000e+00> : vector<64x64xf32>
    %267 = tpu.matmul %266, %176, %cst_83 {dimension_numbers = #tpu.dot_dimension_numbers<[1], [0], [0], [1], [0, 0, 1, 1], [], []>} : vector<64x32xf32>, vector<32x64xf32>, vector<64x64xf32> -> vector<64x64xf32>
    %268 = vector.broadcast %185 : vector<1x64xf32> to vector<64x64xf32>
    %269 = arith.addf %267, %268 : vector<64x64xf32>
    %270 = arith.mulf %269, %269 : vector<64x64xf32>
    %271 = arith.mulf %269, %270 : vector<64x64xf32>
    %cst_84 = arith.constant 4.471500e-02 : f32
    %272 = vector.broadcast %cst_84 : f32 to vector<64x64xf32>
    %273 = arith.mulf %272, %271 : vector<64x64xf32>
    %274 = arith.addf %269, %273 : vector<64x64xf32>
    %cst_85 = arith.constant 0.797884583 : f32
    %275 = vector.broadcast %cst_85 : f32 to vector<64x64xf32>
    %276 = arith.mulf %275, %274 : vector<64x64xf32>
    %277 = math.tanh %276 : vector<64x64xf32>
    %cst_86 = arith.constant 1.000000e+00 : f32
    %278 = vector.broadcast %cst_86 : f32 to vector<64x64xf32>
    %279 = arith.addf %278, %277 : vector<64x64xf32>
    %cst_87 = arith.constant 5.000000e-01 : f32
    %280 = vector.broadcast %cst_87 : f32 to vector<64x64xf32>
    %281 = arith.mulf %280, %279 : vector<64x64xf32>
    %282 = arith.mulf %269, %281 : vector<64x64xf32>
    %cst_88 = arith.constant dense<0.000000e+00> : vector<64x32xf32>
    %283 = tpu.matmul %282, %178, %cst_88 {dimension_numbers = #tpu.dot_dimension_numbers<[1], [0], [0], [1], [0, 0, 1, 1], [], []>} : vector<64x64xf32>, vector<64x32xf32>, vector<64x32xf32> -> vector<64x32xf32>
    %284 = vector.broadcast %186 : vector<1x32xf32> to vector<64x32xf32>
    %285 = arith.addf %283, %284 : vector<64x32xf32>
    %286 = arith.addf %266, %285 : vector<64x32xf32>
    %cst_89 = arith.constant dense<0.000000e+00> : vector<64xf32>
    %287 = vector.multi_reduction <add>, %286, %cst_89 [1] : vector<64x32xf32> to vector<64xf32>
    %288 = vector.shape_cast %287 : vector<64xf32> to vector<64x1xf32>
    %cst_90 = arith.constant 3.200000e+01 : f32
    %289 = vector.broadcast %cst_90 : f32 to vector<64x1xf32>
    %290 = arith.divf %288, %289 : vector<64x1xf32>
    %291 = vector.broadcast %290 : vector<64x1xf32> to vector<64x32xf32>
    %292 = arith.subf %286, %291 : vector<64x32xf32>
    %293 = vector.broadcast %290 : vector<64x1xf32> to vector<64x32xf32>
    %294 = arith.subf %286, %293 : vector<64x32xf32>
    %295 = arith.mulf %292, %294 : vector<64x32xf32>
    %cst_91 = arith.constant dense<0.000000e+00> : vector<64xf32>
    %296 = vector.multi_reduction <add>, %295, %cst_91 [1] : vector<64x32xf32> to vector<64xf32>
    %297 = vector.shape_cast %296 : vector<64xf32> to vector<64x1xf32>
    %cst_92 = arith.constant 3.200000e+01 : f32
    %298 = vector.broadcast %cst_92 : f32 to vector<64x1xf32>
    %299 = arith.divf %297, %298 : vector<64x1xf32>
    %300 = vector.broadcast %290 : vector<64x1xf32> to vector<64x32xf32>
    %301 = arith.subf %286, %300 : vector<64x32xf32>
    %cst_93 = arith.constant 9.99999974E-6 : f32
    %302 = vector.broadcast %cst_93 : f32 to vector<64x1xf32>
    %303 = arith.addf %299, %302 : vector<64x1xf32>
    %304 = math.rsqrt %303 : vector<64x1xf32>
    %305 = vector.broadcast %304 : vector<64x1xf32> to vector<64x32xf32>
    %306 = arith.mulf %301, %305 : vector<64x32xf32>
    %307 = vector.broadcast %187 : vector<1x32xf32> to vector<64x32xf32>
    %308 = arith.mulf %306, %307 : vector<64x32xf32>
    %309 = vector.broadcast %188 : vector<1x32xf32> to vector<64x32xf32>
    %310 = arith.addf %308, %309 : vector<64x32xf32>
    %311 = tpu.iota {dimensions = array<i32: 0>} : vector<8x64xi32>
    %312 = tpu.iota {dimensions = array<i32: 1>} : vector<8x64xi32>
    %c8_i32 = arith.constant 8 : i32
    %313 = vector.broadcast %c8_i32 : i32 to vector<8x64xi32>
    %314 = arith.muli %311, %313 : vector<8x64xi32>
    %315 = arith.cmpi eq, %312, %314 : vector<8x64xi32>
    %316 = arith.extui %315 : vector<8x64xi1> to vector<8x64xi32>
    %317 = arith.sitofp %316 : vector<8x64xi32> to vector<8x64xf32>
    %cst_94 = arith.constant dense<0.000000e+00> : vector<8x32xf32>
    %318 = tpu.matmul %317, %310, %cst_94 {dimension_numbers = #tpu.dot_dimension_numbers<[1], [0], [0], [1], [0, 0, 1, 1], [], []>} : vector<8x64xf32>, vector<64x32xf32>, vector<8x32xf32> -> vector<8x32xf32>
    %c0_95 = arith.constant 0 : index
    %c0_96 = arith.constant 0 : index
    %319 = vector.load %arg10[%c0_95, %c0_96] : memref<32x32xf32, #tpu.memory_space<vmem>>, vector<32x32xf32>
    %cst_97 = arith.constant dense<0.000000e+00> : vector<8x32xf32>
    %320 = tpu.matmul %318, %319, %cst_97 {dimension_numbers = #tpu.dot_dimension_numbers<[1], [0], [0], [1], [0, 0, 1, 1], [], []>} : vector<8x32xf32>, vector<32x32xf32>, vector<8x32xf32> -> vector<8x32xf32>
    %321 = vector.broadcast %3 : vector<1x32xf32> to vector<8x32xf32>
    %322 = arith.addf %320, %321 : vector<8x32xf32>
    %323 = math.tanh %322 : vector<8x32xf32>
    %c0_98 = arith.constant 0 : index
    %c0_99 = arith.constant 0 : index
    %324 = vector.load %arg11[%c0_98, %c0_99] : memref<32x128xf32, #tpu.memory_space<vmem>>, vector<32x128xf32>
    %cst_100 = arith.constant dense<0.000000e+00> : vector<8x128xf32>
    %325 = tpu.matmul %323, %324, %cst_100 {dimension_numbers = #tpu.dot_dimension_numbers<[1], [0], [0], [1], [0, 0, 1, 1], [], []>} : vector<8x32xf32>, vector<32x128xf32>, vector<8x128xf32> -> vector<8x128xf32>
    %326 = vector.broadcast %4 : vector<1x128xf32> to vector<8x128xf32>
    %327 = arith.addf %325, %326 : vector<8x128xf32>
    %c0_101 = arith.constant 0 : index
    %c0_102 = arith.constant 0 : index
    %328 = vector.load %arg12[%c0_101, %c0_102] : memref<8x128xf32, #tpu.memory_space<vmem>>, vector<8x128xf32>
    tpu.vector_store %arg12[%c0_101, %c0_102], %327 {strides = array<i32>} : memref<8x128xf32, #tpu.memory_space<vmem>>, vector<8x128xf32>,
    %329 = tpu.iota {dimensions = array<i32: 1>} : vector<8x128xi32>
    %c5_i32 = arith.constant 5 : i32
    %330 = vector.broadcast %c5_i32 : i32 to vector<8x128xi32>
    %331 = arith.cmpi slt, %329, %330 : vector<8x128xi32>
    %cst_103 = arith.constant -1.000000e+30 : f32
    %332 = vector.broadcast %cst_103 : f32 to vector<8x128xf32>
    %333 = arith.select %331, %327, %332 : vector<8x128xi1>, vector<8x128xf32>
    %cst_104 = arith.constant dense<0xFF800000> : vector<8xf32>
    %334 = vector.multi_reduction <maximumf>, %333, %cst_104 [1] : vector<8x128xf32> to vector<8xf32>
    %335 = vector.shape_cast %334 : vector<8xf32> to vector<8x1xf32>
    %336 = vector.broadcast %335 : vector<8x1xf32> to vector<8x128xf32>
    %337 = arith.subf %333, %336 : vector<8x128xf32>
    %338 = math.exp %337 : vector<8x128xf32>
    %cst_105 = arith.constant 0.000000e+00 : f32
    %339 = vector.broadcast %cst_105 : f32 to vector<8x128xf32>
    %340 = arith.select %331, %338, %339 : vector<8x128xi1>, vector<8x128xf32>
    %cst_106 = arith.constant dense<0.000000e+00> : vector<8xf32>
    %341 = vector.multi_reduction <add>, %340, %cst_106 [1] : vector<8x128xf32> to vector<8xf32>
    %342 = vector.shape_cast %341 : vector<8xf32> to vector<8x1xf32>
    %343 = math.log %342 : vector<8x1xf32>
    %344 = arith.addf %343, %335 : vector<8x1xf32>
    %c0_107 = arith.constant 0 : index
    %c0_108 = arith.constant 0 : index
    %345 = vector.load %arg3[%c0_107, %c0_108] : memref<8x1xi32, #tpu.memory_space<vmem>>, vector<8x1xi32>
    %346 = vector.broadcast %345 : vector<8x1xi32> to vector<8x128xi32>
    %347 = arith.cmpi eq, %329, %346 : vector<8x128xi32>
    %348 = arith.extui %347 : vector<8x128xi1> to vector<8x128xi32>
    %349 = arith.sitofp %348 : vector<8x128xi32> to vector<8x128xf32>
    %350 = arith.mulf %349, %327 : vector<8x128xf32>
    %cst_109 = arith.constant dense<0.000000e+00> : vector<8xf32>
    %351 = vector.multi_reduction <add>, %350, %cst_109 [1] : vector<8x128xf32> to vector<8xf32>
    %352 = vector.shape_cast %351 : vector<8xf32> to vector<8x1xf32>
    %353 = arith.subf %344, %352 : vector<8x1xf32>
    %354 = vector.shape_cast %353 : vector<8x1xf32> to vector<1x8x1xf32>
    %cst_110 = arith.constant dense<0.000000e+00> : vector<1xf32>
    %355 = vector.multi_reduction <add>, %354, %cst_110 [1, 2] : vector<1x8x1xf32> to vector<1xf32>
    %356 = vector.shape_cast %355 : vector<1xf32> to vector<1x1x1xf32>
    %357 = vector.extract %356[0, 0, 0] : f32 from vector<1x1x1xf32>
    %cst_111 = arith.constant 1.250000e-01 : f32
    %358 = arith.mulf %357, %cst_111 : f32
    %cst_112 = arith.constant 0.000000e+00 : f32
    %359 = vector.broadcast %cst_112 : f32 to vector<1x128xf32>
    %360 = vector.broadcast %358 : f32 to vector<1x128xf32>
    %361 = arith.addf %359, %360 : vector<1x128xf32>
    %c0_113 = arith.constant 0 : index
    %c0_114 = arith.constant 0 : index
    %362 = vector.load %arg13[%c0_113, %c0_114] : memref<1x128xf32, #tpu.memory_space<vmem>>, vector<1x128xf32>
    tpu.vector_store %arg13[%c0_113, %c0_114], %361 {strides = array<i32>} : memref<1x128xf32, #tpu.memory_space<vmem>>, vector<1x128xf32>,
    return
  }
  func.func @transform_0(%arg0: i32) -> (i32, i32) {
    %c0_i32 = arith.constant 0 : i32
    %c0_i32_0 = arith.constant 0 : i32
    %c0_i32_1 = arith.constant 0 : i32
    return %c0_i32, %c0_i32_0 : i32, i32
  }
  func.func @transform_1(%arg0: i32) -> (i32, i32) {
    %c0_i32 = arith.constant 0 : i32
    %c0_i32_0 = arith.constant 0 : i32
    %c0_i32_1 = arith.constant 0 : i32
    return %c0_i32, %c0_i32_0 : i32, i32
  }
  func.func @transform_2(%arg0: i32) -> (i32, i32) {
    %c0_i32 = arith.constant 0 : i32
    %c0_i32_0 = arith.constant 0 : i32
    %c0_i32_1 = arith.constant 0 : i32
    return %c0_i32, %c0_i32_0 : i32, i32
  }
  func.func @transform_3(%arg0: i32) -> (i32, i32, i32) {
    %c0_i32 = arith.constant 0 : i32
    %c0_i32_0 = arith.constant 0 : i32
    %c0_i32_1 = arith.constant 0 : i32
    %c0_i32_2 = arith.constant 0 : i32
    return %c0_i32, %c0_i32_0, %c0_i32_1 : i32, i32, i32
  }
  func.func @transform_4(%arg0: i32) -> (i32, i32, i32) {
    %c0_i32 = arith.constant 0 : i32
    %c0_i32_0 = arith.constant 0 : i32
    %c0_i32_1 = arith.constant 0 : i32
    %c0_i32_2 = arith.constant 0 : i32
    return %c0_i32, %c0_i32_0, %c0_i32_1 : i32, i32, i32
  }
  func.func @transform_5(%arg0: i32) -> (i32, i32, i32) {
    %c0_i32 = arith.constant 0 : i32
    %c0_i32_0 = arith.constant 0 : i32
    %c0_i32_1 = arith.constant 0 : i32
    %c0_i32_2 = arith.constant 0 : i32
    return %c0_i32, %c0_i32_0, %c0_i32_1 : i32, i32, i32
  }
  func.func @transform_6(%arg0: i32) -> (i32, i32, i32) {
    %c0_i32 = arith.constant 0 : i32
    %c0_i32_0 = arith.constant 0 : i32
    %c0_i32_1 = arith.constant 0 : i32
    %c0_i32_2 = arith.constant 0 : i32
    return %c0_i32, %c0_i32_0, %c0_i32_1 : i32, i32, i32
  }
  func.func @transform_7(%arg0: i32) -> (i32, i32, i32) {
    %c0_i32 = arith.constant 0 : i32
    %c0_i32_0 = arith.constant 0 : i32
    %c0_i32_1 = arith.constant 0 : i32
    %c0_i32_2 = arith.constant 0 : i32
    return %c0_i32, %c0_i32_0, %c0_i32_1 : i32, i32, i32
  }
  func.func @transform_8(%arg0: i32) -> (i32, i32) {
    %c0_i32 = arith.constant 0 : i32
    %c0_i32_0 = arith.constant 0 : i32
    %c0_i32_1 = arith.constant 0 : i32
    return %c0_i32, %c0_i32_0 : i32, i32
  }
  func.func @transform_9(%arg0: i32) -> (i32, i32) {
    %c0_i32 = arith.constant 0 : i32
    %c0_i32_0 = arith.constant 0 : i32
    %c0_i32_1 = arith.constant 0 : i32
    return %c0_i32, %c0_i32_0 : i32, i32
  }
  func.func @transform_10(%arg0: i32) -> (i32, i32) {
    %c0_i32 = arith.constant 0 : i32
    %c0_i32_0 = arith.constant 0 : i32
    %c0_i32_1 = arith.constant 0 : i32
    return %c0_i32, %c0_i32_0 : i32, i32
  }
  func.func @transform_11(%arg0: i32) -> (i32, i32) {
    %c0_i32 = arith.constant 0 : i32
    %c0_i32_0 = arith.constant 0 : i32
    %c0_i32_1 = arith.constant 0 : i32
    return %c0_i32, %c0_i32_0 : i32, i32
  }
  func.func @transform_12(%arg0: i32) -> (i32, i32) {
    %c0_i32 = arith.constant 0 : i32
    %c0_i32_0 = arith.constant 0 : i32
    %c0_i32_1 = arith.constant 0 : i32
    return %c0_i32, %c0_i32_0 : i32, i32
  }
}

</mosaic_0001>

<llo_original>
// kernel: _forward_core.1
$region0: #{_forward_core.1}
  #allocation0 [shape = 'u32[]', space=smem, size = 0x4, offset = 0x4, fixed_abs, tag = 'smem constant byte address 0x4 - core index']
  #allocation1 [shape = 'u32[72,128]{1,0:T(1,128)}', space=vmem, size = 0x9000, scoped, tag = 'internal scratch']
  %s0 = inlined_call_operand.vmem [shape: f32[64,32], index: 0, kind: input, shape index: {}]
  %s1 = inlined_call_operand.vmem [shape: f32[8,8], index: 1, kind: input, shape index: {}]
  %s2 = inlined_call_operand.vmem [shape: s32[8,1], index: 2, kind: input, shape index: {}]
  %s3 = inlined_call_operand.vmem [shape: f32[2,32,96], index: 3, kind: input, shape index: {}]
  %s4 = inlined_call_operand.vmem [shape: f32[2,32,32], index: 4, kind: input, shape index: {}]
  %s5 = inlined_call_operand.vmem [shape: f32[2,32,64], index: 5, kind: input, shape index: {}]
  %s6 = inlined_call_operand.vmem [shape: f32[2,64,32], index: 6, kind: input, shape index: {}]
  %s7 = inlined_call_operand.vmem [shape: f32[2,8,128], index: 7, kind: input, shape index: {}]
  %s8 = inlined_call_operand.vmem [shape: f32[8,128], index: 8, kind: input, shape index: {}]
  %s9 = inlined_call_operand.vmem [shape: f32[32,32], index: 9, kind: input, shape index: {}]
  %s10 = inlined_call_operand.vmem [shape: f32[32,128], index: 10, kind: input, shape index: {}]
  %s11 = inlined_call_operand.hbm [shape: f32[8,128], index: 11, kind: output, shape index: {0}]
  %s12 = inlined_call_operand.hbm [shape: f32[1,128], index: 12, kind: output, shape index: {1}]
  %13 = xla_tuple %s11, %s12
  %s14 = sld [smem:[#allocation0]]
  $region62: #{_forward_core.1} parent=0
    _
  %s16 = ssub.s32 1, %s14
  %s17 = scalar_select 0, %s16, %s14
  $region1: #{_forward_core.1} parent=0
    #allocation2 [shape = 'u8[4096]{0}', space=vmem, size = 0x1000, scoped, tag = 'output window, operand 0, single buffered']
    #allocation3 [shape = 's32[1]{0}', space=sflag, size = 0x4, scoped, tag = 'scoped memory for _forward_core.1']
    #allocation4 [shape = 'u8[512]{0}', space=vmem, size = 0x400, scoped, tag = 'output window, operand 1, single buffered']
    #allocation5 [shape = 's32[1]{0}', space=sflag, size = 0x4, scoped, tag = 'scoped memory for _forward_core.1']
    %18 = vsyncpa [#allocation3], 0
    %19 = vsyncpa [#allocation5], 0
    // Predicated region
    $region2: #{_forward_core.1} parent=1 // pred_check
      _
    $region3: #{_forward_core.1} parent=1 // pred_check_branch
      %21 = sbr.rel (0) target = $region5
    $region4: #{_forward_core.1} parent=1 // pred_region
      _
    $region5: #{_forward_core.1} parent=1 // pred_fallthru
      _
    // Predicated region
    $region6: #{_forward_core.1} parent=1 // pred_check
      _
    $region7: #{_forward_core.1} parent=1 // pred_check_branch
      %23 = sbr.rel (0) target = $region9
    $region8: #{_forward_core.1} parent=1 // pred_region
      _
    $region9: #{_forward_core.1} parent=1 // pred_fallthru
      _
    // Predicated region
    $region10: #{_forward_core.1} parent=1 // pred_check
      _
    $region11: #{_forward_core.1} parent=1 // pred_check_branch
      %25 = sbr.rel (0) target = $region13
    $region12: #{_forward_core.1} parent=1 // pred_region
      _
    $region13: #{_forward_core.1} parent=1 // pred_fallthru
      _
    // Predicated region
    $region14: #{_forward_core.1} parent=1 // pred_check
      _
    $region15: #{_forward_core.1} parent=1 // pred_check_branch
      %27 = sbr.rel (0) target = $region17
    $region16: #{_forward_core.1} parent=1 // pred_region
      _
    $region17: #{_forward_core.1} parent=1 // pred_fallthru
      _
    // Predicated region
    $region18: #{_forward_core.1} parent=1 // pred_check
      _
    $region19: #{_forward_core.1} parent=1 // pred_check_branch
      %29 = sbr.rel (0) target = $region21
    $region20: #{_forward_core.1} parent=1 // pred_region
      _
    $region21: #{_forward_core.1} parent=1 // pred_fallthru
      _
    // Predicated region
    $region22: #{_forward_core.1} parent=1 // pred_check
      _
    $region23: #{_forward_core.1} parent=1 // pred_check_branch
      %31 = sbr.rel (0) target = $region25
    $region24: #{_forward_core.1} parent=1 // pred_region
      _
    $region25: #{_forward_core.1} parent=1 // pred_fallthru
      _
    // Predicated region
    $region26: #{_forward_core.1} parent=1 // pred_check
      _
    $region27: #{_forward_core.1} parent=1 // pred_check_branch
      %33 = sbr.rel (0) target = $region29
    $region28: #{_forward_core.1} parent=1 // pred_region
      _
    $region29: #{_forward_core.1} parent=1 // pred_fallthru
      _
    // Predicated region
    $region30: #{_forward_core.1} parent=1 // pred_check
      _
    $region31: #{_forward_core.1} parent=1 // pred_check_branch
      %35 = sbr.rel (0) target = $region33
    $region32: #{_forward_core.1} parent=1 // pred_region
      _
    $region33: #{_forward_core.1} parent=1 // pred_fallthru
      _
    // Predicated region
    $region34: #{_forward_core.1} parent=1 // pred_check
      _
    $region35: #{_forward_core.1} parent=1 // pred_check_branch
      %37 = sbr.rel (0) target = $region37
    $region36: #{_forward_core.1} parent=1 // pred_region
      _
    $region37: #{_forward_core.1} parent=1 // pred_fallthru
      _
    // Predicated region
    $region38: #{_forward_core.1} parent=1 // pred_check
      _
    $region39: #{_forward_core.1} parent=1 // pred_check_branch
      %39 = sbr.rel (0) target = $region41
    $region40: #{_forward_core.1} parent=1 // pred_region
      _
    $region41: #{_forward_core.1} parent=1 // pred_fallthru
      _
    // Predicated region
    $region42: #{_forward_core.1} parent=1 // pred_check
      _
    $region43: #{_forward_core.1} parent=1 // pred_check_branch
      %41 = sbr.rel (0) target = $region45
    $region44: #{_forward_core.1} parent=1 // pred_region
      _
    $region45: #{_forward_core.1} parent=1 // pred_fallthru
      _
    %v42 = vld [vmem:[%s8] sm:$0xff]
    %v43 = vld [vmem:[%s1] sm:$0xff]
    %v44 = vld [vmem:[%s0] sm:$0xff]
    %v45 = vld [vmem:[%s0 + $0x8] sm:$0xff]
    %v46 = vld [vmem:[%s0 + $0x10] sm:$0xff]
    %v47 = vld [vmem:[%s0 + $0x18] sm:$0xff]
    %v48 = vld [vmem:[%s0 + $0x20] sm:$0xff]
    %v49 = vld [vmem:[%s0 + $0x28] sm:$0xff]
    %v50 = vld [vmem:[%s0 + $0x30] sm:$0xff]
    %v51 = vld [vmem:[%s0 + $0x38] sm:$0xff]
    %vm52 = vcmask 261120
    %v53 = vsel %vm52, %v44, 0.0
    %54 = vadd.xlane.f32.xlu0 %v53
    %v55 = vpop.xlane.xlu0 %54
    %v56 = vsel %vm52, %v45, 0.0
    %57 = vadd.xlane.f32.xlu0 %v56
    %v58 = vpop.xlane.xlu0 %57
    %v59 = vsel %vm52, %v46, 0.0
    %60 = vadd.xlane.f32.xlu0 %v59
    %v61 = vpop.xlane.xlu0 %60
    %v62 = vsel %vm52, %v47, 0.0
    %63 = vadd.xlane.f32.xlu0 %v62
    %v64 = vpop.xlane.xlu0 %63
    %v65 = vsel %vm52, %v48, 0.0
    %66 = vadd.xlane.f32.xlu0 %v65
    %v67 = vpop.xlane.xlu0 %66
    %v68 = vsel %vm52, %v49, 0.0
    %69 = vadd.xlane.f32.xlu0 %v68
    %v70 = vpop.xlane.xlu0 %69
    %v71 = vsel %vm52, %v50, 0.0
    %72 = vadd.xlane.f32.xlu0 %v71
    %v73 = vpop.xlane.xlu0 %72
    %v74 = vsel %vm52, %v51, 0.0
    %75 = vadd.xlane.f32.xlu0 %v74
    %v76 = vpop.xlane.xlu0 %75
    %v77 = vrcp.pop 32.0
    %v78 = vmul.f32 32.0, %v77
    %v79 = vsub.f32 1.0, %v78
    %v80 = vmul.f32 %v77, %v79
    %v81 = vadd.f32 %v77, %v80
    %vm82 = vweird.f32 %v77
    %v83 = vsel %vm82, %v77, %v81
    %v84 = vmul.f32 %v55, %v83
    %v85 = vmul.f32 %v58, %v83
    %v86 = vmul.f32 %v61, %v83
    %v87 = vmul.f32 %v64, %v83
    %v88 = vmul.f32 %v67, %v83
    %v89 = vmul.f32 %v70, %v83
    %v90 = vmul.f32 %v73, %v83
    %v91 = vmul.f32 %v76, %v83
    %v92 = vsub.f32 %v44, %v84
    %v93 = vsub.f32 %v45, %v85
    %v94 = vsub.f32 %v46, %v86
    %v95 = vsub.f32 %v47, %v87
    %v96 = vsub.f32 %v48, %v88
    %v97 = vsub.f32 %v49, %v89
    %v98 = vsub.f32 %v50, %v90
    %v99 = vsub.f32 %v51, %v91
    %v100 = vmul.f32 %v92, %v92
    %v101 = vmul.f32 %v93, %v93
    %v102 = vmul.f32 %v94, %v94
    %v103 = vmul.f32 %v95, %v95
    %v104 = vmul.f32 %v96, %v96
    %v105 = vmul.f32 %v97, %v97
    %v106 = vmul.f32 %v98, %v98
    %v107 = vmul.f32 %v99, %v99
    %v108 = vsel %vm52, %v100, 0.0
    %109 = vadd.xlane.f32.xlu0 %v108
    %v110 = vpop.xlane.xlu0 %109
    %v111 = vsel %vm52, %v101, 0.0
    %112 = vadd.xlane.f32.xlu0 %v111
    %v113 = vpop.xlane.xlu0 %112
    %v114 = vsel %vm52, %v102, 0.0
    %115 = vadd.xlane.f32.xlu0 %v114
    %v116 = vpop.xlane.xlu0 %115
    %v117 = vsel %vm52, %v103, 0.0
    %118 = vadd.xlane.f32.xlu0 %v117
    %v119 = vpop.xlane.xlu0 %118
    %v120 = vsel %vm52, %v104, 0.0
    %121 = vadd.xlane.f32.xlu0 %v120
    %v122 = vpop.xlane.xlu0 %121
    %v123 = vsel %vm52, %v105, 0.0
    %124 = vadd.xlane.f32.xlu0 %v123
    %v125 = vpop.xlane.xlu0 %124
    %v126 = vsel %vm52, %v106, 0.0
    %127 = vadd.xlane.f32.xlu0 %v126
    %v128 = vpop.xlane.xlu0 %127
    %v129 = vsel %vm52, %v107, 0.0
    %130 = vadd.xlane.f32.xlu0 %v129
    %v131 = vpop.xlane.xlu0 %130
    %v132 = vmul.f32 %v110, %v83
    %v133 = vmul.f32 %v113, %v83
    %v134 = vmul.f32 %v116, %v83
    %v135 = vmul.f32 %v119, %v83
    %v136 = vmul.f32 %v122, %v83
    %v137 = vmul.f32 %v125, %v83
    %v138 = vmul.f32 %v128, %v83
    %v139 = vmul.f32 %v131, %v83
    %v140 = vadd.f32 %v132, 1e-05
    %v141 = vadd.f32 %v133, 1e-05
    %v142 = vadd.f32 %v134, 1e-05
    %v143 = vadd.f32 %v135, 1e-05
    %v144 = vadd.f32 %v136, 1e-05
    %v145 = vadd.f32 %v137, 1e-05
    %v146 = vadd.f32 %v138, 1e-05
    %v147 = vadd.f32 %v139, 1e-05
    %v148 = vrsqrt.pop %v140
    %v149 = vmul.f32 %v148, %v140
    %v150 = vmul.f32 %v149, %v148
    %v151 = vmul.f32 0.5, %v150
    %v152 = vsub.f32 1.5, %v151
    %v153 = vmul.f32 %v148, %v152
    %vm154 = vweird.f32 %v140
    %vm155 = vweird.f32 %v148
    %vm156 = vmor %vm154, %vm155
    %v157 = vsel %vm156, %v148, %v153
    %v158 = vrsqrt.pop %v141
    %v159 = vmul.f32 %v158, %v141
    %v160 = vmul.f32 %v159, %v158
    %v161 = vmul.f32 0.5, %v160
    %v162 = vsub.f32 1.5, %v161
    %v163 = vmul.f32 %v158, %v162
    %vm164 = vweird.f32 %v141
    %vm165 = vweird.f32 %v158
    %vm166 = vmor %vm164, %vm165
    %v167 = vsel %vm166, %v158, %v163
    %v168 = vrsqrt.pop %v142
    %v169 = vmul.f32 %v168, %v142
    %v170 = vmul.f32 %v169, %v168
    %v171 = vmul.f32 0.5, %v170
    %v172 = vsub.f32 1.5, %v171
    %v173 = vmul.f32 %v168, %v172
    %vm174 = vweird.f32 %v142
    %vm175 = vweird.f32 %v168
    %vm176 = vmor %vm174, %vm175
    %v177 = vsel %vm176, %v168, %v173
    %v178 = vrsqrt.pop %v143
    %v179 = vmul.f32 %v178, %v143
    %v180 = vmul.f32 %v179, %v178
    %v181 = vmul.f32 0.5, %v180
    %v182 = vsub.f32 1.5, %v181
    %v183 = vmul.f32 %v178, %v182
    %vm184 = vweird.f32 %v143
    %vm185 = vweird.f32 %v178
    %vm186 = vmor %vm184, %vm185
    %v187 = vsel %vm186, %v178, %v183
    %v188 = vrsqrt.pop %v144
    %v189 = vmul.f32 %v188, %v144
    %v190 = vmul.f32 %v189, %v188
    %v191 = vmul.f32 0.5, %v190
    %v192 = vsub.f32 1.5, %v191
    %v193 = vmul.f32 %v188, %v192
    %vm194 = vweird.f32 %v144
    %vm195 = vweird.f32 %v188
    %vm196 = vmor %vm194, %vm195
    %v197 = vsel %vm196, %v188, %v193
    %v198 = vrsqrt.pop %v145
    %v199 = vmul.f32 %v198, %v145
    %v200 = vmul.f32 %v199, %v198
    %v201 = vmul.f32 0.5, %v200
    %v202 = vsub.f32 1.5, %v201
    %v203 = vmul.f32 %v198, %v202
    %vm204 = vweird.f32 %v145
    %vm205 = vweird.f32 %v198
    %vm206 = vmor %vm204, %vm205
    %v207 = vsel %vm206, %v198, %v203
    %v208 = vrsqrt.pop %v146
    %v209 = vmul.f32 %v208, %v146
    %v210 = vmul.f32 %v209, %v208
    %v211 = vmul.f32 0.5, %v210
    %v212 = vsub.f32 1.5, %v211
    %v213 = vmul.f32 %v208, %v212
    %vm214 = vweird.f32 %v146
    %vm215 = vweird.f32 %v208
    %vm216 = vmor %vm214, %vm215
    %v217 = vsel %vm216, %v208, %v213
    %v218 = vrsqrt.pop %v147
    %v219 = vmul.f32 %v218, %v147
    %v220 = vmul.f32 %v219, %v218
    %v221 = vmul.f32 0.5, %v220
    %v222 = vsub.f32 1.5, %v221
    %v223 = vmul.f32 %v218, %v222
    %vm224 = vweird.f32 %v147
    %vm225 = vweird.f32 %v218
    %vm226 = vmor %vm224, %vm225
    %v227 = vsel %vm226, %v218, %v223
    %v228 = vmul.f32 %v92, %v157
    %v229 = vmul.f32 %v93, %v167
    %v230 = vmul.f32 %v94, %v177
    %v231 = vmul.f32 %v95, %v187
    %v232 = vmul.f32 %v96, %v197
    %v233 = vmul.f32 %v97, %v207
    %v234 = vmul.f32 %v98, %v217
    %v235 = vmul.f32 %v99, %v227
    %v236 = vperm.slane %v42, 0
    %v237 = vmul.f32 %v228, %v236
    %v238 = vmul.f32 %v229, %v236
    %v239 = vmul.f32 %v230, %v236
    %v240 = vmul.f32 %v231, %v236
    %v241 = vmul.f32 %v232, %v236
    %v242 = vmul.f32 %v233, %v236
    %v243 = vmul.f32 %v234, %v236
    %v244 = vmul.f32 %v235, %v236
    %v245 = vperm.slane %v42, 1
    %v246 = vadd.f32 %v237, %v245
    %v247 = vadd.f32 %v238, %v245
    %v248 = vadd.f32 %v239, %v245
    %v249 = vadd.f32 %v240, %v245
    %v250 = vadd.f32 %v241, %v245
    %v251 = vadd.f32 %v242, %v245
    %v252 = vadd.f32 %v243, %v245
    %v253 = vadd.f32 %v244, %v245
    %v254 = vld [vmem:[%s3] sm:$0xff]
    %v255 = vld [vmem:[%s3 + $0x8] sm:$0xff]
    %v256 = vld [vmem:[%s3 + $0x10] sm:$0xff]
    %v257 = vld [vmem:[%s3 + $0x18] sm:$0xff]
    %v258 = vld [vmem:[%s4] sm:$0xff]
    %v259 = vld [vmem:[%s4 + $0x8] sm:$0xff]
    %v260 = vld [vmem:[%s4 + $0x10] sm:$0xff]
    %v261 = vld [vmem:[%s4 + $0x18] sm:$0xff]
    %v262 = vld [vmem:[%s5] sm:$0xff]
    %v263 = vld [vmem:[%s5 + $0x8] sm:$0xff]
    %v264 = vld [vmem:[%s5 + $0x10] sm:$0xff]
    %v265 = vld [vmem:[%s5 + $0x18] sm:$0xff]
    %v266 = vld [vmem:[%s6] sm:$0xff]
    %v267 = vld [vmem:[%s6 + $0x8] sm:$0xff]
    %v268 = vld [vmem:[%s6 + $0x10] sm:$0xff]
    %v269 = vld [vmem:[%s6 + $0x18] sm:$0xff]
    %v270 = vld [vmem:[%s6 + $0x20] sm:$0xff]
    %v271 = vld [vmem:[%s6 + $0x28] sm:$0xff]
    %v272 = vld [vmem:[%s6 + $0x30] sm:$0xff]
    %v273 = vld [vmem:[%s6 + $0x38] sm:$0xff]
    %v274 = vld [vmem:[%s7] sm:$0xff]
    %v275 = vperm.slane %v274, 0
    %v277 = vsel %vm52, %v246, 0
    %v280 = vsel %vm52, %v247, 0
    %v283 = vsel %vm52, %v248, 0
    %v286 = vsel %vm52, %v249, 0
    %v289 = vsel %vm52, %v250, 0
    %v292 = vsel %vm52, %v251, 0
    %v295 = vsel %vm52, %v252, 0
    %v298 = vsel %vm52, %v253, 0
    %300 = vmatpush.msra.mxu0 0.0
    %301 = vmatpush.msra.mxu0 0.0
    %302 = vmatpush.msra.mxu0 0.0
    %303 = vmatpush.msra.mxu0 0.0
    %304 = vmatpush.msra.mxu0 0.0
    %305 = vmatpush.msra.mxu0 0.0
    %306 = vmatpush.msra.mxu0 0.0
    %307 = vmatpush.msra.mxu0 0.0
    %308 = vmatpush.msra.mxu0 0.0
    %309 = vmatpush.msra.mxu0 0.0
    %310 = vmatpush.msra.mxu0 0.0
    %311 = vmatpush.msra.mxu0 0.0
    %312 = vmatpush.msra.mxu0 %v257
    %313 = vmatpush.msra.mxu0 %v256
    %314 = vmatpush.msra.mxu0 %v255
    %315 = vmatpush.msra.mxu0 %v254
    %316 = vmatmul.f32.gmra.mxu0 %v277
    %v317 = vpop.f32.mrf.mxu0
    %v318 = vadd.f32 %v275, %v317
    %319 = vmatmul.f32.gmra.mxu0 %v280
    %v320 = vpop.f32.mrf.mxu0
    %v321 = vadd.f32 %v275, %v320
    %322 = vmatmul.f32.gmra.mxu0 %v283
    %v323 = vpop.f32.mrf.mxu0
    %v324 = vadd.f32 %v275, %v323
    %325 = vmatmul.f32.gmra.mxu0 %v286
    %v326 = vpop.f32.mrf.mxu0
    %v327 = vadd.f32 %v275, %v326
    %328 = vmatmul.f32.gmra.mxu0 %v289
    %v329 = vpop.f32.mrf.mxu0
    %v330 = vadd.f32 %v275, %v329
    %331 = vmatmul.f32.gmra.mxu0 %v292
    %v332 = vpop.f32.mrf.mxu0
    %v333 = vadd.f32 %v275, %v332
    %334 = vmatmul.f32.gmra.mxu0 %v295
    %v335 = vpop.f32.mrf.mxu0
    %v336 = vadd.f32 %v275, %v335
    %337 = vmatmul.f32.gmra.mxu0 %v298
    %v338 = vpop.f32.mrf.mxu0
    %v339 = vadd.f32 %v275, %v338
    %340 = vdwg.mxu0
    %342 = vrot.lane.b32.xlu0 %v318, 96
    %v343 = vpop.permute.xlu0 %342
    %vm344 = vcmask 130048
    %v345 = vsel %vm344, %v318, 0
    %v347 = vsel %vm344, %v343, 0
    %349 = vmatpush.xpose.msra.mxu0 0.0
    %350 = vmatpush.xpose.msra.mxu0 0.0
    %351 = vmatpush.xpose.msra.mxu0 0.0
    %352 = vmatpush.xpose.msra.mxu0 0.0
    %353 = vmatpush.xpose.msra.mxu0 0.0
    %354 = vmatpush.xpose.msra.mxu0 0.0
    %355 = vmatpush.xpose.msra.mxu0 0.0
    %356 = vmatpush.xpose.msra.mxu0 0.0
    %357 = vmatpush.xpose.msra.mxu0 0.0
    %358 = vmatpush.xpose.msra.mxu0 0.0
    %359 = vmatpush.xpose.msra.mxu0 0.0
    %360 = vmatpush.xpose.msra.mxu0 0.0
    %361 = vmatpush.xpose.msra.mxu0 0.0
    %362 = vmatpush.xpose.msra.mxu0 0.0
    %363 = vmatpush.xpose.msra.mxu0 0.0
    %364 = vmatpush.xpose.msra.mxu0 %v347
    %365 = vmatmul.f32.gmra.mxu0 %v345
    %v366 = vpop.f32.mrf.mxu0
    %v367 = vadd.f32 0.0, %v366
    %368 = vdwg.mxu0
    %370 = vrot.lane.b32.xlu0 %v321, 96
    %v371 = vpop.permute.xlu0 %370
    %v372 = vsel %vm344, %v321, 0
    %v374 = vsel %vm344, %v371, 0
    %376 = vmatpush.xpose.msra.mxu0 0.0
    %377 = vmatpush.xpose.msra.mxu0 0.0
    %378 = vmatpush.xpose.msra.mxu0 0.0
    %379 = vmatpush.xpose.msra.mxu0 0.0
    %380 = vmatpush.xpose.msra.mxu0 0.0
    %381 = vmatpush.xpose.msra.mxu0 0.0
    %382 = vmatpush.xpose.msra.mxu0 0.0
    %383 = vmatpush.xpose.msra.mxu0 0.0
    %384 = vmatpush.xpose.msra.mxu0 0.0
    %385 = vmatpush.xpose.msra.mxu0 0.0
    %386 = vmatpush.xpose.msra.mxu0 0.0
    %387 = vmatpush.xpose.msra.mxu0 0.0
    %388 = vmatpush.xpose.msra.mxu0 0.0
    %389 = vmatpush.xpose.msra.mxu0 0.0
    %390 = vmatpush.xpose.msra.mxu0 0.0
    %391 = vmatpush.xpose.msra.mxu0 %v374
    %392 = vmatmul.f32.gmra.mxu0 %v372
    %v393 = vpop.f32.mrf.mxu0
    %v394 = vadd.f32 0.0, %v393
    %395 = vdwg.mxu0
    %397 = vrot.lane.b32.xlu0 %v324, 96
    %v398 = vpop.permute.xlu0 %397
    %v399 = vsel %vm344, %v324, 0
    %v401 = vsel %vm344, %v398, 0
    %403 = vmatpush.xpose.msra.mxu0 0.0
    %404 = vmatpush.xpose.msra.mxu0 0.0
    %405 = vmatpush.xpose.msra.mxu0 0.0
    %406 = vmatpush.xpose.msra.mxu0 0.0
    %407 = vmatpush.xpose.msra.mxu0 0.0
    %408 = vmatpush.xpose.msra.mxu0 0.0
    %409 = vmatpush.xpose.msra.mxu0 0.0
    %410 = vmatpush.xpose.msra.mxu0 0.0
    %411 = vmatpush.xpose.msra.mxu0 0.0
    %412 = vmatpush.xpose.msra.mxu0 0.0
    %413 = vmatpush.xpose.msra.mxu0 0.0
    %414 = vmatpush.xpose.msra.mxu0 0.0
    %415 = vmatpush.xpose.msra.mxu0 0.0
    %416 = vmatpush.xpose.msra.mxu0 0.0
    %417 = vmatpush.xpose.msra.mxu0 0.0
    %418 = vmatpush.xpose.msra.mxu0 %v401
    %419 = vmatmul.f32.gmra.mxu0 %v399
    %v420 = vpop.f32.mrf.mxu0
    %v421 = vadd.f32 0.0, %v420
    %422 = vdwg.mxu0
    %424 = vrot.lane.b32.xlu0 %v327, 96
    %v425 = vpop.permute.xlu0 %424
    %v426 = vsel %vm344, %v327, 0
    %v428 = vsel %vm344, %v425, 0
    %430 = vmatpush.xpose.msra.mxu0 0.0
    %431 = vmatpush.xpose.msra.mxu0 0.0
    %432 = vmatpush.xpose.msra.mxu0 0.0
    %433 = vmatpush.xpose.msra.mxu0 0.0
    %434 = vmatpush.xpose.msra.mxu0 0.0
    %435 = vmatpush.xpose.msra.mxu0 0.0
    %436 = vmatpush.xpose.msra.mxu0 0.0
    %437 = vmatpush.xpose.msra.mxu0 0.0
    %438 = vmatpush.xpose.msra.mxu0 0.0
    %439 = vmatpush.xpose.msra.mxu0 0.0
    %440 = vmatpush.xpose.msra.mxu0 0.0
    %441 = vmatpush.xpose.msra.mxu0 0.0
    %442 = vmatpush.xpose.msra.mxu0 0.0
    %443 = vmatpush.xpose.msra.mxu0 0.0
    %444 = vmatpush.xpose.msra.mxu0 0.0
    %445 = vmatpush.xpose.msra.mxu0 %v428
    %446 = vmatmul.f32.gmra.mxu0 %v426
    %v447 = vpop.f32.mrf.mxu0
    %v448 = vadd.f32 0.0, %v447
    %449 = vdwg.mxu0
    %451 = vrot.lane.b32.xlu0 %v330, 96
    %v452 = vpop.permute.xlu0 %451
    %v453 = vsel %vm344, %v330, 0
    %v455 = vsel %vm344, %v452, 0
    %457 = vmatpush.xpose.msra.mxu0 0.0
    %458 = vmatpush.xpose.msra.mxu0 0.0
    %459 = vmatpush.xpose.msra.mxu0 0.0
    %460 = vmatpush.xpose.msra.mxu0 0.0
    %461 = vmatpush.xpose.msra.mxu0 0.0
    %462 = vmatpush.xpose.msra.mxu0 0.0
    %463 = vmatpush.xpose.msra.mxu0 0.0
    %464 = vmatpush.xpose.msra.mxu0 0.0
    %465 = vmatpush.xpose.msra.mxu0 0.0
    %466 = vmatpush.xpose.msra.mxu0 0.0
    %467 = vmatpush.xpose.msra.mxu0 0.0
    %468 = vmatpush.xpose.msra.mxu0 0.0
    %469 = vmatpush.xpose.msra.mxu0 0.0
    %470 = vmatpush.xpose.msra.mxu0 0.0
    %471 = vmatpush.xpose.msra.mxu0 0.0
    %472 = vmatpush.xpose.msra.mxu0 %v455
    %473 = vmatmul.f32.gmra.mxu0 %v453
    %v474 = vpop.f32.mrf.mxu0
    %v475 = vadd.f32 0.0, %v474
    %476 = vdwg.mxu0
    %478 = vrot.lane.b32.xlu0 %v333, 96
    %v479 = vpop.permute.xlu0 %478
    %v480 = vsel %vm344, %v333, 0
    %v482 = vsel %vm344, %v479, 0
    %484 = vmatpush.xpose.msra.mxu0 0.0
    %485 = vmatpush.xpose.msra.mxu0 0.0
    %486 = vmatpush.xpose.msra.mxu0 0.0
    %487 = vmatpush.xpose.msra.mxu0 0.0
    %488 = vmatpush.xpose.msra.mxu0 0.0
    %489 = vmatpush.xpose.msra.mxu0 0.0
    %490 = vmatpush.xpose.msra.mxu0 0.0
    %491 = vmatpush.xpose.msra.mxu0 0.0
    %492 = vmatpush.xpose.msra.mxu0 0.0
    %493 = vmatpush.xpose.msra.mxu0 0.0
    %494 = vmatpush.xpose.msra.mxu0 0.0
    %495 = vmatpush.xpose.msra.mxu0 0.0
    %496 = vmatpush.xpose.msra.mxu0 0.0
    %497 = vmatpush.xpose.msra.mxu0 0.0
    %498 = vmatpush.xpose.msra.mxu0 0.0
    %499 = vmatpush.xpose.msra.mxu0 %v482
    %500 = vmatmul.f32.gmra.mxu0 %v480
    %v501 = vpop.f32.mrf.mxu0
    %v502 = vadd.f32 0.0, %v501
    %503 = vdwg.mxu0
    %505 = vrot.lane.b32.xlu0 %v336, 96
    %v506 = vpop.permute.xlu0 %505
    %v507 = vsel %vm344, %v336, 0
    %v509 = vsel %vm344, %v506, 0
    %511 = vmatpush.xpose.msra.mxu0 0.0
    %512 = vmatpush.xpose.msra.mxu0 0.0
    %513 = vmatpush.xpose.msra.mxu0 0.0
    %514 = vmatpush.xpose.msra.mxu0 0.0
    %515 = vmatpush.xpose.msra.mxu0 0.0
    %516 = vmatpush.xpose.msra.mxu0 0.0
    %517 = vmatpush.xpose.msra.mxu0 0.0
    %518 = vmatpush.xpose.msra.mxu0 0.0
    %519 = vmatpush.xpose.msra.mxu0 0.0
    %520 = vmatpush.xpose.msra.mxu0 0.0
    %521 = vmatpush.xpose.msra.mxu0 0.0
    %522 = vmatpush.xpose.msra.mxu0 0.0
    %523 = vmatpush.xpose.msra.mxu0 0.0
    %524 = vmatpush.xpose.msra.mxu0 0.0
    %525 = vmatpush.xpose.msra.mxu0 0.0
    %526 = vmatpush.xpose.msra.mxu0 %v509
    %527 = vmatmul.f32.gmra.mxu0 %v507
    %v528 = vpop.f32.mrf.mxu0
    %v529 = vadd.f32 0.0, %v528
    %530 = vdwg.mxu0
    %532 = vrot.lane.b32.xlu0 %v339, 96
    %v533 = vpop.permute.xlu0 %532
    %v534 = vsel %vm344, %v339, 0
    %v536 = vsel %vm344, %v533, 0
    %538 = vmatpush.xpose.msra.mxu0 0.0
    %539 = vmatpush.xpose.msra.mxu0 0.0
    %540 = vmatpush.xpose.msra.mxu0 0.0
    %541 = vmatpush.xpose.msra.mxu0 0.0
    %542 = vmatpush.xpose.msra.mxu0 0.0
    %543 = vmatpush.xpose.msra.mxu0 0.0
    %544 = vmatpush.xpose.msra.mxu0 0.0
    %545 = vmatpush.xpose.msra.mxu0 0.0
    %546 = vmatpush.xpose.msra.mxu0 0.0
    %547 = vmatpush.xpose.msra.mxu0 0.0
    %548 = vmatpush.xpose.msra.mxu0 0.0
    %549 = vmatpush.xpose.msra.mxu0 0.0
    %550 = vmatpush.xpose.msra.mxu0 0.0
    %551 = vmatpush.xpose.msra.mxu0 0.0
    %552 = vmatpush.xpose.msra.mxu0 0.0
    %553 = vmatpush.xpose.msra.mxu0 %v536
    %554 = vmatmul.f32.gmra.mxu0 %v534
    %v555 = vpop.f32.mrf.mxu0
    %v556 = vadd.f32 0.0, %v555
    %557 = vdwg.mxu0
    %v558 = vmul.f32 %v367, 0.25
    %v559 = vmul.f32 %v394, 0.25
    %v560 = vmul.f32 %v421, 0.25
    %v561 = vmul.f32 %v448, 0.25
    %v562 = vmul.f32 %v475, 0.25
    %v563 = vmul.f32 %v502, 0.25
    %v564 = vmul.f32 %v529, 0.25
    %v565 = vmul.f32 %v556, 0.25
    %v567 = vrot.slane %v43, 1
    %v568 = vrot.slane %v43, 2
    %v569 = vrot.slane %v43, 3
    %v570 = vrot.slane %v43, 4
    %v571 = vrot.slane %v43, 5
    %v572 = vrot.slane %v43, 6
    %v573 = vrot.slane %v43, 7
    %v574 = vperm.slane %v43, 0
    %v575 = vperm.slane %v567, 0
    %v576 = vperm.slane %v568, 0
    %v577 = vperm.slane %v569, 0
    %v578 = vperm.slane %v570, 0
    %v579 = vperm.slane %v571, 0
    %v580 = vperm.slane %v572, 0
    %v581 = vperm.slane %v573, 0
    %v590 = vadd.f32 %v558, %v574
    %v591 = vadd.f32 %v559, %v575
    %v592 = vadd.f32 %v560, %v576
    %v593 = vadd.f32 %v561, %v577
    %v594 = vadd.f32 %v562, %v578
    %v595 = vadd.f32 %v563, %v579
    %v596 = vadd.f32 %v564, %v580
    %v597 = vadd.f32 %v565, %v581
    %vm598 = vcmask 64512
    %v599 = vsel %vm598, %v590, -inf
    %600 = vmax.xlane.f32.xlu0 %v599
    %v601 = vpop.xlane.xlu0 %600
    %v602 = vsel %vm598, %v591, -inf
    %603 = vmax.xlane.f32.xlu0 %v602
    %v604 = vpop.xlane.xlu0 %603
    %v605 = vsel %vm598, %v592, -inf
    %606 = vmax.xlane.f32.xlu0 %v605
    %v607 = vpop.xlane.xlu0 %606
    %v608 = vsel %vm598, %v593, -inf
    %609 = vmax.xlane.f32.xlu0 %v608
    %v610 = vpop.xlane.xlu0 %609
    %v611 = vsel %vm598, %v594, -inf
    %612 = vmax.xlane.f32.xlu0 %v611
    %v613 = vpop.xlane.xlu0 %612
    %v614 = vsel %vm598, %v595, -inf
    %615 = vmax.xlane.f32.xlu0 %v614
    %v616 = vpop.xlane.xlu0 %615
    %v617 = vsel %vm598, %v596, -inf
    %618 = vmax.xlane.f32.xlu0 %v617
    %v619 = vpop.xlane.xlu0 %618
    %v620 = vsel %vm598, %v597, -inf
    %621 = vmax.xlane.f32.xlu0 %v620
    %v622 = vpop.xlane.xlu0 %621
    %v623 = vsub.f32 %v590, %v601
    %v624 = vsub.f32 %v591, %v604
    %v625 = vsub.f32 %v592, %v607
    %v626 = vsub.f32 %v593, %v610
    %v627 = vsub.f32 %v594, %v613
    %v628 = vsub.f32 %v595, %v616
    %v629 = vsub.f32 %v596, %v619
    %v630 = vsub.f32 %v597, %v622
    %v631 = vmul.f32 %v623, 1.442695
    %v632 = vpow.pop %v631
    %v633 = vmul.f32 %v624, 1.442695
    %v634 = vpow.pop %v633
    %v635 = vmul.f32 %v625, 1.442695
    %v636 = vpow.pop %v635
    %v637 = vmul.f32 %v626, 1.442695
    %v638 = vpow.pop %v637
    %v639 = vmul.f32 %v627, 1.442695
    %v640 = vpow.pop %v639
    %v641 = vmul.f32 %v628, 1.442695
    %v642 = vpow.pop %v641
    %v643 = vmul.f32 %v629, 1.442695
    %v644 = vpow.pop %v643
    %v645 = vmul.f32 %v630, 1.442695
    %v646 = vpow.pop %v645
    %v647 = vsel %vm598, %v632, 0.0
    %648 = vadd.xlane.f32.xlu0 %v647
    %v649 = vpop.xlane.xlu0 %648
    %v650 = vsel %vm598, %v634, 0.0
    %651 = vadd.xlane.f32.xlu0 %v650
    %v652 = vpop.xlane.xlu0 %651
    %v653 = vsel %vm598, %v636, 0.0
    %654 = vadd.xlane.f32.xlu0 %v653
    %v655 = vpop.xlane.xlu0 %654
    %v656 = vsel %vm598, %v638, 0.0
    %657 = vadd.xlane.f32.xlu0 %v656
    %v658 = vpop.xlane.xlu0 %657
    %v659 = vsel %vm598, %v640, 0.0
    %660 = vadd.xlane.f32.xlu0 %v659
    %v661 = vpop.xlane.xlu0 %660
    %v662 = vsel %vm598, %v642, 0.0
    %663 = vadd.xlane.f32.xlu0 %v662
    %v664 = vpop.xlane.xlu0 %663
    %v665 = vsel %vm598, %v644, 0.0
    %666 = vadd.xlane.f32.xlu0 %v665
    %v667 = vpop.xlane.xlu0 %666
    %v668 = vsel %vm598, %v646, 0.0
    %669 = vadd.xlane.f32.xlu0 %v668
    %v670 = vpop.xlane.xlu0 %669
    %v671 = vrcp.pop %v649
    %v672 = vmul.f32 %v649, %v671
    %v673 = vsub.f32 1.0, %v672
    %v674 = vmul.f32 %v671, %v673
    %v675 = vadd.f32 %v671, %v674
    %vm676 = vweird.f32 %v649
    %vm677 = vweird.f32 %v671
    %vm678 = vmor %vm676, %vm677
    %v679 = vsel %vm678, %v671, %v675
    %v680 = vand.u32 2147483647, %v649
    %vm681 = vcmp.eq.f32.partialorder %v680, 8.507059e+37
    %v682 = vand.u32 %v649, 2147483648
    %v683 = vor.u32 1.1754944e-38, %v682
    %v684 = vsel %vm681, %v683, %v679
    %v685 = vmul.f32 %v632, %v684
    %v686 = vrcp.pop %v652
    %v687 = vmul.f32 %v652, %v686
    %v688 = vsub.f32 1.0, %v687
    %v689 = vmul.f32 %v686, %v688
    %v690 = vadd.f32 %v686, %v689
    %vm691 = vweird.f32 %v652
    %vm692 = vweird.f32 %v686
    %vm693 = vmor %vm691, %vm692
    %v694 = vsel %vm693, %v686, %v690
    %v695 = vand.u32 2147483647, %v652
    %vm696 = vcmp.eq.f32.partialorder %v695, 8.507059e+37
    %v697 = vand.u32 %v652, 2147483648
    %v698 = vor.u32 1.1754944e-38, %v697
    %v699 = vsel %vm696, %v698, %v694
    %v700 = vmul.f32 %v634, %v699
    %v701 = vrcp.pop %v655
    %v702 = vmul.f32 %v655, %v701
    %v703 = vsub.f32 1.0, %v702
    %v704 = vmul.f32 %v701, %v703
    %v705 = vadd.f32 %v701, %v704
    %vm706 = vweird.f32 %v655
    %vm707 = vweird.f32 %v701
    %vm708 = vmor %vm706, %vm707
    %v709 = vsel %vm708, %v701, %v705
    %v710 = vand.u32 2147483647, %v655
    %vm711 = vcmp.eq.f32.partialorder %v710, 8.507059e+37
    %v712 = vand.u32 %v655, 2147483648
    %v713 = vor.u32 1.1754944e-38, %v712
    %v714 = vsel %vm711, %v713, %v709
    %v715 = vmul.f32 %v636, %v714
    %v716 = vrcp.pop %v658
    %v717 = vmul.f32 %v658, %v716
    %v718 = vsub.f32 1.0, %v717
    %v719 = vmul.f32 %v716, %v718
    %v720 = vadd.f32 %v716, %v719
    %vm721 = vweird.f32 %v658
    %vm722 = vweird.f32 %v716
    %vm723 = vmor %vm721, %vm722
    %v724 = vsel %vm723, %v716, %v720
    %v725 = vand.u32 2147483647, %v658
    %vm726 = vcmp.eq.f32.partialorder %v725, 8.507059e+37
    %v727 = vand.u32 %v658, 2147483648
    %v728 = vor.u32 1.1754944e-38, %v727
    %v729 = vsel %vm726, %v728, %v724
    %v730 = vmul.f32 %v638, %v729
    %v731 = vrcp.pop %v661
    %v732 = vmul.f32 %v661, %v731
    %v733 = vsub.f32 1.0, %v732
    %v734 = vmul.f32 %v731, %v733
    %v735 = vadd.f32 %v731, %v734
    %vm736 = vweird.f32 %v661
    %vm737 = vweird.f32 %v731
    %vm738 = vmor %vm736, %vm737
    %v739 = vsel %vm738, %v731, %v735
    %v740 = vand.u32 2147483647, %v661
    %vm741 = vcmp.eq.f32.partialorder %v740, 8.507059e+37
    %v742 = vand.u32 %v661, 2147483648
    %v743 = vor.u32 1.1754944e-38, %v742
    %v744 = vsel %vm741, %v743, %v739
    %v745 = vmul.f32 %v640, %v744
    %v746 = vrcp.pop %v664
    %v747 = vmul.f32 %v664, %v746
    %v748 = vsub.f32 1.0, %v747
    %v749 = vmul.f32 %v746, %v748
    %v750 = vadd.f32 %v746, %v749
    %vm751 = vweird.f32 %v664
    %vm752 = vweird.f32 %v746
    %vm753 = vmor %vm751, %vm752
    %v754 = vsel %vm753, %v746, %v750
    %v755 = vand.u32 2147483647, %v664
    %vm756 = vcmp.eq.f32.partialorder %v755, 8.507059e+37
    %v757 = vand.u32 %v664, 2147483648
    %v758 = vor.u32 1.1754944e-38, %v757
    %v759 = vsel %vm756, %v758, %v754
    %v760 = vmul.f32 %v642, %v759
    %v761 = vrcp.pop %v667
    %v762 = vmul.f32 %v667, %v761
    %v763 = vsub.f32 1.0, %v762
    %v764 = vmul.f32 %v761, %v763
    %v765 = vadd.f32 %v761, %v764
    %vm766 = vweird.f32 %v667
    %vm767 = vweird.f32 %v761
    %vm768 = vmor %vm766, %vm767
    %v769 = vsel %vm768, %v761, %v765
    %v770 = vand.u32 2147483647, %v667
    %vm771 = vcmp.eq.f32.partialorder %v770, 8.507059e+37
    %v772 = vand.u32 %v667, 2147483648
    %v773 = vor.u32 1.1754944e-38, %v772
    %v774 = vsel %vm771, %v773, %v769
    %v775 = vmul.f32 %v644, %v774
    %v776 = vrcp.pop %v670
    %v777 = vmul.f32 %v670, %v776
    %v778 = vsub.f32 1.0, %v777
    %v779 = vmul.f32 %v776, %v778
    %v780 = vadd.f32 %v776, %v779
    %vm781 = vweird.f32 %v670
    %vm782 = vweird.f32 %v776
    %vm783 = vmor %vm781, %vm782
    %v784 = vsel %vm783, %v776, %v780
    %v785 = vand.u32 2147483647, %v670
    %vm786 = vcmp.eq.f32.partialorder %v785, 8.507059e+37
    %v787 = vand.u32 %v670, 2147483648
    %v788 = vor.u32 1.1754944e-38, %v787
    %v789 = vsel %vm786, %v788, %v784
    %v790 = vmul.f32 %v646, %v789
    %791 = vrot.lane.b32.xlu0 %v318, 64
    %v792 = vpop.permute.xlu0 %791
    %v795 = vsel %vm598, %v685, 0
    %797 = vmatpush.msra.mxu0 0.0
    %798 = vmatpush.msra.mxu0 0.0
    %799 = vmatpush.msra.mxu0 0.0
    %800 = vmatpush.msra.mxu0 0.0
    %801 = vmatpush.msra.mxu0 0.0
    %802 = vmatpush.msra.mxu0 0.0
    %803 = vmatpush.msra.mxu0 0.0
    %804 = vmatpush.msra.mxu0 0.0
    %805 = vmatpush.msra.mxu0 0.0
    %806 = vmatpush.msra.mxu0 0.0
    %807 = vmatpush.msra.mxu0 0.0
    %808 = vmatpush.msra.mxu0 0.0
    %809 = vmatpush.msra.mxu0 0.0
    %810 = vmatpush.msra.mxu0 0.0
    %811 = vmatpush.msra.mxu0 0.0
    %812 = vmatpush.msra.mxu0 %v792
    %813 = vmatmul.f32.gmra.mxu0 %v795
    %v814 = vpop.f32.mrf.mxu0
    %v815 = vadd.f32 0.0, %v814
    %816 = vdwg.mxu0
    %817 = vrot.lane.b32.xlu0 %v321, 64
    %v818 = vpop.permute.xlu0 %817
    %v821 = vsel %vm598, %v700, 0
    %823 = vmatpush.msra.mxu0 0.0
    %824 = vmatpush.msra.mxu0 0.0
    %825 = vmatpush.msra.mxu0 0.0
    %826 = vmatpush.msra.mxu0 0.0
    %827 = vmatpush.msra.mxu0 0.0
    %828 = vmatpush.msra.mxu0 0.0
    %829 = vmatpush.msra.mxu0 0.0
    %830 = vmatpush.msra.mxu0 0.0
    %831 = vmatpush.msra.mxu0 0.0
    %832 = vmatpush.msra.mxu0 0.0
    %833 = vmatpush.msra.mxu0 0.0
    %834 = vmatpush.msra.mxu0 0.0
    %835 = vmatpush.msra.mxu0 0.0
    %836 = vmatpush.msra.mxu0 0.0
    %837 = vmatpush.msra.mxu0 0.0
    %838 = vmatpush.msra.mxu0 %v818
    %839 = vmatmul.f32.gmra.mxu0 %v821
    %v840 = vpop.f32.mrf.mxu0
    %v841 = vadd.f32 0.0, %v840
    %842 = vdwg.mxu0
    %843 = vrot.lane.b32.xlu0 %v324, 64
    %v844 = vpop.permute.xlu0 %843
    %v847 = vsel %vm598, %v715, 0
    %849 = vmatpush.msra.mxu0 0.0
    %850 = vmatpush.msra.mxu0 0.0
    %851 = vmatpush.msra.mxu0 0.0
    %852 = vmatpush.msra.mxu0 0.0
    %853 = vmatpush.msra.mxu0 0.0
    %854 = vmatpush.msra.mxu0 0.0
    %855 = vmatpush.msra.mxu0 0.0
    %856 = vmatpush.msra.mxu0 0.0
    %857 = vmatpush.msra.mxu0 0.0
    %858 = vmatpush.msra.mxu0 0.0
    %859 = vmatpush.msra.mxu0 0.0
    %860 = vmatpush.msra.mxu0 0.0
    %861 = vmatpush.msra.mxu0 0.0
    %862 = vmatpush.msra.mxu0 0.0
    %863 = vmatpush.msra.mxu0 0.0
    %864 = vmatpush.msra.mxu0 %v844
    %865 = vmatmul.f32.gmra.mxu0 %v847
    %v866 = vpop.f32.mrf.mxu0
    %v867 = vadd.f32 0.0, %v866
    %868 = vdwg.mxu0
    %869 = vrot.lane.b32.xlu0 %v327, 64
    %v870 = vpop.permute.xlu0 %869
    %v873 = vsel %vm598, %v730, 0
    %875 = vmatpush.msra.mxu0 0.0
    %876 = vmatpush.msra.mxu0 0.0
    %877 = vmatpush.msra.mxu0 0.0
    %878 = vmatpush.msra.mxu0 0.0
    %879 = vmatpush.msra.mxu0 0.0
    %880 = vmatpush.msra.mxu0 0.0
    %881 = vmatpush.msra.mxu0 0.0
    %882 = vmatpush.msra.mxu0 0.0
    %883 = vmatpush.msra.mxu0 0.0
    %884 = vmatpush.msra.mxu0 0.0
    %885 = vmatpush.msra.mxu0 0.0
    %886 = vmatpush.msra.mxu0 0.0
    %887 = vmatpush.msra.mxu0 0.0
    %888 = vmatpush.msra.mxu0 0.0
    %889 = vmatpush.msra.mxu0 0.0
    %890 = vmatpush.msra.mxu0 %v870
    %891 = vmatmul.f32.gmra.mxu0 %v873
    %v892 = vpop.f32.mrf.mxu0
    %v893 = vadd.f32 0.0, %v892
    %894 = vdwg.mxu0
    %895 = vrot.lane.b32.xlu0 %v330, 64
    %v896 = vpop.permute.xlu0 %895
    %v899 = vsel %vm598, %v745, 0
    %901 = vmatpush.msra.mxu0 0.0
    %902 = vmatpush.msra.mxu0 0.0
    %903 = vmatpush.msra.mxu0 0.0
    %904 = vmatpush.msra.mxu0 0.0
    %905 = vmatpush.msra.mxu0 0.0
    %906 = vmatpush.msra.mxu0 0.0
    %907 = vmatpush.msra.mxu0 0.0
    %908 = vmatpush.msra.mxu0 0.0
    %909 = vmatpush.msra.mxu0 0.0
    %910 = vmatpush.msra.mxu0 0.0
    %911 = vmatpush.msra.mxu0 0.0
    %912 = vmatpush.msra.mxu0 0.0
    %913 = vmatpush.msra.mxu0 0.0
    %914 = vmatpush.msra.mxu0 0.0
    %915 = vmatpush.msra.mxu0 0.0
    %916 = vmatpush.msra.mxu0 %v896
    %917 = vmatmul.f32.gmra.mxu0 %v899
    %v918 = vpop.f32.mrf.mxu0
    %v919 = vadd.f32 0.0, %v918
    %920 = vdwg.mxu0
    %921 = vrot.lane.b32.xlu0 %v333, 64
    %v922 = vpop.permute.xlu0 %921
    %v925 = vsel %vm598, %v760, 0
    %927 = vmatpush.msra.mxu0 0.0
    %928 = vmatpush.msra.mxu0 0.0
    %929 = vmatpush.msra.mxu0 0.0
    %930 = vmatpush.msra.mxu0 0.0
    %931 = vmatpush.msra.mxu0 0.0
    %932 = vmatpush.msra.mxu0 0.0
    %933 = vmatpush.msra.mxu0 0.0
    %934 = vmatpush.msra.mxu0 0.0
    %935 = vmatpush.msra.mxu0 0.0
    %936 = vmatpush.msra.mxu0 0.0
    %937 = vmatpush.msra.mxu0 0.0
    %938 = vmatpush.msra.mxu0 0.0
    %939 = vmatpush.msra.mxu0 0.0
    %940 = vmatpush.msra.mxu0 0.0
    %941 = vmatpush.msra.mxu0 0.0
    %942 = vmatpush.msra.mxu0 %v922
    %943 = vmatmul.f32.gmra.mxu0 %v925
    %v944 = vpop.f32.mrf.mxu0
    %v945 = vadd.f32 0.0, %v944
    %946 = vdwg.mxu0
    %947 = vrot.lane.b32.xlu0 %v336, 64
    %v948 = vpop.permute.xlu0 %947
    %v951 = vsel %vm598, %v775, 0
    %953 = vmatpush.msra.mxu0 0.0
    %954 = vmatpush.msra.mxu0 0.0
    %955 = vmatpush.msra.mxu0 0.0
    %956 = vmatpush.msra.mxu0 0.0
    %957 = vmatpush.msra.mxu0 0.0
    %958 = vmatpush.msra.mxu0 0.0
    %959 = vmatpush.msra.mxu0 0.0
    %960 = vmatpush.msra.mxu0 0.0
    %961 = vmatpush.msra.mxu0 0.0
    %962 = vmatpush.msra.mxu0 0.0
    %963 = vmatpush.msra.mxu0 0.0
    %964 = vmatpush.msra.mxu0 0.0
    %965 = vmatpush.msra.mxu0 0.0
    %966 = vmatpush.msra.mxu0 0.0
    %967 = vmatpush.msra.mxu0 0.0
    %968 = vmatpush.msra.mxu0 %v948
    %969 = vmatmul.f32.gmra.mxu0 %v951
    %v970 = vpop.f32.mrf.mxu0
    %v971 = vadd.f32 0.0, %v970
    %972 = vdwg.mxu0
    %973 = vrot.lane.b32.xlu0 %v339, 64
    %v974 = vpop.permute.xlu0 %973
    %v977 = vsel %vm598, %v790, 0
    %979 = vmatpush.msra.mxu0 0.0
    %980 = vmatpush.msra.mxu0 0.0
    %981 = vmatpush.msra.mxu0 0.0
    %982 = vmatpush.msra.mxu0 0.0
    %983 = vmatpush.msra.mxu0 0.0
    %984 = vmatpush.msra.mxu0 0.0
    %985 = vmatpush.msra.mxu0 0.0
    %986 = vmatpush.msra.mxu0 0.0
    %987 = vmatpush.msra.mxu0 0.0
    %988 = vmatpush.msra.mxu0 0.0
    %989 = vmatpush.msra.mxu0 0.0
    %990 = vmatpush.msra.mxu0 0.0
    %991 = vmatpush.msra.mxu0 0.0
    %992 = vmatpush.msra.mxu0 0.0
    %993 = vmatpush.msra.mxu0 0.0
    %994 = vmatpush.msra.mxu0 %v974
    %995 = vmatmul.f32.gmra.mxu0 %v977
    %v996 = vpop.f32.mrf.mxu0
    %v997 = vadd.f32 0.0, %v996
    %998 = vdwg.mxu0
    %999 = vrot.lane.b32.xlu0 %v318, 112
    %v1000 = vpop.permute.xlu0 %999
    %1001 = vrot.lane.b32.xlu0 %v318, 80
    %v1002 = vpop.permute.xlu0 %1001
    %v1003 = vsel %vm344, %v1000, 0
    %v1005 = vsel %vm344, %v1002, 0
    %1007 = vmatpush.xpose.msra.mxu0 0.0
    %1008 = vmatpush.xpose.msra.mxu0 0.0
    %1009 = vmatpush.xpose.msra.mxu0 0.0
    %1010 = vmatpush.xpose.msra.mxu0 0.0
    %1011 = vmatpush.xpose.msra.mxu0 0.0
    %1012 = vmatpush.xpose.msra.mxu0 0.0
    %1013 = vmatpush.xpose.msra.mxu0 0.0
    %1014 = vmatpush.xpose.msra.mxu0 0.0
    %1015 = vmatpush.xpose.msra.mxu0 0.0
    %1016 = vmatpush.xpose.msra.mxu0 0.0
    %1017 = vmatpush.xpose.msra.mxu0 0.0
    %1018 = vmatpush.xpose.msra.mxu0 0.0
    %1019 = vmatpush.xpose.msra.mxu0 0.0
    %1020 = vmatpush.xpose.msra.mxu0 0.0
    %1021 = vmatpush.xpose.msra.mxu0 0.0
    %1022 = vmatpush.xpose.msra.mxu0 %v1005
    %1023 = vmatmul.f32.gmra.mxu0 %v1003
    %v1024 = vpop.f32.mrf.mxu0
    %v1025 = vadd.f32 0.0, %v1024
    %1026 = vdwg.mxu0
    %1027 = vrot.lane.b32.xlu0 %v321, 112
    %v1028 = vpop.permute.xlu0 %1027
    %1029 = vrot.lane.b32.xlu0 %v321, 80
    %v1030 = vpop.permute.xlu0 %1029
    %v1031 = vsel %vm344, %v1028, 0
    %v1033 = vsel %vm344, %v1030, 0
    %1035 = vmatpush.xpose.msra.mxu0 0.0
    %1036 = vmatpush.xpose.msra.mxu0 0.0
    %1037 = vmatpush.xpose.msra.mxu0 0.0
    %1038 = vmatpush.xpose.msra.mxu0 0.0
    %1039 = vmatpush.xpose.msra.mxu0 0.0
    %1040 = vmatpush.xpose.msra.mxu0 0.0
    %1041 = vmatpush.xpose.msra.mxu0 0.0
    %1042 = vmatpush.xpose.msra.mxu0 0.0
    %1043 = vmatpush.xpose.msra.mxu0 0.0
    %1044 = vmatpush.xpose.msra.mxu0 0.0
    %1045 = vmatpush.xpose.msra.mxu0 0.0
    %1046 = vmatpush.xpose.msra.mxu0 0.0
    %1047 = vmatpush.xpose.msra.mxu0 0.0
    %1048 = vmatpush.xpose.msra.mxu0 0.0
    %1049 = vmatpush.xpose.msra.mxu0 0.0
    %1050 = vmatpush.xpose.msra.mxu0 %v1033
    %1051 = vmatmul.f32.gmra.mxu0 %v1031
    %v1052 = vpop.f32.mrf.mxu0
    %v1053 = vadd.f32 0.0, %v1052
    %1054 = vdwg.mxu0
    %1055 = vrot.lane.b32.xlu0 %v324, 112
    %v1056 = vpop.permute.xlu0 %1055
    %1057 = vrot.lane.b32.xlu0 %v324, 80
    %v1058 = vpop.permute.xlu0 %1057
    %v1059 = vsel %vm344, %v1056, 0
    %v1061 = vsel %vm344, %v1058, 0
    %1063 = vmatpush.xpose.msra.mxu0 0.0
    %1064 = vmatpush.xpose.msra.mxu0 0.0
    %1065 = vmatpush.xpose.msra.mxu0 0.0
    %1066 = vmatpush.xpose.msra.mxu0 0.0
    %1067 = vmatpush.xpose.msra.mxu0 0.0
    %1068 = vmatpush.xpose.msra.mxu0 0.0
    %1069 = vmatpush.xpose.msra.mxu0 0.0
    %1070 = vmatpush.xpose.msra.mxu0 0.0
    %1071 = vmatpush.xpose.msra.mxu0 0.0
    %1072 = vmatpush.xpose.msra.mxu0 0.0
    %1073 = vmatpush.xpose.msra.mxu0 0.0
    %1074 = vmatpush.xpose.msra.mxu0 0.0
    %1075 = vmatpush.xpose.msra.mxu0 0.0
    %1076 = vmatpush.xpose.msra.mxu0 0.0
    %1077 = vmatpush.xpose.msra.mxu0 0.0
    %1078 = vmatpush.xpose.msra.mxu0 %v1061
    %1079 = vmatmul.f32.gmra.mxu0 %v1059
    %v1080 = vpop.f32.mrf.mxu0
    %v1081 = vadd.f32 0.0, %v1080
    %1082 = vdwg.mxu0
    %1083 = vrot.lane.b32.xlu0 %v327, 112
    %v1084 = vpop.permute.xlu0 %1083
    %1085 = vrot.lane.b32.xlu0 %v327, 80
    %v1086 = vpop.permute.xlu0 %1085
    %v1087 = vsel %vm344, %v1084, 0
    %v1089 = vsel %vm344, %v1086, 0
    %1091 = vmatpush.xpose.msra.mxu0 0.0
    %1092 = vmatpush.xpose.msra.mxu0 0.0
    %1093 = vmatpush.xpose.msra.mxu0 0.0
    %1094 = vmatpush.xpose.msra.mxu0 0.0
    %1095 = vmatpush.xpose.msra.mxu0 0.0
    %1096 = vmatpush.xpose.msra.mxu0 0.0
    %1097 = vmatpush.xpose.msra.mxu0 0.0
    %1098 = vmatpush.xpose.msra.mxu0 0.0
    %1099 = vmatpush.xpose.msra.mxu0 0.0
    %1100 = vmatpush.xpose.msra.mxu0 0.0
    %1101 = vmatpush.xpose.msra.mxu0 0.0
    %1102 = vmatpush.xpose.msra.mxu0 0.0
    %1103 = vmatpush.xpose.msra.mxu0 0.0
    %1104 = vmatpush.xpose.msra.mxu0 0.0
    %1105 = vmatpush.xpose.msra.mxu0 0.0
    %1106 = vmatpush.xpose.msra.mxu0 %v1089
    %1107 = vmatmul.f32.gmra.mxu0 %v1087
    %v1108 = vpop.f32.mrf.mxu0
    %v1109 = vadd.f32 0.0, %v1108
    %1110 = vdwg.mxu0
    %1111 = vrot.lane.b32.xlu0 %v330, 112
    %v1112 = vpop.permute.xlu0 %1111
    %1113 = vrot.lane.b32.xlu0 %v330, 80
    %v1114 = vpop.permute.xlu0 %1113
    %v1115 = vsel %vm344, %v1112, 0
    %v1117 = vsel %vm344, %v1114, 0
    %1119 = vmatpush.xpose.msra.mxu0 0.0
    %1120 = vmatpush.xpose.msra.mxu0 0.0
    %1121 = vmatpush.xpose.msra.mxu0 0.0
    %1122 = vmatpush.xpose.msra.mxu0 0.0
    %1123 = vmatpush.xpose.msra.mxu0 0.0
    %1124 = vmatpush.xpose.msra.mxu0 0.0
    %1125 = vmatpush.xpose.msra.mxu0 0.0
    %1126 = vmatpush.xpose.msra.mxu0 0.0
    %1127 = vmatpush.xpose.msra.mxu0 0.0
    %1128 = vmatpush.xpose.msra.mxu0 0.0
    %1129 = vmatpush.xpose.msra.mxu0 0.0
    %1130 = vmatpush.xpose.msra.mxu0 0.0
    %1131 = vmatpush.xpose.msra.mxu0 0.0
    %1132 = vmatpush.xpose.msra.mxu0 0.0
    %1133 = vmatpush.xpose.msra.mxu0 0.0
    %1134 = vmatpush.xpose.msra.mxu0 %v1117
    %1135 = vmatmul.f32.gmra.mxu0 %v1115
    %v1136 = vpop.f32.mrf.mxu0
    %v1137 = vadd.f32 0.0, %v1136
    %1138 = vdwg.mxu0
    %1139 = vrot.lane.b32.xlu0 %v333, 112
    %v1140 = vpop.permute.xlu0 %1139
    %1141 = vrot.lane.b32.xlu0 %v333, 80
    %v1142 = vpop.permute.xlu0 %1141
    %v1143 = vsel %vm344, %v1140, 0
    %v1145 = vsel %vm344, %v1142, 0
    %1147 = vmatpush.xpose.msra.mxu0 0.0
    %1148 = vmatpush.xpose.msra.mxu0 0.0
    %1149 = vmatpush.xpose.msra.mxu0 0.0
    %1150 = vmatpush.xpose.msra.mxu0 0.0
    %1151 = vmatpush.xpose.msra.mxu0 0.0
    %1152 = vmatpush.xpose.msra.mxu0 0.0
    %1153 = vmatpush.xpose.msra.mxu0 0.0
    %1154 = vmatpush.xpose.msra.mxu0 0.0
    %1155 = vmatpush.xpose.msra.mxu0 0.0
    %1156 = vmatpush.xpose.msra.mxu0 0.0
    %1157 = vmatpush.xpose.msra.mxu0 0.0
    %1158 = vmatpush.xpose.msra.mxu0 0.0
    %1159 = vmatpush.xpose.msra.mxu0 0.0
    %1160 = vmatpush.xpose.msra.mxu0 0.0
    %1161 = vmatpush.xpose.msra.mxu0 0.0
    %1162 = vmatpush.xpose.msra.mxu0 %v1145
    %1163 = vmatmul.f32.gmra.mxu0 %v1143
    %v1164 = vpop.f32.mrf.mxu0
    %v1165 = vadd.f32 0.0, %v1164
    %1166 = vdwg.mxu0
    %1167 = vrot.lane.b32.xlu0 %v336, 112
    %v1168 = vpop.permute.xlu0 %1167
    %1169 = vrot.lane.b32.xlu0 %v336, 80
    %v1170 = vpop.permute.xlu0 %1169
    %v1171 = vsel %vm344, %v1168, 0
    %v1173 = vsel %vm344, %v1170, 0
    %1175 = vmatpush.xpose.msra.mxu0 0.0
    %1176 = vmatpush.xpose.msra.mxu0 0.0
    %1177 = vmatpush.xpose.msra.mxu0 0.0
    %1178 = vmatpush.xpose.msra.mxu0 0.0
    %1179 = vmatpush.xpose.msra.mxu0 0.0
    %1180 = vmatpush.xpose.msra.mxu0 0.0
    %1181 = vmatpush.xpose.msra.mxu0 0.0
    %1182 = vmatpush.xpose.msra.mxu0 0.0
    %1183 = vmatpush.xpose.msra.mxu0 0.0
    %1184 = vmatpush.xpose.msra.mxu0 0.0
    %1185 = vmatpush.xpose.msra.mxu0 0.0
    %1186 = vmatpush.xpose.msra.mxu0 0.0
    %1187 = vmatpush.xpose.msra.mxu0 0.0
    %1188 = vmatpush.xpose.msra.mxu0 0.0
    %1189 = vmatpush.xpose.msra.mxu0 0.0
    %1190 = vmatpush.xpose.msra.mxu0 %v1173
    %1191 = vmatmul.f32.gmra.mxu0 %v1171
    %v1192 = vpop.f32.mrf.mxu0
    %v1193 = vadd.f32 0.0, %v1192
    %1194 = vdwg.mxu0
    %1195 = vrot.lane.b32.xlu0 %v339, 112
    %v1196 = vpop.permute.xlu0 %1195
    %1197 = vrot.lane.b32.xlu0 %v339, 80
    %v1198 = vpop.permute.xlu0 %1197
    %v1199 = vsel %vm344, %v1196, 0
    %v1201 = vsel %vm344, %v1198, 0
    %1203 = vmatpush.xpose.msra.mxu0 0.0
    %1204 = vmatpush.xpose.msra.mxu0 0.0
    %1205 = vmatpush.xpose.msra.mxu0 0.0
    %1206 = vmatpush.xpose.msra.mxu0 0.0
    %1207 = vmatpush.xpose.msra.mxu0 0.0
    %1208 = vmatpush.xpose.msra.mxu0 0.0
    %1209 = vmatpush.xpose.msra.mxu0 0.0
    %1210 = vmatpush.xpose.msra.mxu0 0.0
    %1211 = vmatpush.xpose.msra.mxu0 0.0
    %1212 = vmatpush.xpose.msra.mxu0 0.0
    %1213 = vmatpush.xpose.msra.mxu0 0.0
    %1214 = vmatpush.xpose.msra.mxu0 0.0
    %1215 = vmatpush.xpose.msra.mxu0 0.0
    %1216 = vmatpush.xpose.msra.mxu0 0.0
    %1217 = vmatpush.xpose.msra.mxu0 0.0
    %1218 = vmatpush.xpose.msra.mxu0 %v1201
    %1219 = vmatmul.f32.gmra.mxu0 %v1199
    %v1220 = vpop.f32.mrf.mxu0
    %v1221 = vadd.f32 0.0, %v1220
    %1222 = vdwg.mxu0
    %v1223 = vmul.f32 %v1025, 0.25
    %v1224 = vmul.f32 %v1053, 0.25
    %v1225 = vmul.f32 %v1081, 0.25
    %v1226 = vmul.f32 %v1109, 0.25
    %v1227 = vmul.f32 %v1137, 0.25
    %v1228 = vmul.f32 %v1165, 0.25
    %v1229 = vmul.f32 %v1193, 0.25
    %v1230 = vmul.f32 %v1221, 0.25
    %v1231 = vadd.f32 %v1223, %v574
    %v1232 = vadd.f32 %v1224, %v575
    %v1233 = vadd.f32 %v1225, %v576
    %v1234 = vadd.f32 %v1226, %v577
    %v1235 = vadd.f32 %v1227, %v578
    %v1236 = vadd.f32 %v1228, %v579
    %v1237 = vadd.f32 %v1229, %v580
    %v1238 = vadd.f32 %v1230, %v581
    %v1239 = vsel %vm598, %v1231, -inf
    %1240 = vmax.xlane.f32.xlu0 %v1239
    %v1241 = vpop.xlane.xlu0 %1240
    %v1242 = vsel %vm598, %v1232, -inf
    %1243 = vmax.xlane.f32.xlu0 %v1242
    %v1244 = vpop.xlane.xlu0 %1243
    %v1245 = vsel %vm598, %v1233, -inf
    %1246 = vmax.xlane.f32.xlu0 %v1245
    %v1247 = vpop.xlane.xlu0 %1246
    %v1248 = vsel %vm598, %v1234, -inf
    %1249 = vmax.xlane.f32.xlu0 %v1248
    %v1250 = vpop.xlane.xlu0 %1249
    %v1251 = vsel %vm598, %v1235, -inf
    %1252 = vmax.xlane.f32.xlu0 %v1251
    %v1253 = vpop.xlane.xlu0 %1252
    %v1254 = vsel %vm598, %v1236, -inf
    %1255 = vmax.xlane.f32.xlu0 %v1254
    %v1256 = vpop.xlane.xlu0 %1255
    %v1257 = vsel %vm598, %v1237, -inf
    %1258 = vmax.xlane.f32.xlu0 %v1257
    %v1259 = vpop.xlane.xlu0 %1258
    %v1260 = vsel %vm598, %v1238, -inf
    %1261 = vmax.xlane.f32.xlu0 %v1260
    %v1262 = vpop.xlane.xlu0 %1261
    %v1263 = vsub.f32 %v1231, %v1241
    %v1264 = vsub.f32 %v1232, %v1244
    %v1265 = vsub.f32 %v1233, %v1247
    %v1266 = vsub.f32 %v1234, %v1250
    %v1267 = vsub.f32 %v1235, %v1253
    %v1268 = vsub.f32 %v1236, %v1256
    %v1269 = vsub.f32 %v1237, %v1259
    %v1270 = vsub.f32 %v1238, %v1262
    %v1271 = vmul.f32 %v1263, 1.442695
    %v1272 = vpow.pop %v1271
    %v1273 = vmul.f32 %v1264, 1.442695
    %v1274 = vpow.pop %v1273
    %v1275 = vmul.f32 %v1265, 1.442695
    %v1276 = vpow.pop %v1275
    %v1277 = vmul.f32 %v1266, 1.442695
    %v1278 = vpow.pop %v1277
    %v1279 = vmul.f32 %v1267, 1.442695
    %v1280 = vpow.pop %v1279
    %v1281 = vmul.f32 %v1268, 1.442695
    %v1282 = vpow.pop %v1281
    %v1283 = vmul.f32 %v1269, 1.442695
    %v1284 = vpow.pop %v1283
    %v1285 = vmul.f32 %v1270, 1.442695
    %v1286 = vpow.pop %v1285
    %v1287 = vsel %vm598, %v1272, 0.0
    %1288 = vadd.xlane.f32.xlu0 %v1287
    %v1289 = vpop.xlane.xlu0 %1288
    %v1290 = vsel %vm598, %v1274, 0.0
    %1291 = vadd.xlane.f32.xlu0 %v1290
    %v1292 = vpop.xlane.xlu0 %1291
    %v1293 = vsel %vm598, %v1276, 0.0
    %1294 = vadd.xlane.f32.xlu0 %v1293
    %v1295 = vpop.xlane.xlu0 %1294
    %v1296 = vsel %vm598, %v1278, 0.0
    %1297 = vadd.xlane.f32.xlu0 %v1296
    %v1298 = vpop.xlane.xlu0 %1297
    %v1299 = vsel %vm598, %v1280, 0.0
    %1300 = vadd.xlane.f32.xlu0 %v1299
    %v1301 = vpop.xlane.xlu0 %1300
    %v1302 = vsel %vm598, %v1282, 0.0
    %1303 = vadd.xlane.f32.xlu0 %v1302
    %v1304 = vpop.xlane.xlu0 %1303
    %v1305 = vsel %vm598, %v1284, 0.0
    %1306 = vadd.xlane.f32.xlu0 %v1305
    %v1307 = vpop.xlane.xlu0 %1306
    %v1308 = vsel %vm598, %v1286, 0.0
    %1309 = vadd.xlane.f32.xlu0 %v1308
    %v1310 = vpop.xlane.xlu0 %1309
    %v1311 = vrcp.pop %v1289
    %v1312 = vmul.f32 %v1289, %v1311
    %v1313 = vsub.f32 1.0, %v1312
    %v1314 = vmul.f32 %v1311, %v1313
    %v1315 = vadd.f32 %v1311, %v1314
    %vm1316 = vweird.f32 %v1289
    %vm1317 = vweird.f32 %v1311
    %vm1318 = vmor %vm1316, %vm1317
    %v1319 = vsel %vm1318, %v1311, %v1315
    %v1320 = vand.u32 2147483647, %v1289
    %vm1321 = vcmp.eq.f32.partialorder %v1320, 8.507059e+37
    %v1322 = vand.u32 %v1289, 2147483648
    %v1323 = vor.u32 1.1754944e-38, %v1322
    %v1324 = vsel %vm1321, %v1323, %v1319
    %v1325 = vmul.f32 %v1272, %v1324
    %v1326 = vrcp.pop %v1292
    %v1327 = vmul.f32 %v1292, %v1326
    %v1328 = vsub.f32 1.0, %v1327
    %v1329 = vmul.f32 %v1326, %v1328
    %v1330 = vadd.f32 %v1326, %v1329
    %vm1331 = vweird.f32 %v1292
    %vm1332 = vweird.f32 %v1326
    %vm1333 = vmor %vm1331, %vm1332
    %v1334 = vsel %vm1333, %v1326, %v1330
    %v1335 = vand.u32 2147483647, %v1292
    %vm1336 = vcmp.eq.f32.partialorder %v1335, 8.507059e+37
    %v1337 = vand.u32 %v1292, 2147483648
    %v1338 = vor.u32 1.1754944e-38, %v1337
    %v1339 = vsel %vm1336, %v1338, %v1334
    %v1340 = vmul.f32 %v1274, %v1339
    %v1341 = vrcp.pop %v1295
    %v1342 = vmul.f32 %v1295, %v1341
    %v1343 = vsub.f32 1.0, %v1342
    %v1344 = vmul.f32 %v1341, %v1343
    %v1345 = vadd.f32 %v1341, %v1344
    %vm1346 = vweird.f32 %v1295
    %vm1347 = vweird.f32 %v1341
    %vm1348 = vmor %vm1346, %vm1347
    %v1349 = vsel %vm1348, %v1341, %v1345
    %v1350 = vand.u32 2147483647, %v1295
    %vm1351 = vcmp.eq.f32.partialorder %v1350, 8.507059e+37
    %v1352 = vand.u32 %v1295, 2147483648
    %v1353 = vor.u32 1.1754944e-38, %v1352
    %v1354 = vsel %vm1351, %v1353, %v1349
    %v1355 = vmul.f32 %v1276, %v1354
    %v1356 = vrcp.pop %v1298
    %v1357 = vmul.f32 %v1298, %v1356
    %v1358 = vsub.f32 1.0, %v1357
    %v1359 = vmul.f32 %v1356, %v1358
    %v1360 = vadd.f32 %v1356, %v1359
    %vm1361 = vweird.f32 %v1298
    %vm1362 = vweird.f32 %v1356
    %vm1363 = vmor %vm1361, %vm1362
    %v1364 = vsel %vm1363, %v1356, %v1360
    %v1365 = vand.u32 2147483647, %v1298
    %vm1366 = vcmp.eq.f32.partialorder %v1365, 8.507059e+37
    %v1367 = vand.u32 %v1298, 2147483648
    %v1368 = vor.u32 1.1754944e-38, %v1367
    %v1369 = vsel %vm1366, %v1368, %v1364
    %v1370 = vmul.f32 %v1278, %v1369
    %v1371 = vrcp.pop %v1301
    %v1372 = vmul.f32 %v1301, %v1371
    %v1373 = vsub.f32 1.0, %v1372
    %v1374 = vmul.f32 %v1371, %v1373
    %v1375 = vadd.f32 %v1371, %v1374
    %vm1376 = vweird.f32 %v1301
    %vm1377 = vweird.f32 %v1371
    %vm1378 = vmor %vm1376, %vm1377
    %v1379 = vsel %vm1378, %v1371, %v1375
    %v1380 = vand.u32 2147483647, %v1301
    %vm1381 = vcmp.eq.f32.partialorder %v1380, 8.507059e+37
    %v1382 = vand.u32 %v1301, 2147483648
    %v1383 = vor.u32 1.1754944e-38, %v1382
    %v1384 = vsel %vm1381, %v1383, %v1379
    %v1385 = vmul.f32 %v1280, %v1384
    %v1386 = vrcp.pop %v1304
    %v1387 = vmul.f32 %v1304, %v1386
    %v1388 = vsub.f32 1.0, %v1387
    %v1389 = vmul.f32 %v1386, %v1388
    %v1390 = vadd.f32 %v1386, %v1389
    %vm1391 = vweird.f32 %v1304
    %vm1392 = vweird.f32 %v1386
    %vm1393 = vmor %vm1391, %vm1392
    %v1394 = vsel %vm1393, %v1386, %v1390
    %v1395 = vand.u32 2147483647, %v1304
    %vm1396 = vcmp.eq.f32.partialorder %v1395, 8.507059e+37
    %v1397 = vand.u32 %v1304, 2147483648
    %v1398 = vor.u32 1.1754944e-38, %v1397
    %v1399 = vsel %vm1396, %v1398, %v1394
    %v1400 = vmul.f32 %v1282, %v1399
    %v1401 = vrcp.pop %v1307
    %v1402 = vmul.f32 %v1307, %v1401
    %v1403 = vsub.f32 1.0, %v1402
    %v1404 = vmul.f32 %v1401, %v1403
    %v1405 = vadd.f32 %v1401, %v1404
    %vm1406 = vweird.f32 %v1307
    %vm1407 = vweird.f32 %v1401
    %vm1408 = vmor %vm1406, %vm1407
    %v1409 = vsel %vm1408, %v1401, %v1405
    %v1410 = vand.u32 2147483647, %v1307
    %vm1411 = vcmp.eq.f32.partialorder %v1410, 8.507059e+37
    %v1412 = vand.u32 %v1307, 2147483648
    %v1413 = vor.u32 1.1754944e-38, %v1412
    %v1414 = vsel %vm1411, %v1413, %v1409
    %v1415 = vmul.f32 %v1284, %v1414
    %v1416 = vrcp.pop %v1310
    %v1417 = vmul.f32 %v1310, %v1416
    %v1418 = vsub.f32 1.0, %v1417
    %v1419 = vmul.f32 %v1416, %v1418
    %v1420 = vadd.f32 %v1416, %v1419
    %vm1421 = vweird.f32 %v1310
    %vm1422 = vweird.f32 %v1416
    %vm1423 = vmor %vm1421, %vm1422
    %v1424 = vsel %vm1423, %v1416, %v1420
    %v1425 = vand.u32 2147483647, %v1310
    %vm1426 = vcmp.eq.f32.partialorder %v1425, 8.507059e+37
    %v1427 = vand.u32 %v1310, 2147483648
    %v1428 = vor.u32 1.1754944e-38, %v1427
    %v1429 = vsel %vm1426, %v1428, %v1424
    %v1430 = vmul.f32 %v1286, %v1429
    %1431 = vrot.lane.b32.xlu0 %v318, 48
    %v1432 = vpop.permute.xlu0 %1431
    %v1435 = vsel %vm598, %v1325, 0
    %1437 = vmatpush.msra.mxu0 0.0
    %1438 = vmatpush.msra.mxu0 0.0
    %1439 = vmatpush.msra.mxu0 0.0
    %1440 = vmatpush.msra.mxu0 0.0
    %1441 = vmatpush.msra.mxu0 0.0
    %1442 = vmatpush.msra.mxu0 0.0
    %1443 = vmatpush.msra.mxu0 0.0
    %1444 = vmatpush.msra.mxu0 0.0
    %1445 = vmatpush.msra.mxu0 0.0
    %1446 = vmatpush.msra.mxu0 0.0
    %1447 = vmatpush.msra.mxu0 0.0
    %1448 = vmatpush.msra.mxu0 0.0
    %1449 = vmatpush.msra.mxu0 0.0
    %1450 = vmatpush.msra.mxu0 0.0
    %1451 = vmatpush.msra.mxu0 0.0
    %1452 = vmatpush.msra.mxu0 %v1432
    %1453 = vmatmul.f32.gmra.mxu0 %v1435
    %v1454 = vpop.f32.mrf.mxu0
    %v1455 = vadd.f32 0.0, %v1454
    %1456 = vdwg.mxu0
    %1457 = vrot.lane.b32.xlu0 %v321, 48
    %v1458 = vpop.permute.xlu0 %1457
    %v1461 = vsel %vm598, %v1340, 0
    %1463 = vmatpush.msra.mxu0 0.0
    %1464 = vmatpush.msra.mxu0 0.0
    %1465 = vmatpush.msra.mxu0 0.0
    %1466 = vmatpush.msra.mxu0 0.0
    %1467 = vmatpush.msra.mxu0 0.0
    %1468 = vmatpush.msra.mxu0 0.0
    %1469 = vmatpush.msra.mxu0 0.0
    %1470 = vmatpush.msra.mxu0 0.0
    %1471 = vmatpush.msra.mxu0 0.0
    %1472 = vmatpush.msra.mxu0 0.0
    %1473 = vmatpush.msra.mxu0 0.0
    %1474 = vmatpush.msra.mxu0 0.0
    %1475 = vmatpush.msra.mxu0 0.0
    %1476 = vmatpush.msra.mxu0 0.0
    %1477 = vmatpush.msra.mxu0 0.0
    %1478 = vmatpush.msra.mxu0 %v1458
    %1479 = vmatmul.f32.gmra.mxu0 %v1461
    %v1480 = vpop.f32.mrf.mxu0
    %v1481 = vadd.f32 0.0, %v1480
    %1482 = vdwg.mxu0
    %1483 = vrot.lane.b32.xlu0 %v324, 48
    %v1484 = vpop.permute.xlu0 %1483
    %v1487 = vsel %vm598, %v1355, 0
    %1489 = vmatpush.msra.mxu0 0.0
    %1490 = vmatpush.msra.mxu0 0.0
    %1491 = vmatpush.msra.mxu0 0.0
    %1492 = vmatpush.msra.mxu0 0.0
    %1493 = vmatpush.msra.mxu0 0.0
    %1494 = vmatpush.msra.mxu0 0.0
    %1495 = vmatpush.msra.mxu0 0.0
    %1496 = vmatpush.msra.mxu0 0.0
    %1497 = vmatpush.msra.mxu0 0.0
    %1498 = vmatpush.msra.mxu0 0.0
    %1499 = vmatpush.msra.mxu0 0.0
    %1500 = vmatpush.msra.mxu0 0.0
    %1501 = vmatpush.msra.mxu0 0.0
    %1502 = vmatpush.msra.mxu0 0.0
    %1503 = vmatpush.msra.mxu0 0.0
    %1504 = vmatpush.msra.mxu0 %v1484
    %1505 = vmatmul.f32.gmra.mxu0 %v1487
    %v1506 = vpop.f32.mrf.mxu0
    %v1507 = vadd.f32 0.0, %v1506
    %1508 = vdwg.mxu0
    %1509 = vrot.lane.b32.xlu0 %v327, 48
    %v1510 = vpop.permute.xlu0 %1509
    %v1513 = vsel %vm598, %v1370, 0
    %1515 = vmatpush.msra.mxu0 0.0
    %1516 = vmatpush.msra.mxu0 0.0
    %1517 = vmatpush.msra.mxu0 0.0
    %1518 = vmatpush.msra.mxu0 0.0
    %1519 = vmatpush.msra.mxu0 0.0
    %1520 = vmatpush.msra.mxu0 0.0
    %1521 = vmatpush.msra.mxu0 0.0
    %1522 = vmatpush.msra.mxu0 0.0
    %1523 = vmatpush.msra.mxu0 0.0
    %1524 = vmatpush.msra.mxu0 0.0
    %1525 = vmatpush.msra.mxu0 0.0
    %1526 = vmatpush.msra.mxu0 0.0
    %1527 = vmatpush.msra.mxu0 0.0
    %1528 = vmatpush.msra.mxu0 0.0
    %1529 = vmatpush.msra.mxu0 0.0
    %1530 = vmatpush.msra.mxu0 %v1510
    %1531 = vmatmul.f32.gmra.mxu0 %v1513
    %v1532 = vpop.f32.mrf.mxu0
    %v1533 = vadd.f32 0.0, %v1532
    %1534 = vdwg.mxu0
    %1535 = vrot.lane.b32.xlu0 %v330, 48
    %v1536 = vpop.permute.xlu0 %1535
    %v1539 = vsel %vm598, %v1385, 0
    %1541 = vmatpush.msra.mxu0 0.0
    %1542 = vmatpush.msra.mxu0 0.0
    %1543 = vmatpush.msra.mxu0 0.0
    %1544 = vmatpush.msra.mxu0 0.0
    %1545 = vmatpush.msra.mxu0 0.0
    %1546 = vmatpush.msra.mxu0 0.0
    %1547 = vmatpush.msra.mxu0 0.0
    %1548 = vmatpush.msra.mxu0 0.0
    %1549 = vmatpush.msra.mxu0 0.0
    %1550 = vmatpush.msra.mxu0 0.0
    %1551 = vmatpush.msra.mxu0 0.0
    %1552 = vmatpush.msra.mxu0 0.0
    %1553 = vmatpush.msra.mxu0 0.0
    %1554 = vmatpush.msra.mxu0 0.0
    %1555 = vmatpush.msra.mxu0 0.0
    %1556 = vmatpush.msra.mxu0 %v1536
    %1557 = vmatmul.f32.gmra.mxu0 %v1539
    %v1558 = vpop.f32.mrf.mxu0
    %v1559 = vadd.f32 0.0, %v1558
    %1560 = vdwg.mxu0
    %1561 = vrot.lane.b32.xlu0 %v333, 48
    %v1562 = vpop.permute.xlu0 %1561
    %v1565 = vsel %vm598, %v1400, 0
    %1567 = vmatpush.msra.mxu0 0.0
    %1568 = vmatpush.msra.mxu0 0.0
    %1569 = vmatpush.msra.mxu0 0.0
    %1570 = vmatpush.msra.mxu0 0.0
    %1571 = vmatpush.msra.mxu0 0.0
    %1572 = vmatpush.msra.mxu0 0.0
    %1573 = vmatpush.msra.mxu0 0.0
    %1574 = vmatpush.msra.mxu0 0.0
    %1575 = vmatpush.msra.mxu0 0.0
    %1576 = vmatpush.msra.mxu0 0.0
    %1577 = vmatpush.msra.mxu0 0.0
    %1578 = vmatpush.msra.mxu0 0.0
    %1579 = vmatpush.msra.mxu0 0.0
    %1580 = vmatpush.msra.mxu0 0.0
    %1581 = vmatpush.msra.mxu0 0.0
    %1582 = vmatpush.msra.mxu0 %v1562
    %1583 = vmatmul.f32.gmra.mxu0 %v1565
    %v1584 = vpop.f32.mrf.mxu0
    %v1585 = vadd.f32 0.0, %v1584
    %1586 = vdwg.mxu0
    %1587 = vrot.lane.b32.xlu0 %v336, 48
    %v1588 = vpop.permute.xlu0 %1587
    %v1591 = vsel %vm598, %v1415, 0
    %1593 = vmatpush.msra.mxu0 0.0
    %1594 = vmatpush.msra.mxu0 0.0
    %1595 = vmatpush.msra.mxu0 0.0
    %1596 = vmatpush.msra.mxu0 0.0
    %1597 = vmatpush.msra.mxu0 0.0
    %1598 = vmatpush.msra.mxu0 0.0
    %1599 = vmatpush.msra.mxu0 0.0
    %1600 = vmatpush.msra.mxu0 0.0
    %1601 = vmatpush.msra.mxu0 0.0
    %1602 = vmatpush.msra.mxu0 0.0
    %1603 = vmatpush.msra.mxu0 0.0
    %1604 = vmatpush.msra.mxu0 0.0
    %1605 = vmatpush.msra.mxu0 0.0
    %1606 = vmatpush.msra.mxu0 0.0
    %1607 = vmatpush.msra.mxu0 0.0
    %1608 = vmatpush.msra.mxu0 %v1588
    %1609 = vmatmul.f32.gmra.mxu0 %v1591
    %v1610 = vpop.f32.mrf.mxu0
    %v1611 = vadd.f32 0.0, %v1610
    %1612 = vdwg.mxu0
    %1613 = vrot.lane.b32.xlu0 %v339, 48
    %v1614 = vpop.permute.xlu0 %1613
    %v1617 = vsel %vm598, %v1430, 0
    %1619 = vmatpush.msra.mxu0 0.0
    %1620 = vmatpush.msra.mxu0 0.0
    %1621 = vmatpush.msra.mxu0 0.0
    %1622 = vmatpush.msra.mxu0 0.0
    %1623 = vmatpush.msra.mxu0 0.0
    %1624 = vmatpush.msra.mxu0 0.0
    %1625 = vmatpush.msra.mxu0 0.0
    %1626 = vmatpush.msra.mxu0 0.0
    %1627 = vmatpush.msra.mxu0 0.0
    %1628 = vmatpush.msra.mxu0 0.0
    %1629 = vmatpush.msra.mxu0 0.0
    %1630 = vmatpush.msra.mxu0 0.0
    %1631 = vmatpush.msra.mxu0 0.0
    %1632 = vmatpush.msra.mxu0 0.0
    %1633 = vmatpush.msra.mxu0 0.0
    %1634 = vmatpush.msra.mxu0 %v1614
    %1635 = vmatmul.f32.gmra.mxu0 %v1617
    %v1636 = vpop.f32.mrf.mxu0
    %v1637 = vadd.f32 0.0, %v1636
    %1638 = vdwg.mxu0
    %1647 = vrot.lane.b32.xlu0 %v1455, 16
    %v1648 = vpop.permute.xlu0 %1647
    %1649 = vrot.lane.b32.xlu0 %v1481, 16
    %v1650 = vpop.permute.xlu0 %1649
    %1651 = vrot.lane.b32.xlu0 %v1507, 16
    %v1652 = vpop.permute.xlu0 %1651
    %1653 = vrot.lane.b32.xlu0 %v1533, 16
    %v1654 = vpop.permute.xlu0 %1653
    %1655 = vrot.lane.b32.xlu0 %v1559, 16
    %v1656 = vpop.permute.xlu0 %1655
    %1657 = vrot.lane.b32.xlu0 %v1585, 16
    %v1658 = vpop.permute.xlu0 %1657
    %1659 = vrot.lane.b32.xlu0 %v1611, 16
    %v1660 = vpop.permute.xlu0 %1659
    %1661 = vrot.lane.b32.xlu0 %v1637, 16
    %v1662 = vpop.permute.xlu0 %1661
    %v1671 = vsel %vm344, %v815, %v1648
    %v1672 = vsel %vm344, %v841, %v1650
    %v1673 = vsel %vm344, %v867, %v1652
    %v1674 = vsel %vm344, %v893, %v1654
    %v1675 = vsel %vm344, %v919, %v1656
    %v1676 = vsel %vm344, %v945, %v1658
    %v1677 = vsel %vm344, %v971, %v1660
    %v1678 = vsel %vm344, %v997, %v1662
    %v1679 = vperm.slane %v274, 1
    %v1681 = vsel %vm52, %v1671, 0
    %v1684 = vsel %vm52, %v1672, 0
    %v1687 = vsel %vm52, %v1673, 0
    %v1690 = vsel %vm52, %v1674, 0
    %v1693 = vsel %vm52, %v1675, 0
    %v1696 = vsel %vm52, %v1676, 0
    %v1699 = vsel %vm52, %v1677, 0
    %v1702 = vsel %vm52, %v1678, 0
    %1704 = vmatpush.msra.mxu0 0.0
    %1705 = vmatpush.msra.mxu0 0.0
    %1706 = vmatpush.msra.mxu0 0.0
    %1707 = vmatpush.msra.mxu0 0.0
    %1708 = vmatpush.msra.mxu0 0.0
    %1709 = vmatpush.msra.mxu0 0.0
    %1710 = vmatpush.msra.mxu0 0.0
    %1711 = vmatpush.msra.mxu0 0.0
    %1712 = vmatpush.msra.mxu0 0.0
    %1713 = vmatpush.msra.mxu0 0.0
    %1714 = vmatpush.msra.mxu0 0.0
    %1715 = vmatpush.msra.mxu0 0.0
    %1716 = vmatpush.msra.mxu0 %v261
    %1717 = vmatpush.msra.mxu0 %v260
    %1718 = vmatpush.msra.mxu0 %v259
    %1719 = vmatpush.msra.mxu0 %v258
    %1720 = vmatmul.f32.gmra.mxu0 %v1681
    %v1721 = vpop.f32.mrf.mxu0
    %v1722 = vadd.f32 %v1679, %v1721
    %1723 = vmatmul.f32.gmra.mxu0 %v1684
    %v1724 = vpop.f32.mrf.mxu0
    %v1725 = vadd.f32 %v1679, %v1724
    %1726 = vmatmul.f32.gmra.mxu0 %v1687
    %v1727 = vpop.f32.mrf.mxu0
    %v1728 = vadd.f32 %v1679, %v1727
    %1729 = vmatmul.f32.gmra.mxu0 %v1690
    %v1730 = vpop.f32.mrf.mxu0
    %v1731 = vadd.f32 %v1679, %v1730
    %1732 = vmatmul.f32.gmra.mxu0 %v1693
    %v1733 = vpop.f32.mrf.mxu0
    %v1734 = vadd.f32 %v1679, %v1733
    %1735 = vmatmul.f32.gmra.mxu0 %v1696
    %v1736 = vpop.f32.mrf.mxu0
    %v1737 = vadd.f32 %v1679, %v1736
    %1738 = vmatmul.f32.gmra.mxu0 %v1699
    %v1739 = vpop.f32.mrf.mxu0
    %v1740 = vadd.f32 %v1679, %v1739
    %1741 = vmatmul.f32.gmra.mxu0 %v1702
    %v1742 = vpop.f32.mrf.mxu0
    %v1743 = vadd.f32 %v1679, %v1742
    %1744 = vdwg.mxu0
    %v1745 = vadd.f32 %v246, %v1722
    %v1746 = vadd.f32 %v247, %v1725
    %v1747 = vadd.f32 %v248, %v1728
    %v1748 = vadd.f32 %v249, %v1731
    %v1749 = vadd.f32 %v250, %v1734
    %v1750 = vadd.f32 %v251, %v1737
    %v1751 = vadd.f32 %v252, %v1740
    %v1752 = vadd.f32 %v253, %v1743
    %v1753 = vsel %vm52, %v1745, 0.0
    %1754 = vadd.xlane.f32.xlu0 %v1753
    %v1755 = vpop.xlane.xlu0 %1754
    %v1756 = vsel %vm52, %v1746, 0.0
    %1757 = vadd.xlane.f32.xlu0 %v1756
    %v1758 = vpop.xlane.xlu0 %1757
    %v1759 = vsel %vm52, %v1747, 0.0
    %1760 = vadd.xlane.f32.xlu0 %v1759
    %v1761 = vpop.xlane.xlu0 %1760
    %v1762 = vsel %vm52, %v1748, 0.0
    %1763 = vadd.xlane.f32.xlu0 %v1762
    %v1764 = vpop.xlane.xlu0 %1763
    %v1765 = vsel %vm52, %v1749, 0.0
    %1766 = vadd.xlane.f32.xlu0 %v1765
    %v1767 = vpop.xlane.xlu0 %1766
    %v1768 = vsel %vm52, %v1750, 0.0
    %1769 = vadd.xlane.f32.xlu0 %v1768
    %v1770 = vpop.xlane.xlu0 %1769
    %v1771 = vsel %vm52, %v1751, 0.0
    %1772 = vadd.xlane.f32.xlu0 %v1771
    %v1773 = vpop.xlane.xlu0 %1772
    %v1774 = vsel %vm52, %v1752, 0.0
    %1775 = vadd.xlane.f32.xlu0 %v1774
    %v1776 = vpop.xlane.xlu0 %1775
    %v1777 = vmul.f32 %v1755, %v83
    %v1778 = vmul.f32 %v1758, %v83
    %v1779 = vmul.f32 %v1761, %v83
    %v1780 = vmul.f32 %v1764, %v83
    %v1781 = vmul.f32 %v1767, %v83
    %v1782 = vmul.f32 %v1770, %v83
    %v1783 = vmul.f32 %v1773, %v83
    %v1784 = vmul.f32 %v1776, %v83
    %v1785 = vsub.f32 %v1745, %v1777
    %v1786 = vsub.f32 %v1746, %v1778
    %v1787 = vsub.f32 %v1747, %v1779
    %v1788 = vsub.f32 %v1748, %v1780
    %v1789 = vsub.f32 %v1749, %v1781
    %v1790 = vsub.f32 %v1750, %v1782
    %v1791 = vsub.f32 %v1751, %v1783
    %v1792 = vsub.f32 %v1752, %v1784
    %v1793 = vmul.f32 %v1785, %v1785
    %v1794 = vmul.f32 %v1786, %v1786
    %v1795 = vmul.f32 %v1787, %v1787
    %v1796 = vmul.f32 %v1788, %v1788
    %v1797 = vmul.f32 %v1789, %v1789
    %v1798 = vmul.f32 %v1790, %v1790
    %v1799 = vmul.f32 %v1791, %v1791
    %v1800 = vmul.f32 %v1792, %v1792
    %v1801 = vsel %vm52, %v1793, 0.0
    %1802 = vadd.xlane.f32.xlu0 %v1801
    %v1803 = vpop.xlane.xlu0 %1802
    %v1804 = vsel %vm52, %v1794, 0.0
    %1805 = vadd.xlane.f32.xlu0 %v1804
    %v1806 = vpop.xlane.xlu0 %1805
    %v1807 = vsel %vm52, %v1795, 0.0
    %1808 = vadd.xlane.f32.xlu0 %v1807
    %v1809 = vpop.xlane.xlu0 %1808
    %v1810 = vsel %vm52, %v1796, 0.0
    %1811 = vadd.xlane.f32.xlu0 %v1810
    %v1812 = vpop.xlane.xlu0 %1811
    %v1813 = vsel %vm52, %v1797, 0.0
    %1814 = vadd.xlane.f32.xlu0 %v1813
    %v1815 = vpop.xlane.xlu0 %1814
    %v1816 = vsel %vm52, %v1798, 0.0
    %1817 = vadd.xlane.f32.xlu0 %v1816
    %v1818 = vpop.xlane.xlu0 %1817
    %v1819 = vsel %vm52, %v1799, 0.0
    %1820 = vadd.xlane.f32.xlu0 %v1819
    %v1821 = vpop.xlane.xlu0 %1820
    %v1822 = vsel %vm52, %v1800, 0.0
    %1823 = vadd.xlane.f32.xlu0 %v1822
    %v1824 = vpop.xlane.xlu0 %1823
    %v1825 = vmul.f32 %v1803, %v83
    %v1826 = vmul.f32 %v1806, %v83
    %v1827 = vmul.f32 %v1809, %v83
    %v1828 = vmul.f32 %v1812, %v83
    %v1829 = vmul.f32 %v1815, %v83
    %v1830 = vmul.f32 %v1818, %v83
    %v1831 = vmul.f32 %v1821, %v83
    %v1832 = vmul.f32 %v1824, %v83
    %v1833 = vadd.f32 %v1825, 1e-05
    %v1834 = vadd.f32 %v1826, 1e-05
    %v1835 = vadd.f32 %v1827, 1e-05
    %v1836 = vadd.f32 %v1828, 1e-05
    %v1837 = vadd.f32 %v1829, 1e-05
    %v1838 = vadd.f32 %v1830, 1e-05
    %v1839 = vadd.f32 %v1831, 1e-05
    %v1840 = vadd.f32 %v1832, 1e-05
    %v1841 = vrsqrt.pop %v1833
    %v1842 = vmul.f32 %v1841, %v1833
    %v1843 = vmul.f32 %v1842, %v1841
    %v1844 = vmul.f32 0.5, %v1843
    %v1845 = vsub.f32 1.5, %v1844
    %v1846 = vmul.f32 %v1841, %v1845
    %vm1847 = vweird.f32 %v1833
    %vm1848 = vweird.f32 %v1841
    %vm1849 = vmor %vm1847, %vm1848
    %v1850 = vsel %vm1849, %v1841, %v1846
    %v1851 = vrsqrt.pop %v1834
    %v1852 = vmul.f32 %v1851, %v1834
    %v1853 = vmul.f32 %v1852, %v1851
    %v1854 = vmul.f32 0.5, %v1853
    %v1855 = vsub.f32 1.5, %v1854
    %v1856 = vmul.f32 %v1851, %v1855
    %vm1857 = vweird.f32 %v1834
    %vm1858 = vweird.f32 %v1851
    %vm1859 = vmor %vm1857, %vm1858
    %v1860 = vsel %vm1859, %v1851, %v1856
    %v1861 = vrsqrt.pop %v1835
    %v1862 = vmul.f32 %v1861, %v1835
    %v1863 = vmul.f32 %v1862, %v1861
    %v1864 = vmul.f32 0.5, %v1863
    %v1865 = vsub.f32 1.5, %v1864
    %v1866 = vmul.f32 %v1861, %v1865
    %vm1867 = vweird.f32 %v1835
    %vm1868 = vweird.f32 %v1861
    %vm1869 = vmor %vm1867, %vm1868
    %v1870 = vsel %vm1869, %v1861, %v1866
    %v1871 = vrsqrt.pop %v1836
    %v1872 = vmul.f32 %v1871, %v1836
    %v1873 = vmul.f32 %v1872, %v1871
    %v1874 = vmul.f32 0.5, %v1873
    %v1875 = vsub.f32 1.5, %v1874
    %v1876 = vmul.f32 %v1871, %v1875
    %vm1877 = vweird.f32 %v1836
    %vm1878 = vweird.f32 %v1871
    %vm1879 = vmor %vm1877, %vm1878
    %v1880 = vsel %vm1879, %v1871, %v1876
    %v1881 = vrsqrt.pop %v1837
    %v1882 = vmul.f32 %v1881, %v1837
    %v1883 = vmul.f32 %v1882, %v1881
    %v1884 = vmul.f32 0.5, %v1883
    %v1885 = vsub.f32 1.5, %v1884
    %v1886 = vmul.f32 %v1881, %v1885
    %vm1887 = vweird.f32 %v1837
    %vm1888 = vweird.f32 %v1881
    %vm1889 = vmor %vm1887, %vm1888
    %v1890 = vsel %vm1889, %v1881, %v1886
    %v1891 = vrsqrt.pop %v1838
    %v1892 = vmul.f32 %v1891, %v1838
    %v1893 = vmul.f32 %v1892, %v1891
    %v1894 = vmul.f32 0.5, %v1893
    %v1895 = vsub.f32 1.5, %v1894
    %v1896 = vmul.f32 %v1891, %v1895
    %vm1897 = vweird.f32 %v1838
    %vm1898 = vweird.f32 %v1891
    %vm1899 = vmor %vm1897, %vm1898
    %v1900 = vsel %vm1899, %v1891, %v1896
    %v1901 = vrsqrt.pop %v1839
    %v1902 = vmul.f32 %v1901, %v1839
    %v1903 = vmul.f32 %v1902, %v1901
    %v1904 = vmul.f32 0.5, %v1903
    %v1905 = vsub.f32 1.5, %v1904
    %v1906 = vmul.f32 %v1901, %v1905
    %vm1907 = vweird.f32 %v1839
    %vm1908 = vweird.f32 %v1901
    %vm1909 = vmor %vm1907, %vm1908
    %v1910 = vsel %vm1909, %v1901, %v1906
    %v1911 = vrsqrt.pop %v1840
    %v1912 = vmul.f32 %v1911, %v1840
    %v1913 = vmul.f32 %v1912, %v1911
    %v1914 = vmul.f32 0.5, %v1913
    %v1915 = vsub.f32 1.5, %v1914
    %v1916 = vmul.f32 %v1911, %v1915
    %vm1917 = vweird.f32 %v1840
    %vm1918 = vweird.f32 %v1911
    %vm1919 = vmor %vm1917, %vm1918
    %v1920 = vsel %vm1919, %v1911, %v1916
    %v1921 = vmul.f32 %v1785, %v1850
    %v1922 = vmul.f32 %v1786, %v1860
    %v1923 = vmul.f32 %v1787, %v1870
    %v1924 = vmul.f32 %v1788, %v1880
    %v1925 = vmul.f32 %v1789, %v1890
    %v1926 = vmul.f32 %v1790, %v1900
    %v1927 = vmul.f32 %v1791, %v1910
    %v1928 = vmul.f32 %v1792, %v1920
    %v1929 = vperm.slane %v274, 2
    %v1930 = vmul.f32 %v1921, %v1929
    %v1931 = vmul.f32 %v1922, %v1929
    %v1932 = vmul.f32 %v1923, %v1929
    %v1933 = vmul.f32 %v1924, %v1929
    %v1934 = vmul.f32 %v1925, %v1929
    %v1935 = vmul.f32 %v1926, %v1929
    %v1936 = vmul.f32 %v1927, %v1929
    %v1937 = vmul.f32 %v1928, %v1929
    %v1938 = vperm.slane %v274, 3
    %v1939 = vadd.f32 %v1930, %v1938
    %v1940 = vadd.f32 %v1931, %v1938
    %v1941 = vadd.f32 %v1932, %v1938
    %v1942 = vadd.f32 %v1933, %v1938
    %v1943 = vadd.f32 %v1934, %v1938
    %v1944 = vadd.f32 %v1935, %v1938
    %v1945 = vadd.f32 %v1936, %v1938
    %v1946 = vadd.f32 %v1937, %v1938
    %v1947 = vperm.slane %v274, 4
    %v1949 = vsel %vm52, %v1939, 0
    %v1952 = vsel %vm52, %v1940, 0
    %v1955 = vsel %vm52, %v1941, 0
    %v1958 = vsel %vm52, %v1942, 0
    %v1961 = vsel %vm52, %v1943, 0
    %v1964 = vsel %vm52, %v1944, 0
    %v1967 = vsel %vm52, %v1945, 0
    %v1970 = vsel %vm52, %v1946, 0
    %1972 = vmatpush.msra.mxu0 0.0
    %1973 = vmatpush.msra.mxu0 0.0
    %1974 = vmatpush.msra.mxu0 0.0
    %1975 = vmatpush.msra.mxu0 0.0
    %1976 = vmatpush.msra.mxu0 0.0
    %1977 = vmatpush.msra.mxu0 0.0
    %1978 = vmatpush.msra.mxu0 0.0
    %1979 = vmatpush.msra.mxu0 0.0
    %1980 = vmatpush.msra.mxu0 0.0
    %1981 = vmatpush.msra.mxu0 0.0
    %1982 = vmatpush.msra.mxu0 0.0
    %1983 = vmatpush.msra.mxu0 0.0
    %1984 = vmatpush.msra.mxu0 %v265
    %1985 = vmatpush.msra.mxu0 %v264
    %1986 = vmatpush.msra.mxu0 %v263
    %1987 = vmatpush.msra.mxu0 %v262
    %1988 = vmatmul.f32.gmra.mxu0 %v1949
    %v1989 = vpop.f32.mrf.mxu0
    %v1990 = vadd.f32 %v1947, %v1989
    %1991 = vmatmul.f32.gmra.mxu0 %v1952
    %v1992 = vpop.f32.mrf.mxu0
    %v1993 = vadd.f32 %v1947, %v1992
    %1994 = vmatmul.f32.gmra.mxu0 %v1955
    %v1995 = vpop.f32.mrf.mxu0
    %v1996 = vadd.f32 %v1947, %v1995
    %1997 = vmatmul.f32.gmra.mxu0 %v1958
    %v1998 = vpop.f32.mrf.mxu0
    %v1999 = vadd.f32 %v1947, %v1998
    %2000 = vmatmul.f32.gmra.mxu0 %v1961
    %v2001 = vpop.f32.mrf.mxu0
    %v2002 = vadd.f32 %v1947, %v2001
    %2003 = vmatmul.f32.gmra.mxu0 %v1964
    %v2004 = vpop.f32.mrf.mxu0
    %v2005 = vadd.f32 %v1947, %v2004
    %2006 = vmatmul.f32.gmra.mxu0 %v1967
    %v2007 = vpop.f32.mrf.mxu0
    %v2008 = vadd.f32 %v1947, %v2007
    %2009 = vmatmul.f32.gmra.mxu0 %v1970
    %v2010 = vpop.f32.mrf.mxu0
    %v2011 = vadd.f32 %v1947, %v2010
    %2012 = vdwg.mxu0
    %v2013 = vmul.f32 %v1990, %v1990
    %v2014 = vmul.f32 %v1993, %v1993
    %v2015 = vmul.f32 %v1996, %v1996
    %v2016 = vmul.f32 %v1999, %v1999
    %v2017 = vmul.f32 %v2002, %v2002
    %v2018 = vmul.f32 %v2005, %v2005
    %v2019 = vmul.f32 %v2008, %v2008
    %v2020 = vmul.f32 %v2011, %v2011
    %v2021 = vmul.f32 %v1990, %v2013
    %v2022 = vmul.f32 %v1993, %v2014
    %v2023 = vmul.f32 %v1996, %v2015
    %v2024 = vmul.f32 %v1999, %v2016
    %v2025 = vmul.f32 %v2002, %v2017
    %v2026 = vmul.f32 %v2005, %v2018
    %v2027 = vmul.f32 %v2008, %v2019
    %v2028 = vmul.f32 %v2011, %v2020
    %v2029 = vmul.f32 %v2021, 0.044715
    %v2030 = vmul.f32 %v2022, 0.044715
    %v2031 = vmul.f32 %v2023, 0.044715
    %v2032 = vmul.f32 %v2024, 0.044715
    %v2033 = vmul.f32 %v2025, 0.044715
    %v2034 = vmul.f32 %v2026, 0.044715
    %v2035 = vmul.f32 %v2027, 0.044715
    %v2036 = vmul.f32 %v2028, 0.044715
    %v2037 = vadd.f32 %v1990, %v2029
    %v2038 = vadd.f32 %v1993, %v2030
    %v2039 = vadd.f32 %v1996, %v2031
    %v2040 = vadd.f32 %v1999, %v2032
    %v2041 = vadd.f32 %v2002, %v2033
    %v2042 = vadd.f32 %v2005, %v2034
    %v2043 = vadd.f32 %v2008, %v2035
    %v2044 = vadd.f32 %v2011, %v2036
    %v2045 = vmul.f32 %v2037, 0.7978846
    %v2046 = vmul.f32 %v2038, 0.7978846
    %v2047 = vmul.f32 %v2039, 0.7978846
    %v2048 = vmul.f32 %v2040, 0.7978846
    %v2049 = vmul.f32 %v2041, 0.7978846
    %v2050 = vmul.f32 %v2042, 0.7978846
    %v2051 = vmul.f32 %v2043, 0.7978846
    %v2052 = vmul.f32 %v2044, 0.7978846
    %v2053 = vtanh.pop %v2045
    %v2054 = vtanh.pop %v2046
    %v2055 = vtanh.pop %v2047
    %v2056 = vtanh.pop %v2048
    %v2057 = vtanh.pop %v2049
    %v2058 = vtanh.pop %v2050
    %v2059 = vtanh.pop %v2051
    %v2060 = vtanh.pop %v2052
    %v2061 = vadd.f32 %v2053, 1.0
    %v2062 = vadd.f32 %v2054, 1.0
    %v2063 = vadd.f32 %v2055, 1.0
    %v2064 = vadd.f32 %v2056, 1.0
    %v2065 = vadd.f32 %v2057, 1.0
    %v2066 = vadd.f32 %v2058, 1.0
    %v2067 = vadd.f32 %v2059, 1.0
    %v2068 = vadd.f32 %v2060, 1.0
    %v2069 = vmul.f32 %v2061, 0.5
    %v2070 = vmul.f32 %v2062, 0.5
    %v2071 = vmul.f32 %v2063, 0.5
    %v2072 = vmul.f32 %v2064, 0.5
    %v2073 = vmul.f32 %v2065, 0.5
    %v2074 = vmul.f32 %v2066, 0.5
    %v2075 = vmul.f32 %v2067, 0.5
    %v2076 = vmul.f32 %v2068, 0.5
    %v2077 = vmul.f32 %v1990, %v2069
    %v2078 = vmul.f32 %v1993, %v2070
    %v2079 = vmul.f32 %v1996, %v2071
    %v2080 = vmul.f32 %v1999, %v2072
    %v2081 = vmul.f32 %v2002, %v2073
    %v2082 = vmul.f32 %v2005, %v2074
    %v2083 = vmul.f32 %v2008, %v2075
    %v2084 = vmul.f32 %v2011, %v2076
    %v2085 = vperm.slane %v274, 5
    %vm2086 = vcmask 523264
    %v2088 = vsel %vm2086, %v2077, 0
    %v2091 = vsel %vm2086, %v2078, 0
    %v2094 = vsel %vm2086, %v2079, 0
    %v2097 = vsel %vm2086, %v2080, 0
    %v2100 = vsel %vm2086, %v2081, 0
    %v2103 = vsel %vm2086, %v2082, 0
    %v2106 = vsel %vm2086, %v2083, 0
    %v2109 = vsel %vm2086, %v2084, 0
    %2111 = vmatpush.msra.mxu0 0.0
    %2112 = vmatpush.msra.mxu0 0.0
    %2113 = vmatpush.msra.mxu0 0.0
    %2114 = vmatpush.msra.mxu0 0.0
    %2115 = vmatpush.msra.mxu0 0.0
    %2116 = vmatpush.msra.mxu0 0.0
    %2117 = vmatpush.msra.mxu0 0.0
    %2118 = vmatpush.msra.mxu0 0.0
    %2119 = vmatpush.msra.mxu0 %v273
    %2120 = vmatpush.msra.mxu0 %v272
    %2121 = vmatpush.msra.mxu0 %v271
    %2122 = vmatpush.msra.mxu0 %v270
    %2123 = vmatpush.msra.mxu0 %v269
    %2124 = vmatpush.msra.mxu0 %v268
    %2125 = vmatpush.msra.mxu0 %v267
    %2126 = vmatpush.msra.mxu0 %v266
    %2127 = vmatmul.f32.gmra.mxu0 %v2088
    %v2128 = vpop.f32.mrf.mxu0
    %v2129 = vadd.f32 %v2085, %v2128
    %2130 = vmatmul.f32.gmra.mxu0 %v2091
    %v2131 = vpop.f32.mrf.mxu0
    %v2132 = vadd.f32 %v2085, %v2131
    %2133 = vmatmul.f32.gmra.mxu0 %v2094
    %v2134 = vpop.f32.mrf.mxu0
    %v2135 = vadd.f32 %v2085, %v2134
    %2136 = vmatmul.f32.gmra.mxu0 %v2097
    %v2137 = vpop.f32.mrf.mxu0
    %v2138 = vadd.f32 %v2085, %v2137
    %2139 = vmatmul.f32.gmra.mxu0 %v2100
    %v2140 = vpop.f32.mrf.mxu0
    %v2141 = vadd.f32 %v2085, %v2140
    %2142 = vmatmul.f32.gmra.mxu0 %v2103
    %v2143 = vpop.f32.mrf.mxu0
    %v2144 = vadd.f32 %v2085, %v2143
    %2145 = vmatmul.f32.gmra.mxu0 %v2106
    %v2146 = vpop.f32.mrf.mxu0
    %v2147 = vadd.f32 %v2085, %v2146
    %2148 = vmatmul.f32.gmra.mxu0 %v2109
    %v2149 = vpop.f32.mrf.mxu0
    %v2150 = vadd.f32 %v2085, %v2149
    %2151 = vdwg.mxu0
    %v2152 = vadd.f32 %v1939, %v2129
    %v2153 = vadd.f32 %v1940, %v2132
    %v2154 = vadd.f32 %v1941, %v2135
    %v2155 = vadd.f32 %v1942, %v2138
    %v2156 = vadd.f32 %v1943, %v2141
    %v2157 = vadd.f32 %v1944, %v2144
    %v2158 = vadd.f32 %v1945, %v2147
    %v2159 = vadd.f32 %v1946, %v2150
    %v2160 = vsel %vm52, %v2152, 0.0
    %2161 = vadd.xlane.f32.xlu0 %v2160
    %v2162 = vpop.xlane.xlu0 %2161
    %v2163 = vsel %vm52, %v2153, 0.0
    %2164 = vadd.xlane.f32.xlu0 %v2163
    %v2165 = vpop.xlane.xlu0 %2164
    %v2166 = vsel %vm52, %v2154, 0.0
    %2167 = vadd.xlane.f32.xlu0 %v2166
    %v2168 = vpop.xlane.xlu0 %2167
    %v2169 = vsel %vm52, %v2155, 0.0
    %2170 = vadd.xlane.f32.xlu0 %v2169
    %v2171 = vpop.xlane.xlu0 %2170
    %v2172 = vsel %vm52, %v2156, 0.0
    %2173 = vadd.xlane.f32.xlu0 %v2172
    %v2174 = vpop.xlane.xlu0 %2173
    %v2175 = vsel %vm52, %v2157, 0.0
    %2176 = vadd.xlane.f32.xlu0 %v2175
    %v2177 = vpop.xlane.xlu0 %2176
    %v2178 = vsel %vm52, %v2158, 0.0
    %2179 = vadd.xlane.f32.xlu0 %v2178
    %v2180 = vpop.xlane.xlu0 %2179
    %v2181 = vsel %vm52, %v2159, 0.0
    %2182 = vadd.xlane.f32.xlu0 %v2181
    %v2183 = vpop.xlane.xlu0 %2182
    %v2184 = vmul.f32 %v2162, %v83
    %v2185 = vmul.f32 %v2165, %v83
    %v2186 = vmul.f32 %v2168, %v83
    %v2187 = vmul.f32 %v2171, %v83
    %v2188 = vmul.f32 %v2174, %v83
    %v2189 = vmul.f32 %v2177, %v83
    %v2190 = vmul.f32 %v2180, %v83
    %v2191 = vmul.f32 %v2183, %v83
    %v2192 = vsub.f32 %v2152, %v2184
    %v2193 = vsub.f32 %v2153, %v2185
    %v2194 = vsub.f32 %v2154, %v2186
    %v2195 = vsub.f32 %v2155, %v2187
    %v2196 = vsub.f32 %v2156, %v2188
    %v2197 = vsub.f32 %v2157, %v2189
    %v2198 = vsub.f32 %v2158, %v2190
    %v2199 = vsub.f32 %v2159, %v2191
    %v2200 = vmul.f32 %v2192, %v2192
    %v2201 = vmul.f32 %v2193, %v2193
    %v2202 = vmul.f32 %v2194, %v2194
    %v2203 = vmul.f32 %v2195, %v2195
    %v2204 = vmul.f32 %v2196, %v2196
    %v2205 = vmul.f32 %v2197, %v2197
    %v2206 = vmul.f32 %v2198, %v2198
    %v2207 = vmul.f32 %v2199, %v2199
    %v2208 = vsel %vm52, %v2200, 0.0
    %2209 = vadd.xlane.f32.xlu0 %v2208
    %v2210 = vpop.xlane.xlu0 %2209
    %v2211 = vsel %vm52, %v2201, 0.0
    %2212 = vadd.xlane.f32.xlu0 %v2211
    %v2213 = vpop.xlane.xlu0 %2212
    %v2214 = vsel %vm52, %v2202, 0.0
    %2215 = vadd.xlane.f32.xlu0 %v2214
    %v2216 = vpop.xlane.xlu0 %2215
    %v2217 = vsel %vm52, %v2203, 0.0
    %2218 = vadd.xlane.f32.xlu0 %v2217
    %v2219 = vpop.xlane.xlu0 %2218
    %v2220 = vsel %vm52, %v2204, 0.0
    %2221 = vadd.xlane.f32.xlu0 %v2220
    %v2222 = vpop.xlane.xlu0 %2221
    %v2223 = vsel %vm52, %v2205, 0.0
    %2224 = vadd.xlane.f32.xlu0 %v2223
    %v2225 = vpop.xlane.xlu0 %2224
    %v2226 = vsel %vm52, %v2206, 0.0
    %2227 = vadd.xlane.f32.xlu0 %v2226
    %v2228 = vpop.xlane.xlu0 %2227
    %v2229 = vsel %vm52, %v2207, 0.0
    %2230 = vadd.xlane.f32.xlu0 %v2229
    %v2231 = vpop.xlane.xlu0 %2230
    %v2232 = vmul.f32 %v2210, %v83
    %v2233 = vmul.f32 %v2213, %v83
    %v2234 = vmul.f32 %v2216, %v83
    %v2235 = vmul.f32 %v2219, %v83
    %v2236 = vmul.f32 %v2222, %v83
    %v2237 = vmul.f32 %v2225, %v83
    %v2238 = vmul.f32 %v2228, %v83
    %v2239 = vmul.f32 %v2231, %v83
    %v2240 = vadd.f32 %v2232, 1e-05
    %v2241 = vadd.f32 %v2233, 1e-05
    %v2242 = vadd.f32 %v2234, 1e-05
    %v2243 = vadd.f32 %v2235, 1e-05
    %v2244 = vadd.f32 %v2236, 1e-05
    %v2245 = vadd.f32 %v2237, 1e-05
    %v2246 = vadd.f32 %v2238, 1e-05
    %v2247 = vadd.f32 %v2239, 1e-05
    %v2248 = vrsqrt.pop %v2240
    %v2249 = vmul.f32 %v2248, %v2240
    %v2250 = vmul.f32 %v2249, %v2248
    %v2251 = vmul.f32 0.5, %v2250
    %v2252 = vsub.f32 1.5, %v2251
    %v2253 = vmul.f32 %v2248, %v2252
    %vm2254 = vweird.f32 %v2240
    %vm2255 = vweird.f32 %v2248
    %vm2256 = vmor %vm2254, %vm2255
    %v2257 = vsel %vm2256, %v2248, %v2253
    %v2258 = vrsqrt.pop %v2241
    %v2259 = vmul.f32 %v2258, %v2241
    %v2260 = vmul.f32 %v2259, %v2258
    %v2261 = vmul.f32 0.5, %v2260
    %v2262 = vsub.f32 1.5, %v2261
    %v2263 = vmul.f32 %v2258, %v2262
    %vm2264 = vweird.f32 %v2241
    %vm2265 = vweird.f32 %v2258
    %vm2266 = vmor %vm2264, %vm2265
    %v2267 = vsel %vm2266, %v2258, %v2263
    %v2268 = vrsqrt.pop %v2242
    %v2269 = vmul.f32 %v2268, %v2242
    %v2270 = vmul.f32 %v2269, %v2268
    %v2271 = vmul.f32 0.5, %v2270
    %v2272 = vsub.f32 1.5, %v2271
    %v2273 = vmul.f32 %v2268, %v2272
    %vm2274 = vweird.f32 %v2242
    %vm2275 = vweird.f32 %v2268
    %vm2276 = vmor %vm2274, %vm2275
    %v2277 = vsel %vm2276, %v2268, %v2273
    %v2278 = vrsqrt.pop %v2243
    %v2279 = vmul.f32 %v2278, %v2243
    %v2280 = vmul.f32 %v2279, %v2278
    %v2281 = vmul.f32 0.5, %v2280
    %v2282 = vsub.f32 1.5, %v2281
    %v2283 = vmul.f32 %v2278, %v2282
    %vm2284 = vweird.f32 %v2243
    %vm2285 = vweird.f32 %v2278
    %vm2286 = vmor %vm2284, %vm2285
    %v2287 = vsel %vm2286, %v2278, %v2283
    %v2288 = vrsqrt.pop %v2244
    %v2289 = vmul.f32 %v2288, %v2244
    %v2290 = vmul.f32 %v2289, %v2288
    %v2291 = vmul.f32 0.5, %v2290
    %v2292 = vsub.f32 1.5, %v2291
    %v2293 = vmul.f32 %v2288, %v2292
    %vm2294 = vweird.f32 %v2244
    %vm2295 = vweird.f32 %v2288
    %vm2296 = vmor %vm2294, %vm2295
    %v2297 = vsel %vm2296, %v2288, %v2293
    %v2298 = vrsqrt.pop %v2245
    %v2299 = vmul.f32 %v2298, %v2245
    %v2300 = vmul.f32 %v2299, %v2298
    %v2301 = vmul.f32 0.5, %v2300
    %v2302 = vsub.f32 1.5, %v2301
    %v2303 = vmul.f32 %v2298, %v2302
    %vm2304 = vweird.f32 %v2245
    %vm2305 = vweird.f32 %v2298
    %vm2306 = vmor %vm2304, %vm2305
    %v2307 = vsel %vm2306, %v2298, %v2303
    %v2308 = vrsqrt.pop %v2246
    %v2309 = vmul.f32 %v2308, %v2246
    %v2310 = vmul.f32 %v2309, %v2308
    %v2311 = vmul.f32 0.5, %v2310
    %v2312 = vsub.f32 1.5, %v2311
    %v2313 = vmul.f32 %v2308, %v2312
    %vm2314 = vweird.f32 %v2246
    %vm2315 = vweird.f32 %v2308
    %vm2316 = vmor %vm2314, %vm2315
    %v2317 = vsel %vm2316, %v2308, %v2313
    %v2318 = vrsqrt.pop %v2247
    %v2319 = vmul.f32 %v2318, %v2247
    %v2320 = vmul.f32 %v2319, %v2318
    %v2321 = vmul.f32 0.5, %v2320
    %v2322 = vsub.f32 1.5, %v2321
    %v2323 = vmul.f32 %v2318, %v2322
    %vm2324 = vweird.f32 %v2247
    %vm2325 = vweird.f32 %v2318
    %vm2326 = vmor %vm2324, %vm2325
    %v2327 = vsel %vm2326, %v2318, %v2323
    %v2328 = vmul.f32 %v2192, %v2257
    %v2329 = vmul.f32 %v2193, %v2267
    %v2330 = vmul.f32 %v2194, %v2277
    %v2331 = vmul.f32 %v2195, %v2287
    %v2332 = vmul.f32 %v2196, %v2297
    %v2333 = vmul.f32 %v2197, %v2307
    %v2334 = vmul.f32 %v2198, %v2317
    %v2335 = vmul.f32 %v2199, %v2327
    %v2336 = vperm.slane %v274, 6
    %v2337 = vmul.f32 %v2328, %v2336
    %v2338 = vmul.f32 %v2329, %v2336
    %v2339 = vmul.f32 %v2330, %v2336
    %v2340 = vmul.f32 %v2331, %v2336
    %v2341 = vmul.f32 %v2332, %v2336
    %v2342 = vmul.f32 %v2333, %v2336
    %v2343 = vmul.f32 %v2334, %v2336
    %v2344 = vmul.f32 %v2335, %v2336
    %v2345 = vperm.slane %v274, 7
    %v2346 = vadd.f32 %v2337, %v2345
    %v2347 = vadd.f32 %v2338, %v2345
    %v2348 = vadd.f32 %v2339, %v2345
    %v2349 = vadd.f32 %v2340, %v2345
    %v2350 = vadd.f32 %v2341, %v2345
    %v2351 = vadd.f32 %v2342, %v2345
    %v2352 = vadd.f32 %v2343, %v2345
    %v2353 = vadd.f32 %v2344, %v2345
    %s2354 = scalar_lea.vmem %s3, 32
    %v2355 = vld [vmem:[%s2354] sm:$0xff]
    %v2356 = vld [vmem:[%s2354 + $0x8] sm:$0xff]
    %v2357 = vld [vmem:[%s2354 + $0x10] sm:$0xff]
    %v2358 = vld [vmem:[%s2354 + $0x18] sm:$0xff]
    %s2359 = scalar_lea.vmem %s4, 32
    %v2360 = vld [vmem:[%s2359] sm:$0xff]
    %v2361 = vld [vmem:[%s2359 + $0x8] sm:$0xff]
    %v2362 = vld [vmem:[%s2359 + $0x10] sm:$0xff]
    %v2363 = vld [vmem:[%s2359 + $0x18] sm:$0xff]
    %s2364 = scalar_lea.vmem %s5, 32
    %v2365 = vld [vmem:[%s2364] sm:$0xff]
    %v2366 = vld [vmem:[%s2364 + $0x8] sm:$0xff]
    %v2367 = vld [vmem:[%s2364 + $0x10] sm:$0xff]
    %v2368 = vld [vmem:[%s2364 + $0x18] sm:$0xff]
    %s2369 = scalar_lea.vmem %s6, 64
    %v2370 = vld [vmem:[%s2369] sm:$0xff]
    %v2371 = vld [vmem:[%s2369 + $0x8] sm:$0xff]
    %v2372 = vld [vmem:[%s2369 + $0x10] sm:$0xff]
    %v2373 = vld [vmem:[%s2369 + $0x18] sm:$0xff]
    %v2374 = vld [vmem:[%s2369 + $0x20] sm:$0xff]
    %v2375 = vld [vmem:[%s2369 + $0x28] sm:$0xff]
    %v2376 = vld [vmem:[%s2369 + $0x30] sm:$0xff]
    %v2377 = vld [vmem:[%s2369 + $0x38] sm:$0xff]
    %s2378 = scalar_lea.vmem %s7, 8
    %v2379 = vld [vmem:[%s2378] sm:$0xff]
    %v2380 = vperm.slane %v2379, 0
    %v2382 = vsel %vm52, %v2346, 0
    %v2385 = vsel %vm52, %v2347, 0
    %v2388 = vsel %vm52, %v2348, 0
    %v2391 = vsel %vm52, %v2349, 0
    %v2394 = vsel %vm52, %v2350, 0
    %v2397 = vsel %vm52, %v2351, 0
    %v2400 = vsel %vm52, %v2352, 0
    %v2403 = vsel %vm52, %v2353, 0
    %2405 = vmatpush.msra.mxu0 0.0
    %2406 = vmatpush.msra.mxu0 0.0
    %2407 = vmatpush.msra.mxu0 0.0
    %2408 = vmatpush.msra.mxu0 0.0
    %2409 = vmatpush.msra.mxu0 0.0
    %2410 = vmatpush.msra.mxu0 0.0
    %2411 = vmatpush.msra.mxu0 0.0
    %2412 = vmatpush.msra.mxu0 0.0
    %2413 = vmatpush.msra.mxu0 0.0
    %2414 = vmatpush.msra.mxu0 0.0
    %2415 = vmatpush.msra.mxu0 0.0
    %2416 = vmatpush.msra.mxu0 0.0
    %2417 = vmatpush.msra.mxu0 %v2358
    %2418 = vmatpush.msra.mxu0 %v2357
    %2419 = vmatpush.msra.mxu0 %v2356
    %2420 = vmatpush.msra.mxu0 %v2355
    %2421 = vmatmul.f32.gmra.mxu0 %v2382
    %v2422 = vpop.f32.mrf.mxu0
    %v2423 = vadd.f32 %v2380, %v2422
    %2424 = vmatmul.f32.gmra.mxu0 %v2385
    %v2425 = vpop.f32.mrf.mxu0
    %v2426 = vadd.f32 %v2380, %v2425
    %2427 = vmatmul.f32.gmra.mxu0 %v2388
    %v2428 = vpop.f32.mrf.mxu0
    %v2429 = vadd.f32 %v2380, %v2428
    %2430 = vmatmul.f32.gmra.mxu0 %v2391
    %v2431 = vpop.f32.mrf.mxu0
    %v2432 = vadd.f32 %v2380, %v2431
    %2433 = vmatmul.f32.gmra.mxu0 %v2394
    %v2434 = vpop.f32.mrf.mxu0
    %v2435 = vadd.f32 %v2380, %v2434
    %2436 = vmatmul.f32.gmra.mxu0 %v2397
    %v2437 = vpop.f32.mrf.mxu0
    %v2438 = vadd.f32 %v2380, %v2437
    %2439 = vmatmul.f32.gmra.mxu0 %v2400
    %v2440 = vpop.f32.mrf.mxu0
    %v2441 = vadd.f32 %v2380, %v2440
    %2442 = vmatmul.f32.gmra.mxu0 %v2403
    %v2443 = vpop.f32.mrf.mxu0
    %v2444 = vadd.f32 %v2380, %v2443
    %2445 = vdwg.mxu0
    %2447 = vrot.lane.b32.xlu0 %v2423, 96
    %v2448 = vpop.permute.xlu0 %2447
    %v2449 = vsel %vm344, %v2423, 0
    %v2451 = vsel %vm344, %v2448, 0
    %2453 = vmatpush.xpose.msra.mxu0 0.0
    %2454 = vmatpush.xpose.msra.mxu0 0.0
    %2455 = vmatpush.xpose.msra.mxu0 0.0
    %2456 = vmatpush.xpose.msra.mxu0 0.0
    %2457 = vmatpush.xpose.msra.mxu0 0.0
    %2458 = vmatpush.xpose.msra.mxu0 0.0
    %2459 = vmatpush.xpose.msra.mxu0 0.0
    %2460 = vmatpush.xpose.msra.mxu0 0.0
    %2461 = vmatpush.xpose.msra.mxu0 0.0
    %2462 = vmatpush.xpose.msra.mxu0 0.0
    %2463 = vmatpush.xpose.msra.mxu0 0.0
    %2464 = vmatpush.xpose.msra.mxu0 0.0
    %2465 = vmatpush.xpose.msra.mxu0 0.0
    %2466 = vmatpush.xpose.msra.mxu0 0.0
    %2467 = vmatpush.xpose.msra.mxu0 0.0
    %2468 = vmatpush.xpose.msra.mxu0 %v2451
    %2469 = vmatmul.f32.gmra.mxu0 %v2449
    %v2470 = vpop.f32.mrf.mxu0
    %v2471 = vadd.f32 0.0, %v2470
    %2472 = vdwg.mxu0
    %2474 = vrot.lane.b32.xlu0 %v2426, 96
    %v2475 = vpop.permute.xlu0 %2474
    %v2476 = vsel %vm344, %v2426, 0
    %v2478 = vsel %vm344, %v2475, 0
    %2480 = vmatpush.xpose.msra.mxu0 0.0
    %2481 = vmatpush.xpose.msra.mxu0 0.0
    %2482 = vmatpush.xpose.msra.mxu0 0.0
    %2483 = vmatpush.xpose.msra.mxu0 0.0
    %2484 = vmatpush.xpose.msra.mxu0 0.0
    %2485 = vmatpush.xpose.msra.mxu0 0.0
    %2486 = vmatpush.xpose.msra.mxu0 0.0
    %2487 = vmatpush.xpose.msra.mxu0 0.0
    %2488 = vmatpush.xpose.msra.mxu0 0.0
    %2489 = vmatpush.xpose.msra.mxu0 0.0
    %2490 = vmatpush.xpose.msra.mxu0 0.0
    %2491 = vmatpush.xpose.msra.mxu0 0.0
    %2492 = vmatpush.xpose.msra.mxu0 0.0
    %2493 = vmatpush.xpose.msra.mxu0 0.0
    %2494 = vmatpush.xpose.msra.mxu0 0.0
    %2495 = vmatpush.xpose.msra.mxu0 %v2478
    %2496 = vmatmul.f32.gmra.mxu0 %v2476
    %v2497 = vpop.f32.mrf.mxu0
    %v2498 = vadd.f32 0.0, %v2497
    %2499 = vdwg.mxu0
    %2501 = vrot.lane.b32.xlu0 %v2429, 96
    %v2502 = vpop.permute.xlu0 %2501
    %v2503 = vsel %vm344, %v2429, 0
    %v2505 = vsel %vm344, %v2502, 0
    %2507 = vmatpush.xpose.msra.mxu0 0.0
    %2508 = vmatpush.xpose.msra.mxu0 0.0
    %2509 = vmatpush.xpose.msra.mxu0 0.0
    %2510 = vmatpush.xpose.msra.mxu0 0.0
    %2511 = vmatpush.xpose.msra.mxu0 0.0
    %2512 = vmatpush.xpose.msra.mxu0 0.0
    %2513 = vmatpush.xpose.msra.mxu0 0.0
    %2514 = vmatpush.xpose.msra.mxu0 0.0
    %2515 = vmatpush.xpose.msra.mxu0 0.0
    %2516 = vmatpush.xpose.msra.mxu0 0.0
    %2517 = vmatpush.xpose.msra.mxu0 0.0
    %2518 = vmatpush.xpose.msra.mxu0 0.0
    %2519 = vmatpush.xpose.msra.mxu0 0.0
    %2520 = vmatpush.xpose.msra.mxu0 0.0
    %2521 = vmatpush.xpose.msra.mxu0 0.0
    %2522 = vmatpush.xpose.msra.mxu0 %v2505
    %2523 = vmatmul.f32.gmra.mxu0 %v2503
    %v2524 = vpop.f32.mrf.mxu0
    %v2525 = vadd.f32 0.0, %v2524
    %2526 = vdwg.mxu0
    %2528 = vrot.lane.b32.xlu0 %v2432, 96
    %v2529 = vpop.permute.xlu0 %2528
    %v2530 = vsel %vm344, %v2432, 0
    %v2532 = vsel %vm344, %v2529, 0
    %2534 = vmatpush.xpose.msra.mxu0 0.0
    %2535 = vmatpush.xpose.msra.mxu0 0.0
    %2536 = vmatpush.xpose.msra.mxu0 0.0
    %2537 = vmatpush.xpose.msra.mxu0 0.0
    %2538 = vmatpush.xpose.msra.mxu0 0.0
    %2539 = vmatpush.xpose.msra.mxu0 0.0
    %2540 = vmatpush.xpose.msra.mxu0 0.0
    %2541 = vmatpush.xpose.msra.mxu0 0.0
    %2542 = vmatpush.xpose.msra.mxu0 0.0
    %2543 = vmatpush.xpose.msra.mxu0 0.0
    %2544 = vmatpush.xpose.msra.mxu0 0.0
    %2545 = vmatpush.xpose.msra.mxu0 0.0
    %2546 = vmatpush.xpose.msra.mxu0 0.0
    %2547 = vmatpush.xpose.msra.mxu0 0.0
    %2548 = vmatpush.xpose.msra.mxu0 0.0
    %2549 = vmatpush.xpose.msra.mxu0 %v2532
    %2550 = vmatmul.f32.gmra.mxu0 %v2530
    %v2551 = vpop.f32.mrf.mxu0
    %v2552 = vadd.f32 0.0, %v2551
    %2553 = vdwg.mxu0
    %2555 = vrot.lane.b32.xlu0 %v2435, 96
    %v2556 = vpop.permute.xlu0 %2555
    %v2557 = vsel %vm344, %v2435, 0
    %v2559 = vsel %vm344, %v2556, 0
    %2561 = vmatpush.xpose.msra.mxu0 0.0
    %2562 = vmatpush.xpose.msra.mxu0 0.0
    %2563 = vmatpush.xpose.msra.mxu0 0.0
    %2564 = vmatpush.xpose.msra.mxu0 0.0
    %2565 = vmatpush.xpose.msra.mxu0 0.0
    %2566 = vmatpush.xpose.msra.mxu0 0.0
    %2567 = vmatpush.xpose.msra.mxu0 0.0
    %2568 = vmatpush.xpose.msra.mxu0 0.0
    %2569 = vmatpush.xpose.msra.mxu0 0.0
    %2570 = vmatpush.xpose.msra.mxu0 0.0
    %2571 = vmatpush.xpose.msra.mxu0 0.0
    %2572 = vmatpush.xpose.msra.mxu0 0.0
    %2573 = vmatpush.xpose.msra.mxu0 0.0
    %2574 = vmatpush.xpose.msra.mxu0 0.0
    %2575 = vmatpush.xpose.msra.mxu0 0.0
    %2576 = vmatpush.xpose.msra.mxu0 %v2559
    %2577 = vmatmul.f32.gmra.mxu0 %v2557
    %v2578 = vpop.f32.mrf.mxu0
    %v2579 = vadd.f32 0.0, %v2578
    %2580 = vdwg.mxu0
    %2582 = vrot.lane.b32.xlu0 %v2438, 96
    %v2583 = vpop.permute.xlu0 %2582
    %v2584 = vsel %vm344, %v2438, 0
    %v2586 = vsel %vm344, %v2583, 0
    %2588 = vmatpush.xpose.msra.mxu0 0.0
    %2589 = vmatpush.xpose.msra.mxu0 0.0
    %2590 = vmatpush.xpose.msra.mxu0 0.0
    %2591 = vmatpush.xpose.msra.mxu0 0.0
    %2592 = vmatpush.xpose.msra.mxu0 0.0
    %2593 = vmatpush.xpose.msra.mxu0 0.0
    %2594 = vmatpush.xpose.msra.mxu0 0.0
    %2595 = vmatpush.xpose.msra.mxu0 0.0
    %2596 = vmatpush.xpose.msra.mxu0 0.0
    %2597 = vmatpush.xpose.msra.mxu0 0.0
    %2598 = vmatpush.xpose.msra.mxu0 0.0
    %2599 = vmatpush.xpose.msra.mxu0 0.0
    %2600 = vmatpush.xpose.msra.mxu0 0.0
    %2601 = vmatpush.xpose.msra.mxu0 0.0
    %2602 = vmatpush.xpose.msra.mxu0 0.0
    %2603 = vmatpush.xpose.msra.mxu0 %v2586
    %2604 = vmatmul.f32.gmra.mxu0 %v2584
    %v2605 = vpop.f32.mrf.mxu0
    %v2606 = vadd.f32 0.0, %v2605
    %2607 = vdwg.mxu0
    %2609 = vrot.lane.b32.xlu0 %v2441, 96
    %v2610 = vpop.permute.xlu0 %2609
    %v2611 = vsel %vm344, %v2441, 0
    %v2613 = vsel %vm344, %v2610, 0
    %2615 = vmatpush.xpose.msra.mxu0 0.0
    %2616 = vmatpush.xpose.msra.mxu0 0.0
    %2617 = vmatpush.xpose.msra.mxu0 0.0
    %2618 = vmatpush.xpose.msra.mxu0 0.0
    %2619 = vmatpush.xpose.msra.mxu0 0.0
    %2620 = vmatpush.xpose.msra.mxu0 0.0
    %2621 = vmatpush.xpose.msra.mxu0 0.0
    %2622 = vmatpush.xpose.msra.mxu0 0.0
    %2623 = vmatpush.xpose.msra.mxu0 0.0
    %2624 = vmatpush.xpose.msra.mxu0 0.0
    %2625 = vmatpush.xpose.msra.mxu0 0.0
    %2626 = vmatpush.xpose.msra.mxu0 0.0
    %2627 = vmatpush.xpose.msra.mxu0 0.0
    %2628 = vmatpush.xpose.msra.mxu0 0.0
    %2629 = vmatpush.xpose.msra.mxu0 0.0
    %2630 = vmatpush.xpose.msra.mxu0 %v2613
    %2631 = vmatmul.f32.gmra.mxu0 %v2611
    %v2632 = vpop.f32.mrf.mxu0
    %v2633 = vadd.f32 0.0, %v2632
    %2634 = vdwg.mxu0
    %2636 = vrot.lane.b32.xlu0 %v2444, 96
    %v2637 = vpop.permute.xlu0 %2636
    %v2638 = vsel %vm344, %v2444, 0
    %v2640 = vsel %vm344, %v2637, 0
    %2642 = vmatpush.xpose.msra.mxu0 0.0
    %2643 = vmatpush.xpose.msra.mxu0 0.0
    %2644 = vmatpush.xpose.msra.mxu0 0.0
    %2645 = vmatpush.xpose.msra.mxu0 0.0
    %2646 = vmatpush.xpose.msra.mxu0 0.0
    %2647 = vmatpush.xpose.msra.mxu0 0.0
    %2648 = vmatpush.xpose.msra.mxu0 0.0
    %2649 = vmatpush.xpose.msra.mxu0 0.0
    %2650 = vmatpush.xpose.msra.mxu0 0.0
    %2651 = vmatpush.xpose.msra.mxu0 0.0
    %2652 = vmatpush.xpose.msra.mxu0 0.0
    %2653 = vmatpush.xpose.msra.mxu0 0.0
    %2654 = vmatpush.xpose.msra.mxu0 0.0
    %2655 = vmatpush.xpose.msra.mxu0 0.0
    %2656 = vmatpush.xpose.msra.mxu0 0.0
    %2657 = vmatpush.xpose.msra.mxu0 %v2640
    %2658 = vmatmul.f32.gmra.mxu0 %v2638
    %v2659 = vpop.f32.mrf.mxu0
    %v2660 = vadd.f32 0.0, %v2659
    %2661 = vdwg.mxu0
    %v2662 = vmul.f32 %v2471, 0.25
    %v2663 = vmul.f32 %v2498, 0.25
    %v2664 = vmul.f32 %v2525, 0.25
    %v2665 = vmul.f32 %v2552, 0.25
    %v2666 = vmul.f32 %v2579, 0.25
    %v2667 = vmul.f32 %v2606, 0.25
    %v2668 = vmul.f32 %v2633, 0.25
    %v2669 = vmul.f32 %v2660, 0.25
    %v2670 = vadd.f32 %v2662, %v574
    %v2671 = vadd.f32 %v2663, %v575
    %v2672 = vadd.f32 %v2664, %v576
    %v2673 = vadd.f32 %v2665, %v577
    %v2674 = vadd.f32 %v2666, %v578
    %v2675 = vadd.f32 %v2667, %v579
    %v2676 = vadd.f32 %v2668, %v580
    %v2677 = vadd.f32 %v2669, %v581
    %v2678 = vsel %vm598, %v2670, -inf
    %2679 = vmax.xlane.f32.xlu0 %v2678
    %v2680 = vpop.xlane.xlu0 %2679
    %v2681 = vsel %vm598, %v2671, -inf
    %2682 = vmax.xlane.f32.xlu0 %v2681
    %v2683 = vpop.xlane.xlu0 %2682
    %v2684 = vsel %vm598, %v2672, -inf
    %2685 = vmax.xlane.f32.xlu0 %v2684
    %v2686 = vpop.xlane.xlu0 %2685
    %v2687 = vsel %vm598, %v2673, -inf
    %2688 = vmax.xlane.f32.xlu0 %v2687
    %v2689 = vpop.xlane.xlu0 %2688
    %v2690 = vsel %vm598, %v2674, -inf
    %2691 = vmax.xlane.f32.xlu0 %v2690
    %v2692 = vpop.xlane.xlu0 %2691
    %v2693 = vsel %vm598, %v2675, -inf
    %2694 = vmax.xlane.f32.xlu0 %v2693
    %v2695 = vpop.xlane.xlu0 %2694
    %v2696 = vsel %vm598, %v2676, -inf
    %2697 = vmax.xlane.f32.xlu0 %v2696
    %v2698 = vpop.xlane.xlu0 %2697
    %v2699 = vsel %vm598, %v2677, -inf
    %2700 = vmax.xlane.f32.xlu0 %v2699
    %v2701 = vpop.xlane.xlu0 %2700
    %v2702 = vsub.f32 %v2670, %v2680
    %v2703 = vsub.f32 %v2671, %v2683
    %v2704 = vsub.f32 %v2672, %v2686
    %v2705 = vsub.f32 %v2673, %v2689
    %v2706 = vsub.f32 %v2674, %v2692
    %v2707 = vsub.f32 %v2675, %v2695
    %v2708 = vsub.f32 %v2676, %v2698
    %v2709 = vsub.f32 %v2677, %v2701
    %v2710 = vmul.f32 %v2702, 1.442695
    %v2711 = vpow.pop %v2710
    %v2712 = vmul.f32 %v2703, 1.442695
    %v2713 = vpow.pop %v2712
    %v2714 = vmul.f32 %v2704, 1.442695
    %v2715 = vpow.pop %v2714
    %v2716 = vmul.f32 %v2705, 1.442695
    %v2717 = vpow.pop %v2716
    %v2718 = vmul.f32 %v2706, 1.442695
    %v2719 = vpow.pop %v2718
    %v2720 = vmul.f32 %v2707, 1.442695
    %v2721 = vpow.pop %v2720
    %v2722 = vmul.f32 %v2708, 1.442695
    %v2723 = vpow.pop %v2722
    %v2724 = vmul.f32 %v2709, 1.442695
    %v2725 = vpow.pop %v2724
    %v2726 = vsel %vm598, %v2711, 0.0
    %2727 = vadd.xlane.f32.xlu0 %v2726
    %v2728 = vpop.xlane.xlu0 %2727
    %v2729 = vsel %vm598, %v2713, 0.0
    %2730 = vadd.xlane.f32.xlu0 %v2729
    %v2731 = vpop.xlane.xlu0 %2730
    %v2732 = vsel %vm598, %v2715, 0.0
    %2733 = vadd.xlane.f32.xlu0 %v2732
    %v2734 = vpop.xlane.xlu0 %2733
    %v2735 = vsel %vm598, %v2717, 0.0
    %2736 = vadd.xlane.f32.xlu0 %v2735
    %v2737 = vpop.xlane.xlu0 %2736
    %v2738 = vsel %vm598, %v2719, 0.0
    %2739 = vadd.xlane.f32.xlu0 %v2738
    %v2740 = vpop.xlane.xlu0 %2739
    %v2741 = vsel %vm598, %v2721, 0.0
    %2742 = vadd.xlane.f32.xlu0 %v2741
    %v2743 = vpop.xlane.xlu0 %2742
    %v2744 = vsel %vm598, %v2723, 0.0
    %2745 = vadd.xlane.f32.xlu0 %v2744
    %v2746 = vpop.xlane.xlu0 %2745
    %v2747 = vsel %vm598, %v2725, 0.0
    %2748 = vadd.xlane.f32.xlu0 %v2747
    %v2749 = vpop.xlane.xlu0 %2748
    %v2750 = vrcp.pop %v2728
    %v2751 = vmul.f32 %v2728, %v2750
    %v2752 = vsub.f32 1.0, %v2751
    %v2753 = vmul.f32 %v2750, %v2752
    %v2754 = vadd.f32 %v2750, %v2753
    %vm2755 = vweird.f32 %v2728
    %vm2756 = vweird.f32 %v2750
    %vm2757 = vmor %vm2755, %vm2756
    %v2758 = vsel %vm2757, %v2750, %v2754
    %v2759 = vand.u32 2147483647, %v2728
    %vm2760 = vcmp.eq.f32.partialorder %v2759, 8.507059e+37
    %v2761 = vand.u32 %v2728, 2147483648
    %v2762 = vor.u32 1.1754944e-38, %v2761
    %v2763 = vsel %vm2760, %v2762, %v2758
    %v2764 = vmul.f32 %v2711, %v2763
    %v2765 = vrcp.pop %v2731
    %v2766 = vmul.f32 %v2731, %v2765
    %v2767 = vsub.f32 1.0, %v2766
    %v2768 = vmul.f32 %v2765, %v2767
    %v2769 = vadd.f32 %v2765, %v2768
    %vm2770 = vweird.f32 %v2731
    %vm2771 = vweird.f32 %v2765
    %vm2772 = vmor %vm2770, %vm2771
    %v2773 = vsel %vm2772, %v2765, %v2769
    %v2774 = vand.u32 2147483647, %v2731
    %vm2775 = vcmp.eq.f32.partialorder %v2774, 8.507059e+37
    %v2776 = vand.u32 %v2731, 2147483648
    %v2777 = vor.u32 1.1754944e-38, %v2776
    %v2778 = vsel %vm2775, %v2777, %v2773
    %v2779 = vmul.f32 %v2713, %v2778
    %v2780 = vrcp.pop %v2734
    %v2781 = vmul.f32 %v2734, %v2780
    %v2782 = vsub.f32 1.0, %v2781
    %v2783 = vmul.f32 %v2780, %v2782
    %v2784 = vadd.f32 %v2780, %v2783
    %vm2785 = vweird.f32 %v2734
    %vm2786 = vweird.f32 %v2780
    %vm2787 = vmor %vm2785, %vm2786
    %v2788 = vsel %vm2787, %v2780, %v2784
    %v2789 = vand.u32 2147483647, %v2734
    %vm2790 = vcmp.eq.f32.partialorder %v2789, 8.507059e+37
    %v2791 = vand.u32 %v2734, 2147483648
    %v2792 = vor.u32 1.1754944e-38, %v2791
    %v2793 = vsel %vm2790, %v2792, %v2788
    %v2794 = vmul.f32 %v2715, %v2793
    %v2795 = vrcp.pop %v2737
    %v2796 = vmul.f32 %v2737, %v2795
    %v2797 = vsub.f32 1.0, %v2796
    %v2798 = vmul.f32 %v2795, %v2797
    %v2799 = vadd.f32 %v2795, %v2798
    %vm2800 = vweird.f32 %v2737
    %vm2801 = vweird.f32 %v2795
    %vm2802 = vmor %vm2800, %vm2801
    %v2803 = vsel %vm2802, %v2795, %v2799
    %v2804 = vand.u32 2147483647, %v2737
    %vm2805 = vcmp.eq.f32.partialorder %v2804, 8.507059e+37
    %v2806 = vand.u32 %v2737, 2147483648
    %v2807 = vor.u32 1.1754944e-38, %v2806
    %v2808 = vsel %vm2805, %v2807, %v2803
    %v2809 = vmul.f32 %v2717, %v2808
    %v2810 = vrcp.pop %v2740
    %v2811 = vmul.f32 %v2740, %v2810
    %v2812 = vsub.f32 1.0, %v2811
    %v2813 = vmul.f32 %v2810, %v2812
    %v2814 = vadd.f32 %v2810, %v2813
    %vm2815 = vweird.f32 %v2740
    %vm2816 = vweird.f32 %v2810
    %vm2817 = vmor %vm2815, %vm2816
    %v2818 = vsel %vm2817, %v2810, %v2814
    %v2819 = vand.u32 2147483647, %v2740
    %vm2820 = vcmp.eq.f32.partialorder %v2819, 8.507059e+37
    %v2821 = vand.u32 %v2740, 2147483648
    %v2822 = vor.u32 1.1754944e-38, %v2821
    %v2823 = vsel %vm2820, %v2822, %v2818
    %v2824 = vmul.f32 %v2719, %v2823
    %v2825 = vrcp.pop %v2743
    %v2826 = vmul.f32 %v2743, %v2825
    %v2827 = vsub.f32 1.0, %v2826
    %v2828 = vmul.f32 %v2825, %v2827
    %v2829 = vadd.f32 %v2825, %v2828
    %vm2830 = vweird.f32 %v2743
    %vm2831 = vweird.f32 %v2825
    %vm2832 = vmor %vm2830, %vm2831
    %v2833 = vsel %vm2832, %v2825, %v2829
    %v2834 = vand.u32 2147483647, %v2743
    %vm2835 = vcmp.eq.f32.partialorder %v2834, 8.507059e+37
    %v2836 = vand.u32 %v2743, 2147483648
    %v2837 = vor.u32 1.1754944e-38, %v2836
    %v2838 = vsel %vm2835, %v2837, %v2833
    %v2839 = vmul.f32 %v2721, %v2838
    %v2840 = vrcp.pop %v2746
    %v2841 = vmul.f32 %v2746, %v2840
    %v2842 = vsub.f32 1.0, %v2841
    %v2843 = vmul.f32 %v2840, %v2842
    %v2844 = vadd.f32 %v2840, %v2843
    %vm2845 = vweird.f32 %v2746
    %vm2846 = vweird.f32 %v2840
    %vm2847 = vmor %vm2845, %vm2846
    %v2848 = vsel %vm2847, %v2840, %v2844
    %v2849 = vand.u32 2147483647, %v2746
    %vm2850 = vcmp.eq.f32.partialorder %v2849, 8.507059e+37
    %v2851 = vand.u32 %v2746, 2147483648
    %v2852 = vor.u32 1.1754944e-38, %v2851
    %v2853 = vsel %vm2850, %v2852, %v2848
    %v2854 = vmul.f32 %v2723, %v2853
    %v2855 = vrcp.pop %v2749
    %v2856 = vmul.f32 %v2749, %v2855
    %v2857 = vsub.f32 1.0, %v2856
    %v2858 = vmul.f32 %v2855, %v2857
    %v2859 = vadd.f32 %v2855, %v2858
    %vm2860 = vweird.f32 %v2749
    %vm2861 = vweird.f32 %v2855
    %vm2862 = vmor %vm2860, %vm2861
    %v2863 = vsel %vm2862, %v2855, %v2859
    %v2864 = vand.u32 2147483647, %v2749
    %vm2865 = vcmp.eq.f32.partialorder %v2864, 8.507059e+37
    %v2866 = vand.u32 %v2749, 2147483648
    %v2867 = vor.u32 1.1754944e-38, %v2866
    %v2868 = vsel %vm2865, %v2867, %v2863
    %v2869 = vmul.f32 %v2725, %v2868
    %2870 = vrot.lane.b32.xlu0 %v2423, 64
    %v2871 = vpop.permute.xlu0 %2870
    %v2874 = vsel %vm598, %v2764, 0
    %2876 = vmatpush.msra.mxu0 0.0
    %2877 = vmatpush.msra.mxu0 0.0
    %2878 = vmatpush.msra.mxu0 0.0
    %2879 = vmatpush.msra.mxu0 0.0
    %2880 = vmatpush.msra.mxu0 0.0
    %2881 = vmatpush.msra.mxu0 0.0
    %2882 = vmatpush.msra.mxu0 0.0
    %2883 = vmatpush.msra.mxu0 0.0
    %2884 = vmatpush.msra.mxu0 0.0
    %2885 = vmatpush.msra.mxu0 0.0
    %2886 = vmatpush.msra.mxu0 0.0
    %2887 = vmatpush.msra.mxu0 0.0
    %2888 = vmatpush.msra.mxu0 0.0
    %2889 = vmatpush.msra.mxu0 0.0
    %2890 = vmatpush.msra.mxu0 0.0
    %2891 = vmatpush.msra.mxu0 %v2871
    %2892 = vmatmul.f32.gmra.mxu0 %v2874
    %v2893 = vpop.f32.mrf.mxu0
    %v2894 = vadd.f32 0.0, %v2893
    %2895 = vdwg.mxu0
    %2896 = vrot.lane.b32.xlu0 %v2426, 64
    %v2897 = vpop.permute.xlu0 %2896
    %v2900 = vsel %vm598, %v2779, 0
    %2902 = vmatpush.msra.mxu0 0.0
    %2903 = vmatpush.msra.mxu0 0.0
    %2904 = vmatpush.msra.mxu0 0.0
    %2905 = vmatpush.msra.mxu0 0.0
    %2906 = vmatpush.msra.mxu0 0.0
    %2907 = vmatpush.msra.mxu0 0.0
    %2908 = vmatpush.msra.mxu0 0.0
    %2909 = vmatpush.msra.mxu0 0.0
    %2910 = vmatpush.msra.mxu0 0.0
    %2911 = vmatpush.msra.mxu0 0.0
    %2912 = vmatpush.msra.mxu0 0.0
    %2913 = vmatpush.msra.mxu0 0.0
    %2914 = vmatpush.msra.mxu0 0.0
    %2915 = vmatpush.msra.mxu0 0.0
    %2916 = vmatpush.msra.mxu0 0.0
    %2917 = vmatpush.msra.mxu0 %v2897
    %2918 = vmatmul.f32.gmra.mxu0 %v2900
    %v2919 = vpop.f32.mrf.mxu0
    %v2920 = vadd.f32 0.0, %v2919
    %2921 = vdwg.mxu0
    %2922 = vrot.lane.b32.xlu0 %v2429, 64
    %v2923 = vpop.permute.xlu0 %2922
    %v2926 = vsel %vm598, %v2794, 0
    %2928 = vmatpush.msra.mxu0 0.0
    %2929 = vmatpush.msra.mxu0 0.0
    %2930 = vmatpush.msra.mxu0 0.0
    %2931 = vmatpush.msra.mxu0 0.0
    %2932 = vmatpush.msra.mxu0 0.0
    %2933 = vmatpush.msra.mxu0 0.0
    %2934 = vmatpush.msra.mxu0 0.0
    %2935 = vmatpush.msra.mxu0 0.0
    %2936 = vmatpush.msra.mxu0 0.0
    %2937 = vmatpush.msra.mxu0 0.0
    %2938 = vmatpush.msra.mxu0 0.0
    %2939 = vmatpush.msra.mxu0 0.0
    %2940 = vmatpush.msra.mxu0 0.0
    %2941 = vmatpush.msra.mxu0 0.0
    %2942 = vmatpush.msra.mxu0 0.0
    %2943 = vmatpush.msra.mxu0 %v2923
    %2944 = vmatmul.f32.gmra.mxu0 %v2926
    %v2945 = vpop.f32.mrf.mxu0
    %v2946 = vadd.f32 0.0, %v2945
    %2947 = vdwg.mxu0
    %2948 = vrot.lane.b32.xlu0 %v2432, 64
    %v2949 = vpop.permute.xlu0 %2948
    %v2952 = vsel %vm598, %v2809, 0
    %2954 = vmatpush.msra.mxu0 0.0
    %2955 = vmatpush.msra.mxu0 0.0
    %2956 = vmatpush.msra.mxu0 0.0
    %2957 = vmatpush.msra.mxu0 0.0
    %2958 = vmatpush.msra.mxu0 0.0
    %2959 = vmatpush.msra.mxu0 0.0
    %2960 = vmatpush.msra.mxu0 0.0
    %2961 = vmatpush.msra.mxu0 0.0
    %2962 = vmatpush.msra.mxu0 0.0
    %2963 = vmatpush.msra.mxu0 0.0
    %2964 = vmatpush.msra.mxu0 0.0
    %2965 = vmatpush.msra.mxu0 0.0
    %2966 = vmatpush.msra.mxu0 0.0
    %2967 = vmatpush.msra.mxu0 0.0
    %2968 = vmatpush.msra.mxu0 0.0
    %2969 = vmatpush.msra.mxu0 %v2949
    %2970 = vmatmul.f32.gmra.mxu0 %v2952
    %v2971 = vpop.f32.mrf.mxu0
    %v2972 = vadd.f32 0.0, %v2971
    %2973 = vdwg.mxu0
    %2974 = vrot.lane.b32.xlu0 %v2435, 64
    %v2975 = vpop.permute.xlu0 %2974
    %v2978 = vsel %vm598, %v2824, 0
    %2980 = vmatpush.msra.mxu0 0.0
    %2981 = vmatpush.msra.mxu0 0.0
    %2982 = vmatpush.msra.mxu0 0.0
    %2983 = vmatpush.msra.mxu0 0.0
    %2984 = vmatpush.msra.mxu0 0.0
    %2985 = vmatpush.msra.mxu0 0.0
    %2986 = vmatpush.msra.mxu0 0.0
    %2987 = vmatpush.msra.mxu0 0.0
    %2988 = vmatpush.msra.mxu0 0.0
    %2989 = vmatpush.msra.mxu0 0.0
    %2990 = vmatpush.msra.mxu0 0.0
    %2991 = vmatpush.msra.mxu0 0.0
    %2992 = vmatpush.msra.mxu0 0.0
    %2993 = vmatpush.msra.mxu0 0.0
    %2994 = vmatpush.msra.mxu0 0.0
    %2995 = vmatpush.msra.mxu0 %v2975
    %2996 = vmatmul.f32.gmra.mxu0 %v2978
    %v2997 = vpop.f32.mrf.mxu0
    %v2998 = vadd.f32 0.0, %v2997
    %2999 = vdwg.mxu0
    %3000 = vrot.lane.b32.xlu0 %v2438, 64
    %v3001 = vpop.permute.xlu0 %3000
    %v3004 = vsel %vm598, %v2839, 0
    %3006 = vmatpush.msra.mxu0 0.0
    %3007 = vmatpush.msra.mxu0 0.0
    %3008 = vmatpush.msra.mxu0 0.0
    %3009 = vmatpush.msra.mxu0 0.0
    %3010 = vmatpush.msra.mxu0 0.0
    %3011 = vmatpush.msra.mxu0 0.0
    %3012 = vmatpush.msra.mxu0 0.0
    %3013 = vmatpush.msra.mxu0 0.0
    %3014 = vmatpush.msra.mxu0 0.0
    %3015 = vmatpush.msra.mxu0 0.0
    %3016 = vmatpush.msra.mxu0 0.0
    %3017 = vmatpush.msra.mxu0 0.0
    %3018 = vmatpush.msra.mxu0 0.0
    %3019 = vmatpush.msra.mxu0 0.0
    %3020 = vmatpush.msra.mxu0 0.0
    %3021 = vmatpush.msra.mxu0 %v3001
    %3022 = vmatmul.f32.gmra.mxu0 %v3004
    %v3023 = vpop.f32.mrf.mxu0
    %v3024 = vadd.f32 0.0, %v3023
    %3025 = vdwg.mxu0
    %3026 = vrot.lane.b32.xlu0 %v2441, 64
    %v3027 = vpop.permute.xlu0 %3026
    %v3030 = vsel %vm598, %v2854, 0
    %3032 = vmatpush.msra.mxu0 0.0
    %3033 = vmatpush.msra.mxu0 0.0
    %3034 = vmatpush.msra.mxu0 0.0
    %3035 = vmatpush.msra.mxu0 0.0
    %3036 = vmatpush.msra.mxu0 0.0
    %3037 = vmatpush.msra.mxu0 0.0
    %3038 = vmatpush.msra.mxu0 0.0
    %3039 = vmatpush.msra.mxu0 0.0
    %3040 = vmatpush.msra.mxu0 0.0
    %3041 = vmatpush.msra.mxu0 0.0
    %3042 = vmatpush.msra.mxu0 0.0
    %3043 = vmatpush.msra.mxu0 0.0
    %3044 = vmatpush.msra.mxu0 0.0
    %3045 = vmatpush.msra.mxu0 0.0
    %3046 = vmatpush.msra.mxu0 0.0
    %3047 = vmatpush.msra.mxu0 %v3027
    %3048 = vmatmul.f32.gmra.mxu0 %v3030
    %v3049 = vpop.f32.mrf.mxu0
    %v3050 = vadd.f32 0.0, %v3049
    %3051 = vdwg.mxu0
    %3052 = vrot.lane.b32.xlu0 %v2444, 64
    %v3053 = vpop.permute.xlu0 %3052
    %v3056 = vsel %vm598, %v2869, 0
    %3058 = vmatpush.msra.mxu0 0.0
    %3059 = vmatpush.msra.mxu0 0.0
    %3060 = vmatpush.msra.mxu0 0.0
    %3061 = vmatpush.msra.mxu0 0.0
    %3062 = vmatpush.msra.mxu0 0.0
    %3063 = vmatpush.msra.mxu0 0.0
    %3064 = vmatpush.msra.mxu0 0.0
    %3065 = vmatpush.msra.mxu0 0.0
    %3066 = vmatpush.msra.mxu0 0.0
    %3067 = vmatpush.msra.mxu0 0.0
    %3068 = vmatpush.msra.mxu0 0.0
    %3069 = vmatpush.msra.mxu0 0.0
    %3070 = vmatpush.msra.mxu0 0.0
    %3071 = vmatpush.msra.mxu0 0.0
    %3072 = vmatpush.msra.mxu0 0.0
    %3073 = vmatpush.msra.mxu0 %v3053
    %3074 = vmatmul.f32.gmra.mxu0 %v3056
    %v3075 = vpop.f32.mrf.mxu0
    %v3076 = vadd.f32 0.0, %v3075
    %3077 = vdwg.mxu0
    %3078 = vrot.lane.b32.xlu0 %v2423, 112
    %v3079 = vpop.permute.xlu0 %3078
    %3080 = vrot.lane.b32.xlu0 %v2423, 80
    %v3081 = vpop.permute.xlu0 %3080
    %v3082 = vsel %vm344, %v3079, 0
    %v3084 = vsel %vm344, %v3081, 0
    %3086 = vmatpush.xpose.msra.mxu0 0.0
    %3087 = vmatpush.xpose.msra.mxu0 0.0
    %3088 = vmatpush.xpose.msra.mxu0 0.0
    %3089 = vmatpush.xpose.msra.mxu0 0.0
    %3090 = vmatpush.xpose.msra.mxu0 0.0
    %3091 = vmatpush.xpose.msra.mxu0 0.0
    %3092 = vmatpush.xpose.msra.mxu0 0.0
    %3093 = vmatpush.xpose.msra.mxu0 0.0
    %3094 = vmatpush.xpose.msra.mxu0 0.0
    %3095 = vmatpush.xpose.msra.mxu0 0.0
    %3096 = vmatpush.xpose.msra.mxu0 0.0
    %3097 = vmatpush.xpose.msra.mxu0 0.0
    %3098 = vmatpush.xpose.msra.mxu0 0.0
    %3099 = vmatpush.xpose.msra.mxu0 0.0
    %3100 = vmatpush.xpose.msra.mxu0 0.0
    %3101 = vmatpush.xpose.msra.mxu0 %v3084
    %3102 = vmatmul.f32.gmra.mxu0 %v3082
    %v3103 = vpop.f32.mrf.mxu0
    %v3104 = vadd.f32 0.0, %v3103
    %3105 = vdwg.mxu0
    %3106 = vrot.lane.b32.xlu0 %v2426, 112
    %v3107 = vpop.permute.xlu0 %3106
    %3108 = vrot.lane.b32.xlu0 %v2426, 80
    %v3109 = vpop.permute.xlu0 %3108
    %v3110 = vsel %vm344, %v3107, 0
    %v3112 = vsel %vm344, %v3109, 0
    %3114 = vmatpush.xpose.msra.mxu0 0.0
    %3115 = vmatpush.xpose.msra.mxu0 0.0
    %3116 = vmatpush.xpose.msra.mxu0 0.0
    %3117 = vmatpush.xpose.msra.mxu0 0.0
    %3118 = vmatpush.xpose.msra.mxu0 0.0
    %3119 = vmatpush.xpose.msra.mxu0 0.0
    %3120 = vmatpush.xpose.msra.mxu0 0.0
    %3121 = vmatpush.xpose.msra.mxu0 0.0
    %3122 = vmatpush.xpose.msra.mxu0 0.0
    %3123 = vmatpush.xpose.msra.mxu0 0.0
    %3124 = vmatpush.xpose.msra.mxu0 0.0
    %3125 = vmatpush.xpose.msra.mxu0 0.0
    %3126 = vmatpush.xpose.msra.mxu0 0.0
    %3127 = vmatpush.xpose.msra.mxu0 0.0
    %3128 = vmatpush.xpose.msra.mxu0 0.0
    %3129 = vmatpush.xpose.msra.mxu0 %v3112
    %3130 = vmatmul.f32.gmra.mxu0 %v3110
    %v3131 = vpop.f32.mrf.mxu0
    %v3132 = vadd.f32 0.0, %v3131
    %3133 = vdwg.mxu0
    %3134 = vrot.lane.b32.xlu0 %v2429, 112
    %v3135 = vpop.permute.xlu0 %3134
    %3136 = vrot.lane.b32.xlu0 %v2429, 80
    %v3137 = vpop.permute.xlu0 %3136
    %v3138 = vsel %vm344, %v3135, 0
    %v3140 = vsel %vm344, %v3137, 0
    %3142 = vmatpush.xpose.msra.mxu0 0.0
    %3143 = vmatpush.xpose.msra.mxu0 0.0
    %3144 = vmatpush.xpose.msra.mxu0 0.0
    %3145 = vmatpush.xpose.msra.mxu0 0.0
    %3146 = vmatpush.xpose.msra.mxu0 0.0
    %3147 = vmatpush.xpose.msra.mxu0 0.0
    %3148 = vmatpush.xpose.msra.mxu0 0.0
    %3149 = vmatpush.xpose.msra.mxu0 0.0
    %3150 = vmatpush.xpose.msra.mxu0 0.0
    %3151 = vmatpush.xpose.msra.mxu0 0.0
    %3152 = vmatpush.xpose.msra.mxu0 0.0
    %3153 = vmatpush.xpose.msra.mxu0 0.0
    %3154 = vmatpush.xpose.msra.mxu0 0.0
    %3155 = vmatpush.xpose.msra.mxu0 0.0
    %3156 = vmatpush.xpose.msra.mxu0 0.0
    %3157 = vmatpush.xpose.msra.mxu0 %v3140
    %3158 = vmatmul.f32.gmra.mxu0 %v3138
    %v3159 = vpop.f32.mrf.mxu0
    %v3160 = vadd.f32 0.0, %v3159
    %3161 = vdwg.mxu0
    %3162 = vrot.lane.b32.xlu0 %v2432, 112
    %v3163 = vpop.permute.xlu0 %3162
    %3164 = vrot.lane.b32.xlu0 %v2432, 80
    %v3165 = vpop.permute.xlu0 %3164
    %v3166 = vsel %vm344, %v3163, 0
    %v3168 = vsel %vm344, %v3165, 0
    %3170 = vmatpush.xpose.msra.mxu0 0.0
    %3171 = vmatpush.xpose.msra.mxu0 0.0
    %3172 = vmatpush.xpose.msra.mxu0 0.0
    %3173 = vmatpush.xpose.msra.mxu0 0.0
    %3174 = vmatpush.xpose.msra.mxu0 0.0
    %3175 = vmatpush.xpose.msra.mxu0 0.0
    %3176 = vmatpush.xpose.msra.mxu0 0.0
    %3177 = vmatpush.xpose.msra.mxu0 0.0
    %3178 = vmatpush.xpose.msra.mxu0 0.0
    %3179 = vmatpush.xpose.msra.mxu0 0.0
    %3180 = vmatpush.xpose.msra.mxu0 0.0
    %3181 = vmatpush.xpose.msra.mxu0 0.0
    %3182 = vmatpush.xpose.msra.mxu0 0.0
    %3183 = vmatpush.xpose.msra.mxu0 0.0
    %3184 = vmatpush.xpose.msra.mxu0 0.0
    %3185 = vmatpush.xpose.msra.mxu0 %v3168
    %3186 = vmatmul.f32.gmra.mxu0 %v3166
    %v3187 = vpop.f32.mrf.mxu0
    %v3188 = vadd.f32 0.0, %v3187
    %3189 = vdwg.mxu0
    %3190 = vrot.lane.b32.xlu0 %v2435, 112
    %v3191 = vpop.permute.xlu0 %3190
    %3192 = vrot.lane.b32.xlu0 %v2435, 80
    %v3193 = vpop.permute.xlu0 %3192
    %v3194 = vsel %vm344, %v3191, 0
    %v3196 = vsel %vm344, %v3193, 0
    %3198 = vmatpush.xpose.msra.mxu0 0.0
    %3199 = vmatpush.xpose.msra.mxu0 0.0
    %3200 = vmatpush.xpose.msra.mxu0 0.0
    %3201 = vmatpush.xpose.msra.mxu0 0.0
    %3202 = vmatpush.xpose.msra.mxu0 0.0
    %3203 = vmatpush.xpose.msra.mxu0 0.0
    %3204 = vmatpush.xpose.msra.mxu0 0.0
    %3205 = vmatpush.xpose.msra.mxu0 0.0
    %3206 = vmatpush.xpose.msra.mxu0 0.0
    %3207 = vmatpush.xpose.msra.mxu0 0.0
    %3208 = vmatpush.xpose.msra.mxu0 0.0
    %3209 = vmatpush.xpose.msra.mxu0 0.0
    %3210 = vmatpush.xpose.msra.mxu0 0.0
    %3211 = vmatpush.xpose.msra.mxu0 0.0
    %3212 = vmatpush.xpose.msra.mxu0 0.0
    %3213 = vmatpush.xpose.msra.mxu0 %v3196
    %3214 = vmatmul.f32.gmra.mxu0 %v3194
    %v3215 = vpop.f32.mrf.mxu0
    %v3216 = vadd.f32 0.0, %v3215
    %3217 = vdwg.mxu0
    %3218 = vrot.lane.b32.xlu0 %v2438, 112
    %v3219 = vpop.permute.xlu0 %3218
    %3220 = vrot.lane.b32.xlu0 %v2438, 80
    %v3221 = vpop.permute.xlu0 %3220
    %v3222 = vsel %vm344, %v3219, 0
    %v3224 = vsel %vm344, %v3221, 0
    %3226 = vmatpush.xpose.msra.mxu0 0.0
    %3227 = vmatpush.xpose.msra.mxu0 0.0
    %3228 = vmatpush.xpose.msra.mxu0 0.0
    %3229 = vmatpush.xpose.msra.mxu0 0.0
    %3230 = vmatpush.xpose.msra.mxu0 0.0
    %3231 = vmatpush.xpose.msra.mxu0 0.0
    %3232 = vmatpush.xpose.msra.mxu0 0.0
    %3233 = vmatpush.xpose.msra.mxu0 0.0
    %3234 = vmatpush.xpose.msra.mxu0 0.0
    %3235 = vmatpush.xpose.msra.mxu0 0.0
    %3236 = vmatpush.xpose.msra.mxu0 0.0
    %3237 = vmatpush.xpose.msra.mxu0 0.0
    %3238 = vmatpush.xpose.msra.mxu0 0.0
    %3239 = vmatpush.xpose.msra.mxu0 0.0
    %3240 = vmatpush.xpose.msra.mxu0 0.0
    %3241 = vmatpush.xpose.msra.mxu0 %v3224
    %3242 = vmatmul.f32.gmra.mxu0 %v3222
    %v3243 = vpop.f32.mrf.mxu0
    %v3244 = vadd.f32 0.0, %v3243
    %3245 = vdwg.mxu0
    %3246 = vrot.lane.b32.xlu0 %v2441, 112
    %v3247 = vpop.permute.xlu0 %3246
    %3248 = vrot.lane.b32.xlu0 %v2441, 80
    %v3249 = vpop.permute.xlu0 %3248
    %v3250 = vsel %vm344, %v3247, 0
    %v3252 = vsel %vm344, %v3249, 0
    %3254 = vmatpush.xpose.msra.mxu0 0.0
    %3255 = vmatpush.xpose.msra.mxu0 0.0
    %3256 = vmatpush.xpose.msra.mxu0 0.0
    %3257 = vmatpush.xpose.msra.mxu0 0.0
    %3258 = vmatpush.xpose.msra.mxu0 0.0
    %3259 = vmatpush.xpose.msra.mxu0 0.0
    %3260 = vmatpush.xpose.msra.mxu0 0.0
    %3261 = vmatpush.xpose.msra.mxu0 0.0
    %3262 = vmatpush.xpose.msra.mxu0 0.0
    %3263 = vmatpush.xpose.msra.mxu0 0.0
    %3264 = vmatpush.xpose.msra.mxu0 0.0
    %3265 = vmatpush.xpose.msra.mxu0 0.0
    %3266 = vmatpush.xpose.msra.mxu0 0.0
    %3267 = vmatpush.xpose.msra.mxu0 0.0
    %3268 = vmatpush.xpose.msra.mxu0 0.0
    %3269 = vmatpush.xpose.msra.mxu0 %v3252
    %3270 = vmatmul.f32.gmra.mxu0 %v3250
    %v3271 = vpop.f32.mrf.mxu0
    %v3272 = vadd.f32 0.0, %v3271
    %3273 = vdwg.mxu0
    %3274 = vrot.lane.b32.xlu0 %v2444, 112
    %v3275 = vpop.permute.xlu0 %3274
    %3276 = vrot.lane.b32.xlu0 %v2444, 80
    %v3277 = vpop.permute.xlu0 %3276
    %v3278 = vsel %vm344, %v3275, 0
    %v3280 = vsel %vm344, %v3277, 0
    %3282 = vmatpush.xpose.msra.mxu0 0.0
    %3283 = vmatpush.xpose.msra.mxu0 0.0
    %3284 = vmatpush.xpose.msra.mxu0 0.0
    %3285 = vmatpush.xpose.msra.mxu0 0.0
    %3286 = vmatpush.xpose.msra.mxu0 0.0
    %3287 = vmatpush.xpose.msra.mxu0 0.0
    %3288 = vmatpush.xpose.msra.mxu0 0.0
    %3289 = vmatpush.xpose.msra.mxu0 0.0
    %3290 = vmatpush.xpose.msra.mxu0 0.0
    %3291 = vmatpush.xpose.msra.mxu0 0.0
    %3292 = vmatpush.xpose.msra.mxu0 0.0
    %3293 = vmatpush.xpose.msra.mxu0 0.0
    %3294 = vmatpush.xpose.msra.mxu0 0.0
    %3295 = vmatpush.xpose.msra.mxu0 0.0
    %3296 = vmatpush.xpose.msra.mxu0 0.0
    %3297 = vmatpush.xpose.msra.mxu0 %v3280
    %3298 = vmatmul.f32.gmra.mxu0 %v3278
    %v3299 = vpop.f32.mrf.mxu0
    %v3300 = vadd.f32 0.0, %v3299
    %3301 = vdwg.mxu0
    %v3302 = vmul.f32 %v3104, 0.25
    %v3303 = vmul.f32 %v3132, 0.25
    %v3304 = vmul.f32 %v3160, 0.25
    %v3305 = vmul.f32 %v3188, 0.25
    %v3306 = vmul.f32 %v3216, 0.25
    %v3307 = vmul.f32 %v3244, 0.25
    %v3308 = vmul.f32 %v3272, 0.25
    %v3309 = vmul.f32 %v3300, 0.25
    %v3310 = vadd.f32 %v3302, %v574
    %v3311 = vadd.f32 %v3303, %v575
    %v3312 = vadd.f32 %v3304, %v576
    %v3313 = vadd.f32 %v3305, %v577
    %v3314 = vadd.f32 %v3306, %v578
    %v3315 = vadd.f32 %v3307, %v579
    %v3316 = vadd.f32 %v3308, %v580
    %v3317 = vadd.f32 %v3309, %v581
    %v3318 = vsel %vm598, %v3310, -inf
    %3319 = vmax.xlane.f32.xlu0 %v3318
    %v3320 = vpop.xlane.xlu0 %3319
    %v3321 = vsel %vm598, %v3311, -inf
    %3322 = vmax.xlane.f32.xlu0 %v3321
    %v3323 = vpop.xlane.xlu0 %3322
    %v3324 = vsel %vm598, %v3312, -inf
    %3325 = vmax.xlane.f32.xlu0 %v3324
    %v3326 = vpop.xlane.xlu0 %3325
    %v3327 = vsel %vm598, %v3313, -inf
    %3328 = vmax.xlane.f32.xlu0 %v3327
    %v3329 = vpop.xlane.xlu0 %3328
    %v3330 = vsel %vm598, %v3314, -inf
    %3331 = vmax.xlane.f32.xlu0 %v3330
    %v3332 = vpop.xlane.xlu0 %3331
    %v3333 = vsel %vm598, %v3315, -inf
    %3334 = vmax.xlane.f32.xlu0 %v3333
    %v3335 = vpop.xlane.xlu0 %3334
    %v3336 = vsel %vm598, %v3316, -inf
    %3337 = vmax.xlane.f32.xlu0 %v3336
    %v3338 = vpop.xlane.xlu0 %3337
    %v3339 = vsel %vm598, %v3317, -inf
    %3340 = vmax.xlane.f32.xlu0 %v3339
    %v3341 = vpop.xlane.xlu0 %3340
    %v3342 = vsub.f32 %v3310, %v3320
    %v3343 = vsub.f32 %v3311, %v3323
    %v3344 = vsub.f32 %v3312, %v3326
    %v3345 = vsub.f32 %v3313, %v3329
    %v3346 = vsub.f32 %v3314, %v3332
    %v3347 = vsub.f32 %v3315, %v3335
    %v3348 = vsub.f32 %v3316, %v3338
    %v3349 = vsub.f32 %v3317, %v3341
    %v3350 = vmul.f32 %v3342, 1.442695
    %v3351 = vpow.pop %v3350
    %v3352 = vmul.f32 %v3343, 1.442695
    %v3353 = vpow.pop %v3352
    %v3354 = vmul.f32 %v3344, 1.442695
    %v3355 = vpow.pop %v3354
    %v3356 = vmul.f32 %v3345, 1.442695
    %v3357 = vpow.pop %v3356
    %v3358 = vmul.f32 %v3346, 1.442695
    %v3359 = vpow.pop %v3358
    %v3360 = vmul.f32 %v3347, 1.442695
    %v3361 = vpow.pop %v3360
    %v3362 = vmul.f32 %v3348, 1.442695
    %v3363 = vpow.pop %v3362
    %v3364 = vmul.f32 %v3349, 1.442695
    %v3365 = vpow.pop %v3364
    %v3366 = vsel %vm598, %v3351, 0.0
    %3367 = vadd.xlane.f32.xlu0 %v3366
    %v3368 = vpop.xlane.xlu0 %3367
    %v3369 = vsel %vm598, %v3353, 0.0
    %3370 = vadd.xlane.f32.xlu0 %v3369
    %v3371 = vpop.xlane.xlu0 %3370
    %v3372 = vsel %vm598, %v3355, 0.0
    %3373 = vadd.xlane.f32.xlu0 %v3372
    %v3374 = vpop.xlane.xlu0 %3373
    %v3375 = vsel %vm598, %v3357, 0.0
    %3376 = vadd.xlane.f32.xlu0 %v3375
    %v3377 = vpop.xlane.xlu0 %3376
    %v3378 = vsel %vm598, %v3359, 0.0
    %3379 = vadd.xlane.f32.xlu0 %v3378
    %v3380 = vpop.xlane.xlu0 %3379
    %v3381 = vsel %vm598, %v3361, 0.0
    %3382 = vadd.xlane.f32.xlu0 %v3381
    %v3383 = vpop.xlane.xlu0 %3382
    %v3384 = vsel %vm598, %v3363, 0.0
    %3385 = vadd.xlane.f32.xlu0 %v3384
    %v3386 = vpop.xlane.xlu0 %3385
    %v3387 = vsel %vm598, %v3365, 0.0
    %3388 = vadd.xlane.f32.xlu0 %v3387
    %v3389 = vpop.xlane.xlu0 %3388
    %v3390 = vrcp.pop %v3368
    %v3391 = vmul.f32 %v3368, %v3390
    %v3392 = vsub.f32 1.0, %v3391
    %v3393 = vmul.f32 %v3390, %v3392
    %v3394 = vadd.f32 %v3390, %v3393
    %vm3395 = vweird.f32 %v3368
    %vm3396 = vweird.f32 %v3390
    %vm3397 = vmor %vm3395, %vm3396
    %v3398 = vsel %vm3397, %v3390, %v3394
    %v3399 = vand.u32 2147483647, %v3368
    %vm3400 = vcmp.eq.f32.partialorder %v3399, 8.507059e+37
    %v3401 = vand.u32 %v3368, 2147483648
    %v3402 = vor.u32 1.1754944e-38, %v3401
    %v3403 = vsel %vm3400, %v3402, %v3398
    %v3404 = vmul.f32 %v3351, %v3403
    %v3405 = vrcp.pop %v3371
    %v3406 = vmul.f32 %v3371, %v3405
    %v3407 = vsub.f32 1.0, %v3406
    %v3408 = vmul.f32 %v3405, %v3407
    %v3409 = vadd.f32 %v3405, %v3408
    %vm3410 = vweird.f32 %v3371
    %vm3411 = vweird.f32 %v3405
    %vm3412 = vmor %vm3410, %vm3411
    %v3413 = vsel %vm3412, %v3405, %v3409
    %v3414 = vand.u32 2147483647, %v3371
    %vm3415 = vcmp.eq.f32.partialorder %v3414, 8.507059e+37
    %v3416 = vand.u32 %v3371, 2147483648
    %v3417 = vor.u32 1.1754944e-38, %v3416
    %v3418 = vsel %vm3415, %v3417, %v3413
    %v3419 = vmul.f32 %v3353, %v3418
    %v3420 = vrcp.pop %v3374
    %v3421 = vmul.f32 %v3374, %v3420
    %v3422 = vsub.f32 1.0, %v3421
    %v3423 = vmul.f32 %v3420, %v3422
    %v3424 = vadd.f32 %v3420, %v3423
    %vm3425 = vweird.f32 %v3374
    %vm3426 = vweird.f32 %v3420
    %vm3427 = vmor %vm3425, %vm3426
    %v3428 = vsel %vm3427, %v3420, %v3424
    %v3429 = vand.u32 2147483647, %v3374
    %vm3430 = vcmp.eq.f32.partialorder %v3429, 8.507059e+37
    %v3431 = vand.u32 %v3374, 2147483648
    %v3432 = vor.u32 1.1754944e-38, %v3431
    %v3433 = vsel %vm3430, %v3432, %v3428
    %v3434 = vmul.f32 %v3355, %v3433
    %v3435 = vrcp.pop %v3377
    %v3436 = vmul.f32 %v3377, %v3435
    %v3437 = vsub.f32 1.0, %v3436
    %v3438 = vmul.f32 %v3435, %v3437
    %v3439 = vadd.f32 %v3435, %v3438
    %vm3440 = vweird.f32 %v3377
    %vm3441 = vweird.f32 %v3435
    %vm3442 = vmor %vm3440, %vm3441
    %v3443 = vsel %vm3442, %v3435, %v3439
    %v3444 = vand.u32 2147483647, %v3377
    %vm3445 = vcmp.eq.f32.partialorder %v3444, 8.507059e+37
    %v3446 = vand.u32 %v3377, 2147483648
    %v3447 = vor.u32 1.1754944e-38, %v3446
    %v3448 = vsel %vm3445, %v3447, %v3443
    %v3449 = vmul.f32 %v3357, %v3448
    %v3450 = vrcp.pop %v3380
    %v3451 = vmul.f32 %v3380, %v3450
    %v3452 = vsub.f32 1.0, %v3451
    %v3453 = vmul.f32 %v3450, %v3452
    %v3454 = vadd.f32 %v3450, %v3453
    %vm3455 = vweird.f32 %v3380
    %vm3456 = vweird.f32 %v3450
    %vm3457 = vmor %vm3455, %vm3456
    %v3458 = vsel %vm3457, %v3450, %v3454
    %v3459 = vand.u32 2147483647, %v3380
    %vm3460 = vcmp.eq.f32.partialorder %v3459, 8.507059e+37
    %v3461 = vand.u32 %v3380, 2147483648
    %v3462 = vor.u32 1.1754944e-38, %v3461
    %v3463 = vsel %vm3460, %v3462, %v3458
    %v3464 = vmul.f32 %v3359, %v3463
    %v3465 = vrcp.pop %v3383
    %v3466 = vmul.f32 %v3383, %v3465
    %v3467 = vsub.f32 1.0, %v3466
    %v3468 = vmul.f32 %v3465, %v3467
    %v3469 = vadd.f32 %v3465, %v3468
    %vm3470 = vweird.f32 %v3383
    %vm3471 = vweird.f32 %v3465
    %vm3472 = vmor %vm3470, %vm3471
    %v3473 = vsel %vm3472, %v3465, %v3469
    %v3474 = vand.u32 2147483647, %v3383
    %vm3475 = vcmp.eq.f32.partialorder %v3474, 8.507059e+37
    %v3476 = vand.u32 %v3383, 2147483648
    %v3477 = vor.u32 1.1754944e-38, %v3476
    %v3478 = vsel %vm3475, %v3477, %v3473
    %v3479 = vmul.f32 %v3361, %v3478
    %v3480 = vrcp.pop %v3386
    %v3481 = vmul.f32 %v3386, %v3480
    %v3482 = vsub.f32 1.0, %v3481
    %v3483 = vmul.f32 %v3480, %v3482
    %v3484 = vadd.f32 %v3480, %v3483
    %vm3485 = vweird.f32 %v3386
    %vm3486 = vweird.f32 %v3480
    %vm3487 = vmor %vm3485, %vm3486
    %v3488 = vsel %vm3487, %v3480, %v3484
    %v3489 = vand.u32 2147483647, %v3386
    %vm3490 = vcmp.eq.f32.partialorder %v3489, 8.507059e+37
    %v3491 = vand.u32 %v3386, 2147483648
    %v3492 = vor.u32 1.1754944e-38, %v3491
    %v3493 = vsel %vm3490, %v3492, %v3488
    %v3494 = vmul.f32 %v3363, %v3493
    %v3495 = vrcp.pop %v3389
    %v3496 = vmul.f32 %v3389, %v3495
    %v3497 = vsub.f32 1.0, %v3496
    %v3498 = vmul.f32 %v3495, %v3497
    %v3499 = vadd.f32 %v3495, %v3498
    %vm3500 = vweird.f32 %v3389
    %vm3501 = vweird.f32 %v3495
    %vm3502 = vmor %vm3500, %vm3501
    %v3503 = vsel %vm3502, %v3495, %v3499
    %v3504 = vand.u32 2147483647, %v3389
    %vm3505 = vcmp.eq.f32.partialorder %v3504, 8.507059e+37
    %v3506 = vand.u32 %v3389, 2147483648
    %v3507 = vor.u32 1.1754944e-38, %v3506
    %v3508 = vsel %vm3505, %v3507, %v3503
    %v3509 = vmul.f32 %v3365, %v3508
    %3510 = vrot.lane.b32.xlu0 %v2423, 48
    %v3511 = vpop.permute.xlu0 %3510
    %v3514 = vsel %vm598, %v3404, 0
    %3516 = vmatpush.msra.mxu0 0.0
    %3517 = vmatpush.msra.mxu0 0.0
    %3518 = vmatpush.msra.mxu0 0.0
    %3519 = vmatpush.msra.mxu0 0.0
    %3520 = vmatpush.msra.mxu0 0.0
    %3521 = vmatpush.msra.mxu0 0.0
    %3522 = vmatpush.msra.mxu0 0.0
    %3523 = vmatpush.msra.mxu0 0.0
    %3524 = vmatpush.msra.mxu0 0.0
    %3525 = vmatpush.msra.mxu0 0.0
    %3526 = vmatpush.msra.mxu0 0.0
    %3527 = vmatpush.msra.mxu0 0.0
    %3528 = vmatpush.msra.mxu0 0.0
    %3529 = vmatpush.msra.mxu0 0.0
    %3530 = vmatpush.msra.mxu0 0.0
    %3531 = vmatpush.msra.mxu0 %v3511
    %3532 = vmatmul.f32.gmra.mxu0 %v3514
    %v3533 = vpop.f32.mrf.mxu0
    %v3534 = vadd.f32 0.0, %v3533
    %3535 = vdwg.mxu0
    %3536 = vrot.lane.b32.xlu0 %v2426, 48
    %v3537 = vpop.permute.xlu0 %3536
    %v3540 = vsel %vm598, %v3419, 0
    %3542 = vmatpush.msra.mxu0 0.0
    %3543 = vmatpush.msra.mxu0 0.0
    %3544 = vmatpush.msra.mxu0 0.0
    %3545 = vmatpush.msra.mxu0 0.0
    %3546 = vmatpush.msra.mxu0 0.0
    %3547 = vmatpush.msra.mxu0 0.0
    %3548 = vmatpush.msra.mxu0 0.0
    %3549 = vmatpush.msra.mxu0 0.0
    %3550 = vmatpush.msra.mxu0 0.0
    %3551 = vmatpush.msra.mxu0 0.0
    %3552 = vmatpush.msra.mxu0 0.0
    %3553 = vmatpush.msra.mxu0 0.0
    %3554 = vmatpush.msra.mxu0 0.0
    %3555 = vmatpush.msra.mxu0 0.0
    %3556 = vmatpush.msra.mxu0 0.0
    %3557 = vmatpush.msra.mxu0 %v3537
    %3558 = vmatmul.f32.gmra.mxu0 %v3540
    %v3559 = vpop.f32.mrf.mxu0
    %v3560 = vadd.f32 0.0, %v3559
    %3561 = vdwg.mxu0
    %3562 = vrot.lane.b32.xlu0 %v2429, 48
    %v3563 = vpop.permute.xlu0 %3562
    %v3566 = vsel %vm598, %v3434, 0
    %3568 = vmatpush.msra.mxu0 0.0
    %3569 = vmatpush.msra.mxu0 0.0
    %3570 = vmatpush.msra.mxu0 0.0
    %3571 = vmatpush.msra.mxu0 0.0
    %3572 = vmatpush.msra.mxu0 0.0
    %3573 = vmatpush.msra.mxu0 0.0
    %3574 = vmatpush.msra.mxu0 0.0
    %3575 = vmatpush.msra.mxu0 0.0
    %3576 = vmatpush.msra.mxu0 0.0
    %3577 = vmatpush.msra.mxu0 0.0
    %3578 = vmatpush.msra.mxu0 0.0
    %3579 = vmatpush.msra.mxu0 0.0
    %3580 = vmatpush.msra.mxu0 0.0
    %3581 = vmatpush.msra.mxu0 0.0
    %3582 = vmatpush.msra.mxu0 0.0
    %3583 = vmatpush.msra.mxu0 %v3563
    %3584 = vmatmul.f32.gmra.mxu0 %v3566
    %v3585 = vpop.f32.mrf.mxu0
    %v3586 = vadd.f32 0.0, %v3585
    %3587 = vdwg.mxu0
    %3588 = vrot.lane.b32.xlu0 %v2432, 48
    %v3589 = vpop.permute.xlu0 %3588
    %v3592 = vsel %vm598, %v3449, 0
    %3594 = vmatpush.msra.mxu0 0.0
    %3595 = vmatpush.msra.mxu0 0.0
    %3596 = vmatpush.msra.mxu0 0.0
    %3597 = vmatpush.msra.mxu0 0.0
    %3598 = vmatpush.msra.mxu0 0.0
    %3599 = vmatpush.msra.mxu0 0.0
    %3600 = vmatpush.msra.mxu0 0.0
    %3601 = vmatpush.msra.mxu0 0.0
    %3602 = vmatpush.msra.mxu0 0.0
    %3603 = vmatpush.msra.mxu0 0.0
    %3604 = vmatpush.msra.mxu0 0.0
    %3605 = vmatpush.msra.mxu0 0.0
    %3606 = vmatpush.msra.mxu0 0.0
    %3607 = vmatpush.msra.mxu0 0.0
    %3608 = vmatpush.msra.mxu0 0.0
    %3609 = vmatpush.msra.mxu0 %v3589
    %3610 = vmatmul.f32.gmra.mxu0 %v3592
    %v3611 = vpop.f32.mrf.mxu0
    %v3612 = vadd.f32 0.0, %v3611
    %3613 = vdwg.mxu0
    %3614 = vrot.lane.b32.xlu0 %v2435, 48
    %v3615 = vpop.permute.xlu0 %3614
    %v3618 = vsel %vm598, %v3464, 0
    %3620 = vmatpush.msra.mxu0 0.0
    %3621 = vmatpush.msra.mxu0 0.0
    %3622 = vmatpush.msra.mxu0 0.0
    %3623 = vmatpush.msra.mxu0 0.0
    %3624 = vmatpush.msra.mxu0 0.0
    %3625 = vmatpush.msra.mxu0 0.0
    %3626 = vmatpush.msra.mxu0 0.0
    %3627 = vmatpush.msra.mxu0 0.0
    %3628 = vmatpush.msra.mxu0 0.0
    %3629 = vmatpush.msra.mxu0 0.0
    %3630 = vmatpush.msra.mxu0 0.0
    %3631 = vmatpush.msra.mxu0 0.0
    %3632 = vmatpush.msra.mxu0 0.0
    %3633 = vmatpush.msra.mxu0 0.0
    %3634 = vmatpush.msra.mxu0 0.0
    %3635 = vmatpush.msra.mxu0 %v3615
    %3636 = vmatmul.f32.gmra.mxu0 %v3618
    %v3637 = vpop.f32.mrf.mxu0
    %v3638 = vadd.f32 0.0, %v3637
    %3639 = vdwg.mxu0
    %3640 = vrot.lane.b32.xlu0 %v2438, 48
    %v3641 = vpop.permute.xlu0 %3640
    %v3644 = vsel %vm598, %v3479, 0
    %3646 = vmatpush.msra.mxu0 0.0
    %3647 = vmatpush.msra.mxu0 0.0
    %3648 = vmatpush.msra.mxu0 0.0
    %3649 = vmatpush.msra.mxu0 0.0
    %3650 = vmatpush.msra.mxu0 0.0
    %3651 = vmatpush.msra.mxu0 0.0
    %3652 = vmatpush.msra.mxu0 0.0
    %3653 = vmatpush.msra.mxu0 0.0
    %3654 = vmatpush.msra.mxu0 0.0
    %3655 = vmatpush.msra.mxu0 0.0
    %3656 = vmatpush.msra.mxu0 0.0
    %3657 = vmatpush.msra.mxu0 0.0
    %3658 = vmatpush.msra.mxu0 0.0
    %3659 = vmatpush.msra.mxu0 0.0
    %3660 = vmatpush.msra.mxu0 0.0
    %3661 = vmatpush.msra.mxu0 %v3641
    %3662 = vmatmul.f32.gmra.mxu0 %v3644
    %v3663 = vpop.f32.mrf.mxu0
    %v3664 = vadd.f32 0.0, %v3663
    %3665 = vdwg.mxu0
    %3666 = vrot.lane.b32.xlu0 %v2441, 48
    %v3667 = vpop.permute.xlu0 %3666
    %v3670 = vsel %vm598, %v3494, 0
    %3672 = vmatpush.msra.mxu0 0.0
    %3673 = vmatpush.msra.mxu0 0.0
    %3674 = vmatpush.msra.mxu0 0.0
    %3675 = vmatpush.msra.mxu0 0.0
    %3676 = vmatpush.msra.mxu0 0.0
    %3677 = vmatpush.msra.mxu0 0.0
    %3678 = vmatpush.msra.mxu0 0.0
    %3679 = vmatpush.msra.mxu0 0.0
    %3680 = vmatpush.msra.mxu0 0.0
    %3681 = vmatpush.msra.mxu0 0.0
    %3682 = vmatpush.msra.mxu0 0.0
    %3683 = vmatpush.msra.mxu0 0.0
    %3684 = vmatpush.msra.mxu0 0.0
    %3685 = vmatpush.msra.mxu0 0.0
    %3686 = vmatpush.msra.mxu0 0.0
    %3687 = vmatpush.msra.mxu0 %v3667
    %3688 = vmatmul.f32.gmra.mxu0 %v3670
    %v3689 = vpop.f32.mrf.mxu0
    %v3690 = vadd.f32 0.0, %v3689
    %3691 = vdwg.mxu0
    %3692 = vrot.lane.b32.xlu0 %v2444, 48
    %v3693 = vpop.permute.xlu0 %3692
    %v3696 = vsel %vm598, %v3509, 0
    %3698 = vmatpush.msra.mxu0 0.0
    %3699 = vmatpush.msra.mxu0 0.0
    %3700 = vmatpush.msra.mxu0 0.0
    %3701 = vmatpush.msra.mxu0 0.0
    %3702 = vmatpush.msra.mxu0 0.0
    %3703 = vmatpush.msra.mxu0 0.0
    %3704 = vmatpush.msra.mxu0 0.0
    %3705 = vmatpush.msra.mxu0 0.0
    %3706 = vmatpush.msra.mxu0 0.0
    %3707 = vmatpush.msra.mxu0 0.0
    %3708 = vmatpush.msra.mxu0 0.0
    %3709 = vmatpush.msra.mxu0 0.0
    %3710 = vmatpush.msra.mxu0 0.0
    %3711 = vmatpush.msra.mxu0 0.0
    %3712 = vmatpush.msra.mxu0 0.0
    %3713 = vmatpush.msra.mxu0 %v3693
    %3714 = vmatmul.f32.gmra.mxu0 %v3696
    %v3715 = vpop.f32.mrf.mxu0
    %v3716 = vadd.f32 0.0, %v3715
    %3717 = vdwg.mxu0
    %3726 = vrot.lane.b32.xlu0 %v3534, 16
    %v3727 = vpop.permute.xlu0 %3726
    %3728 = vrot.lane.b32.xlu0 %v3560, 16
    %v3729 = vpop.permute.xlu0 %3728
    %3730 = vrot.lane.b32.xlu0 %v3586, 16
    %v3731 = vpop.permute.xlu0 %3730
    %3732 = vrot.lane.b32.xlu0 %v3612, 16
    %v3733 = vpop.permute.xlu0 %3732
    %3734 = vrot.lane.b32.xlu0 %v3638, 16
    %v3735 = vpop.permute.xlu0 %3734
    %3736 = vrot.lane.b32.xlu0 %v3664, 16
    %v3737 = vpop.permute.xlu0 %3736
    %3738 = vrot.lane.b32.xlu0 %v3690, 16
    %v3739 = vpop.permute.xlu0 %3738
    %3740 = vrot.lane.b32.xlu0 %v3716, 16
    %v3741 = vpop.permute.xlu0 %3740
    %v3750 = vsel %vm344, %v2894, %v3727
    %v3751 = vsel %vm344, %v2920, %v3729
    %v3752 = vsel %vm344, %v2946, %v3731
    %v3753 = vsel %vm344, %v2972, %v3733
    %v3754 = vsel %vm344, %v2998, %v3735
    %v3755 = vsel %vm344, %v3024, %v3737
    %v3756 = vsel %vm344, %v3050, %v3739
    %v3757 = vsel %vm344, %v3076, %v3741
    %v3758 = vperm.slane %v2379, 1
    %v3760 = vsel %vm52, %v3750, 0
    %v3763 = vsel %vm52, %v3751, 0
    %v3766 = vsel %vm52, %v3752, 0
    %v3769 = vsel %vm52, %v3753, 0
    %v3772 = vsel %vm52, %v3754, 0
    %v3775 = vsel %vm52, %v3755, 0
    %v3778 = vsel %vm52, %v3756, 0
    %v3781 = vsel %vm52, %v3757, 0
    %3783 = vmatpush.msra.mxu0 0.0
    %3784 = vmatpush.msra.mxu0 0.0
    %3785 = vmatpush.msra.mxu0 0.0
    %3786 = vmatpush.msra.mxu0 0.0
    %3787 = vmatpush.msra.mxu0 0.0
    %3788 = vmatpush.msra.mxu0 0.0
    %3789 = vmatpush.msra.mxu0 0.0
    %3790 = vmatpush.msra.mxu0 0.0
    %3791 = vmatpush.msra.mxu0 0.0
    %3792 = vmatpush.msra.mxu0 0.0
    %3793 = vmatpush.msra.mxu0 0.0
    %3794 = vmatpush.msra.mxu0 0.0
    %3795 = vmatpush.msra.mxu0 %v2363
    %3796 = vmatpush.msra.mxu0 %v2362
    %3797 = vmatpush.msra.mxu0 %v2361
    %3798 = vmatpush.msra.mxu0 %v2360
    %3799 = vmatmul.f32.gmra.mxu0 %v3760
    %v3800 = vpop.f32.mrf.mxu0
    %v3801 = vadd.f32 %v3758, %v3800
    %3802 = vmatmul.f32.gmra.mxu0 %v3763
    %v3803 = vpop.f32.mrf.mxu0
    %v3804 = vadd.f32 %v3758, %v3803
    %3805 = vmatmul.f32.gmra.mxu0 %v3766
    %v3806 = vpop.f32.mrf.mxu0
    %v3807 = vadd.f32 %v3758, %v3806
    %3808 = vmatmul.f32.gmra.mxu0 %v3769
    %v3809 = vpop.f32.mrf.mxu0
    %v3810 = vadd.f32 %v3758, %v3809
    %3811 = vmatmul.f32.gmra.mxu0 %v3772
    %v3812 = vpop.f32.mrf.mxu0
    %v3813 = vadd.f32 %v3758, %v3812
    %3814 = vmatmul.f32.gmra.mxu0 %v3775
    %v3815 = vpop.f32.mrf.mxu0
    %v3816 = vadd.f32 %v3758, %v3815
    %3817 = vmatmul.f32.gmra.mxu0 %v3778
    %v3818 = vpop.f32.mrf.mxu0
    %v3819 = vadd.f32 %v3758, %v3818
    %3820 = vmatmul.f32.gmra.mxu0 %v3781
    %v3821 = vpop.f32.mrf.mxu0
    %v3822 = vadd.f32 %v3758, %v3821
    %3823 = vdwg.mxu0
    %v3824 = vadd.f32 %v2346, %v3801
    %v3825 = vadd.f32 %v2347, %v3804
    %v3826 = vadd.f32 %v2348, %v3807
    %v3827 = vadd.f32 %v2349, %v3810
    %v3828 = vadd.f32 %v2350, %v3813
    %v3829 = vadd.f32 %v2351, %v3816
    %v3830 = vadd.f32 %v2352, %v3819
    %v3831 = vadd.f32 %v2353, %v3822
    %v3832 = vsel %vm52, %v3824, 0.0
    %3833 = vadd.xlane.f32.xlu0 %v3832
    %v3834 = vpop.xlane.xlu0 %3833
    %v3835 = vsel %vm52, %v3825, 0.0
    %3836 = vadd.xlane.f32.xlu0 %v3835
    %v3837 = vpop.xlane.xlu0 %3836
    %v3838 = vsel %vm52, %v3826, 0.0
    %3839 = vadd.xlane.f32.xlu0 %v3838
    %v3840 = vpop.xlane.xlu0 %3839
    %v3841 = vsel %vm52, %v3827, 0.0
    %3842 = vadd.xlane.f32.xlu0 %v3841
    %v3843 = vpop.xlane.xlu0 %3842
    %v3844 = vsel %vm52, %v3828, 0.0
    %3845 = vadd.xlane.f32.xlu0 %v3844
    %v3846 = vpop.xlane.xlu0 %3845
    %v3847 = vsel %vm52, %v3829, 0.0
    %3848 = vadd.xlane.f32.xlu0 %v3847
    %v3849 = vpop.xlane.xlu0 %3848
    %v3850 = vsel %vm52, %v3830, 0.0
    %3851 = vadd.xlane.f32.xlu0 %v3850
    %v3852 = vpop.xlane.xlu0 %3851
    %v3853 = vsel %vm52, %v3831, 0.0
    %3854 = vadd.xlane.f32.xlu0 %v3853
    %v3855 = vpop.xlane.xlu0 %3854
    %v3856 = vmul.f32 %v3834, %v83
    %v3857 = vmul.f32 %v3837, %v83
    %v3858 = vmul.f32 %v3840, %v83
    %v3859 = vmul.f32 %v3843, %v83
    %v3860 = vmul.f32 %v3846, %v83
    %v3861 = vmul.f32 %v3849, %v83
    %v3862 = vmul.f32 %v3852, %v83
    %v3863 = vmul.f32 %v3855, %v83
    %v3864 = vsub.f32 %v3824, %v3856
    %v3865 = vsub.f32 %v3825, %v3857
    %v3866 = vsub.f32 %v3826, %v3858
    %v3867 = vsub.f32 %v3827, %v3859
    %v3868 = vsub.f32 %v3828, %v3860
    %v3869 = vsub.f32 %v3829, %v3861
    %v3870 = vsub.f32 %v3830, %v3862
    %v3871 = vsub.f32 %v3831, %v3863
    %v3872 = vmul.f32 %v3864, %v3864
    %v3873 = vmul.f32 %v3865, %v3865
    %v3874 = vmul.f32 %v3866, %v3866
    %v3875 = vmul.f32 %v3867, %v3867
    %v3876 = vmul.f32 %v3868, %v3868
    %v3877 = vmul.f32 %v3869, %v3869
    %v3878 = vmul.f32 %v3870, %v3870
    %v3879 = vmul.f32 %v3871, %v3871
    %v3880 = vsel %vm52, %v3872, 0.0
    %3881 = vadd.xlane.f32.xlu0 %v3880
    %v3882 = vpop.xlane.xlu0 %3881
    %v3883 = vsel %vm52, %v3873, 0.0
    %3884 = vadd.xlane.f32.xlu0 %v3883
    %v3885 = vpop.xlane.xlu0 %3884
    %v3886 = vsel %vm52, %v3874, 0.0
    %3887 = vadd.xlane.f32.xlu0 %v3886
    %v3888 = vpop.xlane.xlu0 %3887
    %v3889 = vsel %vm52, %v3875, 0.0
    %3890 = vadd.xlane.f32.xlu0 %v3889
    %v3891 = vpop.xlane.xlu0 %3890
    %v3892 = vsel %vm52, %v3876, 0.0
    %3893 = vadd.xlane.f32.xlu0 %v3892
    %v3894 = vpop.xlane.xlu0 %3893
    %v3895 = vsel %vm52, %v3877, 0.0
    %3896 = vadd.xlane.f32.xlu0 %v3895
    %v3897 = vpop.xlane.xlu0 %3896
    %v3898 = vsel %vm52, %v3878, 0.0
    %3899 = vadd.xlane.f32.xlu0 %v3898
    %v3900 = vpop.xlane.xlu0 %3899
    %v3901 = vsel %vm52, %v3879, 0.0
    %3902 = vadd.xlane.f32.xlu0 %v3901
    %v3903 = vpop.xlane.xlu0 %3902
    %v3904 = vmul.f32 %v3882, %v83
    %v3905 = vmul.f32 %v3885, %v83
    %v3906 = vmul.f32 %v3888, %v83
    %v3907 = vmul.f32 %v3891, %v83
    %v3908 = vmul.f32 %v3894, %v83
    %v3909 = vmul.f32 %v3897, %v83
    %v3910 = vmul.f32 %v3900, %v83
    %v3911 = vmul.f32 %v3903, %v83
    %v3912 = vadd.f32 %v3904, 1e-05
    %v3913 = vadd.f32 %v3905, 1e-05
    %v3914 = vadd.f32 %v3906, 1e-05
    %v3915 = vadd.f32 %v3907, 1e-05
    %v3916 = vadd.f32 %v3908, 1e-05
    %v3917 = vadd.f32 %v3909, 1e-05
    %v3918 = vadd.f32 %v3910, 1e-05
    %v3919 = vadd.f32 %v3911, 1e-05
    %v3920 = vrsqrt.pop %v3912
    %v3921 = vmul.f32 %v3920, %v3912
    %v3922 = vmul.f32 %v3921, %v3920
    %v3923 = vmul.f32 0.5, %v3922
    %v3924 = vsub.f32 1.5, %v3923
    %v3925 = vmul.f32 %v3920, %v3924
    %vm3926 = vweird.f32 %v3912
    %vm3927 = vweird.f32 %v3920
    %vm3928 = vmor %vm3926, %vm3927
    %v3929 = vsel %vm3928, %v3920, %v3925
    %v3930 = vrsqrt.pop %v3913
    %v3931 = vmul.f32 %v3930, %v3913
    %v3932 = vmul.f32 %v3931, %v3930
    %v3933 = vmul.f32 0.5, %v3932
    %v3934 = vsub.f32 1.5, %v3933
    %v3935 = vmul.f32 %v3930, %v3934
    %vm3936 = vweird.f32 %v3913
    %vm3937 = vweird.f32 %v3930
    %vm3938 = vmor %vm3936, %vm3937
    %v3939 = vsel %vm3938, %v3930, %v3935
    %v3940 = vrsqrt.pop %v3914
    %v3941 = vmul.f32 %v3940, %v3914
    %v3942 = vmul.f32 %v3941, %v3940
    %v3943 = vmul.f32 0.5, %v3942
    %v3944 = vsub.f32 1.5, %v3943
    %v3945 = vmul.f32 %v3940, %v3944
    %vm3946 = vweird.f32 %v3914
    %vm3947 = vweird.f32 %v3940
    %vm3948 = vmor %vm3946, %vm3947
    %v3949 = vsel %vm3948, %v3940, %v3945
    %v3950 = vrsqrt.pop %v3915
    %v3951 = vmul.f32 %v3950, %v3915
    %v3952 = vmul.f32 %v3951, %v3950
    %v3953 = vmul.f32 0.5, %v3952
    %v3954 = vsub.f32 1.5, %v3953
    %v3955 = vmul.f32 %v3950, %v3954
    %vm3956 = vweird.f32 %v3915
    %vm3957 = vweird.f32 %v3950
    %vm3958 = vmor %vm3956, %vm3957
    %v3959 = vsel %vm3958, %v3950, %v3955
    %v3960 = vrsqrt.pop %v3916
    %v3961 = vmul.f32 %v3960, %v3916
    %v3962 = vmul.f32 %v3961, %v3960
    %v3963 = vmul.f32 0.5, %v3962
    %v3964 = vsub.f32 1.5, %v3963
    %v3965 = vmul.f32 %v3960, %v3964
    %vm3966 = vweird.f32 %v3916
    %vm3967 = vweird.f32 %v3960
    %vm3968 = vmor %vm3966, %vm3967
    %v3969 = vsel %vm3968, %v3960, %v3965
    %v3970 = vrsqrt.pop %v3917
    %v3971 = vmul.f32 %v3970, %v3917
    %v3972 = vmul.f32 %v3971, %v3970
    %v3973 = vmul.f32 0.5, %v3972
    %v3974 = vsub.f32 1.5, %v3973
    %v3975 = vmul.f32 %v3970, %v3974
    %vm3976 = vweird.f32 %v3917
    %vm3977 = vweird.f32 %v3970
    %vm3978 = vmor %vm3976, %vm3977
    %v3979 = vsel %vm3978, %v3970, %v3975
    %v3980 = vrsqrt.pop %v3918
    %v3981 = vmul.f32 %v3980, %v3918
    %v3982 = vmul.f32 %v3981, %v3980
    %v3983 = vmul.f32 0.5, %v3982
    %v3984 = vsub.f32 1.5, %v3983
    %v3985 = vmul.f32 %v3980, %v3984
    %vm3986 = vweird.f32 %v3918
    %vm3987 = vweird.f32 %v3980
    %vm3988 = vmor %vm3986, %vm3987
    %v3989 = vsel %vm3988, %v3980, %v3985
    %v3990 = vrsqrt.pop %v3919
    %v3991 = vmul.f32 %v3990, %v3919
    %v3992 = vmul.f32 %v3991, %v3990
    %v3993 = vmul.f32 0.5, %v3992
    %v3994 = vsub.f32 1.5, %v3993
    %v3995 = vmul.f32 %v3990, %v3994
    %vm3996 = vweird.f32 %v3919
    %vm3997 = vweird.f32 %v3990
    %vm3998 = vmor %vm3996, %vm3997
    %v3999 = vsel %vm3998, %v3990, %v3995
    %v4000 = vmul.f32 %v3864, %v3929
    %v4001 = vmul.f32 %v3865, %v3939
    %v4002 = vmul.f32 %v3866, %v3949
    %v4003 = vmul.f32 %v3867, %v3959
    %v4004 = vmul.f32 %v3868, %v3969
    %v4005 = vmul.f32 %v3869, %v3979
    %v4006 = vmul.f32 %v3870, %v3989
    %v4007 = vmul.f32 %v3871, %v3999
    %v4008 = vperm.slane %v2379, 2
    %v4009 = vmul.f32 %v4000, %v4008
    %v4010 = vmul.f32 %v4001, %v4008
    %v4011 = vmul.f32 %v4002, %v4008
    %v4012 = vmul.f32 %v4003, %v4008
    %v4013 = vmul.f32 %v4004, %v4008
    %v4014 = vmul.f32 %v4005, %v4008
    %v4015 = vmul.f32 %v4006, %v4008
    %v4016 = vmul.f32 %v4007, %v4008
    %v4017 = vperm.slane %v2379, 3
    %v4018 = vadd.f32 %v4009, %v4017
    %v4019 = vadd.f32 %v4010, %v4017
    %v4020 = vadd.f32 %v4011, %v4017
    %v4021 = vadd.f32 %v4012, %v4017
    %v4022 = vadd.f32 %v4013, %v4017
    %v4023 = vadd.f32 %v4014, %v4017
    %v4024 = vadd.f32 %v4015, %v4017
    %v4025 = vadd.f32 %v4016, %v4017
    %v4026 = vperm.slane %v2379, 4
    %v4028 = vsel %vm52, %v4018, 0
    %v4031 = vsel %vm52, %v4019, 0
    %v4034 = vsel %vm52, %v4020, 0
    %v4037 = vsel %vm52, %v4021, 0
    %v4040 = vsel %vm52, %v4022, 0
    %v4043 = vsel %vm52, %v4023, 0
    %v4046 = vsel %vm52, %v4024, 0
    %v4049 = vsel %vm52, %v4025, 0
    %4051 = vmatpush.msra.mxu0 0.0
    %4052 = vmatpush.msra.mxu0 0.0
    %4053 = vmatpush.msra.mxu0 0.0
    %4054 = vmatpush.msra.mxu0 0.0
    %4055 = vmatpush.msra.mxu0 0.0
    %4056 = vmatpush.msra.mxu0 0.0
    %4057 = vmatpush.msra.mxu0 0.0
    %4058 = vmatpush.msra.mxu0 0.0
    %4059 = vmatpush.msra.mxu0 0.0
    %4060 = vmatpush.msra.mxu0 0.0
    %4061 = vmatpush.msra.mxu0 0.0
    %4062 = vmatpush.msra.mxu0 0.0
    %4063 = vmatpush.msra.mxu0 %v2368
    %4064 = vmatpush.msra.mxu0 %v2367
    %4065 = vmatpush.msra.mxu0 %v2366
    %4066 = vmatpush.msra.mxu0 %v2365
    %4067 = vmatmul.f32.gmra.mxu0 %v4028
    %v4068 = vpop.f32.mrf.mxu0
    %v4069 = vadd.f32 %v4026, %v4068
    %4070 = vmatmul.f32.gmra.mxu0 %v4031
    %v4071 = vpop.f32.mrf.mxu0
    %v4072 = vadd.f32 %v4026, %v4071
    %4073 = vmatmul.f32.gmra.mxu0 %v4034
    %v4074 = vpop.f32.mrf.mxu0
    %v4075 = vadd.f32 %v4026, %v4074
    %4076 = vmatmul.f32.gmra.mxu0 %v4037
    %v4077 = vpop.f32.mrf.mxu0
    %v4078 = vadd.f32 %v4026, %v4077
    %4079 = vmatmul.f32.gmra.mxu0 %v4040
    %v4080 = vpop.f32.mrf.mxu0
    %v4081 = vadd.f32 %v4026, %v4080
    %4082 = vmatmul.f32.gmra.mxu0 %v4043
    %v4083 = vpop.f32.mrf.mxu0
    %v4084 = vadd.f32 %v4026, %v4083
    %4085 = vmatmul.f32.gmra.mxu0 %v4046
    %v4086 = vpop.f32.mrf.mxu0
    %v4087 = vadd.f32 %v4026, %v4086
    %4088 = vmatmul.f32.gmra.mxu0 %v4049
    %v4089 = vpop.f32.mrf.mxu0
    %v4090 = vadd.f32 %v4026, %v4089
    %4091 = vdwg.mxu0
    %v4092 = vmul.f32 %v4069, %v4069
    %v4093 = vmul.f32 %v4072, %v4072
    %v4094 = vmul.f32 %v4075, %v4075
    %v4095 = vmul.f32 %v4078, %v4078
    %v4096 = vmul.f32 %v4081, %v4081
    %v4097 = vmul.f32 %v4084, %v4084
    %v4098 = vmul.f32 %v4087, %v4087
    %v4099 = vmul.f32 %v4090, %v4090
    %v4100 = vmul.f32 %v4069, %v4092
    %v4101 = vmul.f32 %v4072, %v4093
    %v4102 = vmul.f32 %v4075, %v4094
    %v4103 = vmul.f32 %v4078, %v4095
    %v4104 = vmul.f32 %v4081, %v4096
    %v4105 = vmul.f32 %v4084, %v4097
    %v4106 = vmul.f32 %v4087, %v4098
    %v4107 = vmul.f32 %v4090, %v4099
    %v4108 = vmul.f32 %v4100, 0.044715
    %v4109 = vmul.f32 %v4101, 0.044715
    %v4110 = vmul.f32 %v4102, 0.044715
    %v4111 = vmul.f32 %v4103, 0.044715
    %v4112 = vmul.f32 %v4104, 0.044715
    %v4113 = vmul.f32 %v4105, 0.044715
    %v4114 = vmul.f32 %v4106, 0.044715
    %v4115 = vmul.f32 %v4107, 0.044715
    %v4116 = vadd.f32 %v4069, %v4108
    %v4117 = vadd.f32 %v4072, %v4109
    %v4118 = vadd.f32 %v4075, %v4110
    %v4119 = vadd.f32 %v4078, %v4111
    %v4120 = vadd.f32 %v4081, %v4112
    %v4121 = vadd.f32 %v4084, %v4113
    %v4122 = vadd.f32 %v4087, %v4114
    %v4123 = vadd.f32 %v4090, %v4115
    %v4124 = vmul.f32 %v4116, 0.7978846
    %v4125 = vmul.f32 %v4117, 0.7978846
    %v4126 = vmul.f32 %v4118, 0.7978846
    %v4127 = vmul.f32 %v4119, 0.7978846
    %v4128 = vmul.f32 %v4120, 0.7978846
    %v4129 = vmul.f32 %v4121, 0.7978846
    %v4130 = vmul.f32 %v4122, 0.7978846
    %v4131 = vmul.f32 %v4123, 0.7978846
    %v4132 = vtanh.pop %v4124
    %v4133 = vtanh.pop %v4125
    %v4134 = vtanh.pop %v4126
    %v4135 = vtanh.pop %v4127
    %v4136 = vtanh.pop %v4128
    %v4137 = vtanh.pop %v4129
    %v4138 = vtanh.pop %v4130
    %v4139 = vtanh.pop %v4131
    %v4140 = vadd.f32 %v4132, 1.0
    %v4141 = vadd.f32 %v4133, 1.0
    %v4142 = vadd.f32 %v4134, 1.0
    %v4143 = vadd.f32 %v4135, 1.0
    %v4144 = vadd.f32 %v4136, 1.0
    %v4145 = vadd.f32 %v4137, 1.0
    %v4146 = vadd.f32 %v4138, 1.0
    %v4147 = vadd.f32 %v4139, 1.0
    %v4148 = vmul.f32 %v4140, 0.5
    %v4149 = vmul.f32 %v4141, 0.5
    %v4150 = vmul.f32 %v4142, 0.5
    %v4151 = vmul.f32 %v4143, 0.5
    %v4152 = vmul.f32 %v4144, 0.5
    %v4153 = vmul.f32 %v4145, 0.5
    %v4154 = vmul.f32 %v4146, 0.5
    %v4155 = vmul.f32 %v4147, 0.5
    %v4156 = vmul.f32 %v4069, %v4148
    %v4157 = vmul.f32 %v4072, %v4149
    %v4158 = vmul.f32 %v4075, %v4150
    %v4159 = vmul.f32 %v4078, %v4151
    %v4160 = vmul.f32 %v4081, %v4152
    %v4161 = vmul.f32 %v4084, %v4153
    %v4162 = vmul.f32 %v4087, %v4154
    %v4163 = vmul.f32 %v4090, %v4155
    %v4164 = vperm.slane %v2379, 5
    %v4166 = vsel %vm2086, %v4156, 0
    %v4169 = vsel %vm2086, %v4157, 0
    %v4172 = vsel %vm2086, %v4158, 0
    %v4175 = vsel %vm2086, %v4159, 0
    %v4178 = vsel %vm2086, %v4160, 0
    %v4181 = vsel %vm2086, %v4161, 0
    %v4184 = vsel %vm2086, %v4162, 0
    %v4187 = vsel %vm2086, %v4163, 0
    %4189 = vmatpush.msra.mxu0 0.0
    %4190 = vmatpush.msra.mxu0 0.0
    %4191 = vmatpush.msra.mxu0 0.0
    %4192 = vmatpush.msra.mxu0 0.0
    %4193 = vmatpush.msra.mxu0 0.0
    %4194 = vmatpush.msra.mxu0 0.0
    %4195 = vmatpush.msra.mxu0 0.0
    %4196 = vmatpush.msra.mxu0 0.0
    %4197 = vmatpush.msra.mxu0 %v2377
    %4198 = vmatpush.msra.mxu0 %v2376
    %4199 = vmatpush.msra.mxu0 %v2375
    %4200 = vmatpush.msra.mxu0 %v2374
    %4201 = vmatpush.msra.mxu0 %v2373
    %4202 = vmatpush.msra.mxu0 %v2372
    %4203 = vmatpush.msra.mxu0 %v2371
    %4204 = vmatpush.msra.mxu0 %v2370
    %4205 = vmatmul.f32.gmra.mxu0 %v4166
    %v4206 = vpop.f32.mrf.mxu0
    %v4207 = vadd.f32 %v4164, %v4206
    %4208 = vmatmul.f32.gmra.mxu0 %v4169
    %v4209 = vpop.f32.mrf.mxu0
    %v4210 = vadd.f32 %v4164, %v4209
    %4211 = vmatmul.f32.gmra.mxu0 %v4172
    %v4212 = vpop.f32.mrf.mxu0
    %v4213 = vadd.f32 %v4164, %v4212
    %4214 = vmatmul.f32.gmra.mxu0 %v4175
    %v4215 = vpop.f32.mrf.mxu0
    %v4216 = vadd.f32 %v4164, %v4215
    %4217 = vmatmul.f32.gmra.mxu0 %v4178
    %v4218 = vpop.f32.mrf.mxu0
    %v4219 = vadd.f32 %v4164, %v4218
    %4220 = vmatmul.f32.gmra.mxu0 %v4181
    %v4221 = vpop.f32.mrf.mxu0
    %v4222 = vadd.f32 %v4164, %v4221
    %4223 = vmatmul.f32.gmra.mxu0 %v4184
    %v4224 = vpop.f32.mrf.mxu0
    %v4225 = vadd.f32 %v4164, %v4224
    %4226 = vmatmul.f32.gmra.mxu0 %v4187
    %v4227 = vpop.f32.mrf.mxu0
    %v4228 = vadd.f32 %v4164, %v4227
    %4229 = vdwg.mxu0
    %v4230 = vadd.f32 %v4018, %v4207
    %v4231 = vadd.f32 %v4019, %v4210
    %v4232 = vadd.f32 %v4020, %v4213
    %v4233 = vadd.f32 %v4021, %v4216
    %v4234 = vadd.f32 %v4022, %v4219
    %v4235 = vadd.f32 %v4023, %v4222
    %v4236 = vadd.f32 %v4024, %v4225
    %v4237 = vadd.f32 %v4025, %v4228
    %v4238 = vsel %vm52, %v4230, 0.0
    %4239 = vadd.xlane.f32.xlu0 %v4238
    %v4240 = vpop.xlane.xlu0 %4239
    %v4241 = vsel %vm52, %v4231, 0.0
    %4242 = vadd.xlane.f32.xlu0 %v4241
    %v4243 = vpop.xlane.xlu0 %4242
    %v4244 = vsel %vm52, %v4232, 0.0
    %4245 = vadd.xlane.f32.xlu0 %v4244
    %v4246 = vpop.xlane.xlu0 %4245
    %v4247 = vsel %vm52, %v4233, 0.0
    %4248 = vadd.xlane.f32.xlu0 %v4247
    %v4249 = vpop.xlane.xlu0 %4248
    %v4250 = vsel %vm52, %v4234, 0.0
    %4251 = vadd.xlane.f32.xlu0 %v4250
    %v4252 = vpop.xlane.xlu0 %4251
    %v4253 = vsel %vm52, %v4235, 0.0
    %4254 = vadd.xlane.f32.xlu0 %v4253
    %v4255 = vpop.xlane.xlu0 %4254
    %v4256 = vsel %vm52, %v4236, 0.0
    %4257 = vadd.xlane.f32.xlu0 %v4256
    %v4258 = vpop.xlane.xlu0 %4257
    %v4259 = vsel %vm52, %v4237, 0.0
    %4260 = vadd.xlane.f32.xlu0 %v4259
    %v4261 = vpop.xlane.xlu0 %4260
    %v4262 = vmul.f32 %v4240, %v83
    %v4263 = vmul.f32 %v4243, %v83
    %v4264 = vmul.f32 %v4246, %v83
    %v4265 = vmul.f32 %v4249, %v83
    %v4266 = vmul.f32 %v4252, %v83
    %v4267 = vmul.f32 %v4255, %v83
    %v4268 = vmul.f32 %v4258, %v83
    %v4269 = vmul.f32 %v4261, %v83
    %v4270 = vsub.f32 %v4230, %v4262
    %v4271 = vsub.f32 %v4231, %v4263
    %v4272 = vsub.f32 %v4232, %v4264
    %v4273 = vsub.f32 %v4233, %v4265
    %v4274 = vsub.f32 %v4234, %v4266
    %v4275 = vsub.f32 %v4235, %v4267
    %v4276 = vsub.f32 %v4236, %v4268
    %v4277 = vsub.f32 %v4237, %v4269
    %v4278 = vmul.f32 %v4270, %v4270
    %v4279 = vmul.f32 %v4271, %v4271
    %v4280 = vmul.f32 %v4272, %v4272
    %v4281 = vmul.f32 %v4273, %v4273
    %v4282 = vmul.f32 %v4274, %v4274
    %v4283 = vmul.f32 %v4275, %v4275
    %v4284 = vmul.f32 %v4276, %v4276
    %v4285 = vmul.f32 %v4277, %v4277
    %v4286 = vsel %vm52, %v4278, 0.0
    %4287 = vadd.xlane.f32.xlu0 %v4286
    %v4288 = vpop.xlane.xlu0 %4287
    %v4289 = vsel %vm52, %v4279, 0.0
    %4290 = vadd.xlane.f32.xlu0 %v4289
    %v4291 = vpop.xlane.xlu0 %4290
    %v4292 = vsel %vm52, %v4280, 0.0
    %4293 = vadd.xlane.f32.xlu0 %v4292
    %v4294 = vpop.xlane.xlu0 %4293
    %v4295 = vsel %vm52, %v4281, 0.0
    %4296 = vadd.xlane.f32.xlu0 %v4295
    %v4297 = vpop.xlane.xlu0 %4296
    %v4298 = vsel %vm52, %v4282, 0.0
    %4299 = vadd.xlane.f32.xlu0 %v4298
    %v4300 = vpop.xlane.xlu0 %4299
    %v4301 = vsel %vm52, %v4283, 0.0
    %4302 = vadd.xlane.f32.xlu0 %v4301
    %v4303 = vpop.xlane.xlu0 %4302
    %v4304 = vsel %vm52, %v4284, 0.0
    %4305 = vadd.xlane.f32.xlu0 %v4304
    %v4306 = vpop.xlane.xlu0 %4305
    %v4307 = vsel %vm52, %v4285, 0.0
    %4308 = vadd.xlane.f32.xlu0 %v4307
    %v4309 = vpop.xlane.xlu0 %4308
    %v4310 = vmul.f32 %v4288, %v83
    %v4311 = vmul.f32 %v4291, %v83
    %v4312 = vmul.f32 %v4294, %v83
    %v4313 = vmul.f32 %v4297, %v83
    %v4314 = vmul.f32 %v4300, %v83
    %v4315 = vmul.f32 %v4303, %v83
    %v4316 = vmul.f32 %v4306, %v83
    %v4317 = vmul.f32 %v4309, %v83
    %v4318 = vadd.f32 %v4310, 1e-05
    %v4319 = vadd.f32 %v4311, 1e-05
    %v4320 = vadd.f32 %v4312, 1e-05
    %v4321 = vadd.f32 %v4313, 1e-05
    %v4322 = vadd.f32 %v4314, 1e-05
    %v4323 = vadd.f32 %v4315, 1e-05
    %v4324 = vadd.f32 %v4316, 1e-05
    %v4325 = vadd.f32 %v4317, 1e-05
    %v4326 = vrsqrt.pop %v4318
    %v4327 = vmul.f32 %v4326, %v4318
    %v4328 = vmul.f32 %v4327, %v4326
    %v4329 = vmul.f32 0.5, %v4328
    %v4330 = vsub.f32 1.5, %v4329
    %v4331 = vmul.f32 %v4326, %v4330
    %vm4332 = vweird.f32 %v4318
    %vm4333 = vweird.f32 %v4326
    %vm4334 = vmor %vm4332, %vm4333
    %v4335 = vsel %vm4334, %v4326, %v4331
    %v4336 = vrsqrt.pop %v4319
    %v4337 = vmul.f32 %v4336, %v4319
    %v4338 = vmul.f32 %v4337, %v4336
    %v4339 = vmul.f32 0.5, %v4338
    %v4340 = vsub.f32 1.5, %v4339
    %v4341 = vmul.f32 %v4336, %v4340
    %vm4342 = vweird.f32 %v4319
    %vm4343 = vweird.f32 %v4336
    %vm4344 = vmor %vm4342, %vm4343
    %v4345 = vsel %vm4344, %v4336, %v4341
    %v4346 = vrsqrt.pop %v4320
    %v4347 = vmul.f32 %v4346, %v4320
    %v4348 = vmul.f32 %v4347, %v4346
    %v4349 = vmul.f32 0.5, %v4348
    %v4350 = vsub.f32 1.5, %v4349
    %v4351 = vmul.f32 %v4346, %v4350
    %vm4352 = vweird.f32 %v4320
    %vm4353 = vweird.f32 %v4346
    %vm4354 = vmor %vm4352, %vm4353
    %v4355 = vsel %vm4354, %v4346, %v4351
    %v4356 = vrsqrt.pop %v4321
    %v4357 = vmul.f32 %v4356, %v4321
    %v4358 = vmul.f32 %v4357, %v4356
    %v4359 = vmul.f32 0.5, %v4358
    %v4360 = vsub.f32 1.5, %v4359
    %v4361 = vmul.f32 %v4356, %v4360
    %vm4362 = vweird.f32 %v4321
    %vm4363 = vweird.f32 %v4356
    %vm4364 = vmor %vm4362, %vm4363
    %v4365 = vsel %vm4364, %v4356, %v4361
    %v4366 = vrsqrt.pop %v4322
    %v4367 = vmul.f32 %v4366, %v4322
    %v4368 = vmul.f32 %v4367, %v4366
    %v4369 = vmul.f32 0.5, %v4368
    %v4370 = vsub.f32 1.5, %v4369
    %v4371 = vmul.f32 %v4366, %v4370
    %vm4372 = vweird.f32 %v4322
    %vm4373 = vweird.f32 %v4366
    %vm4374 = vmor %vm4372, %vm4373
    %v4375 = vsel %vm4374, %v4366, %v4371
    %v4376 = vrsqrt.pop %v4323
    %v4377 = vmul.f32 %v4376, %v4323
    %v4378 = vmul.f32 %v4377, %v4376
    %v4379 = vmul.f32 0.5, %v4378
    %v4380 = vsub.f32 1.5, %v4379
    %v4381 = vmul.f32 %v4376, %v4380
    %vm4382 = vweird.f32 %v4323
    %vm4383 = vweird.f32 %v4376
    %vm4384 = vmor %vm4382, %vm4383
    %v4385 = vsel %vm4384, %v4376, %v4381
    %v4386 = vrsqrt.pop %v4324
    %v4387 = vmul.f32 %v4386, %v4324
    %v4388 = vmul.f32 %v4387, %v4386
    %v4389 = vmul.f32 0.5, %v4388
    %v4390 = vsub.f32 1.5, %v4389
    %v4391 = vmul.f32 %v4386, %v4390
    %vm4392 = vweird.f32 %v4324
    %vm4393 = vweird.f32 %v4386
    %vm4394 = vmor %vm4392, %vm4393
    %v4395 = vsel %vm4394, %v4386, %v4391
    %v4396 = vrsqrt.pop %v4325
    %v4397 = vmul.f32 %v4396, %v4325
    %v4398 = vmul.f32 %v4397, %v4396
    %v4399 = vmul.f32 0.5, %v4398
    %v4400 = vsub.f32 1.5, %v4399
    %v4401 = vmul.f32 %v4396, %v4400
    %vm4402 = vweird.f32 %v4325
    %vm4403 = vweird.f32 %v4396
    %vm4404 = vmor %vm4402, %vm4403
    %v4405 = vsel %vm4404, %v4396, %v4401
    %v4406 = vmul.f32 %v4270, %v4335
    %v4407 = vmul.f32 %v4271, %v4345
    %v4408 = vmul.f32 %v4272, %v4355
    %v4409 = vmul.f32 %v4273, %v4365
    %v4410 = vmul.f32 %v4274, %v4375
    %v4411 = vmul.f32 %v4275, %v4385
    %v4412 = vmul.f32 %v4276, %v4395
    %v4413 = vmul.f32 %v4277, %v4405
    %v4414 = vperm.slane %v2379, 6
    %v4415 = vmul.f32 %v4406, %v4414
    %v4416 = vmul.f32 %v4407, %v4414
    %v4417 = vmul.f32 %v4408, %v4414
    %v4418 = vmul.f32 %v4409, %v4414
    %v4419 = vmul.f32 %v4410, %v4414
    %v4420 = vmul.f32 %v4411, %v4414
    %v4421 = vmul.f32 %v4412, %v4414
    %v4422 = vmul.f32 %v4413, %v4414
    %v4423 = vperm.slane %v2379, 7
    %v4424 = vadd.f32 %v4415, %v4423
    %v4425 = vadd.f32 %v4416, %v4423
    %v4426 = vadd.f32 %v4417, %v4423
    %v4427 = vadd.f32 %v4418, %v4423
    %v4428 = vadd.f32 %v4419, %v4423
    %v4429 = vadd.f32 %v4420, %v4423
    %v4430 = vadd.f32 %v4421, %v4423
    %v4431 = vadd.f32 %v4422, %v4423
    %v4432 = vlaneseq
    %v4433 = vshrl.u32 %v4432, 7
    %v4434 = vlaneseq
    %v4435 = vand.u32 %v4434, 127
    %v4436 = vmul.u32 %v4433, 8
    %vm4437 = vcmp.eq.s32.totalorder %v4435, %v4436
    %v4438 = vsel %vm4437, 1, 0
    %v4439 = vcvt.s32.f32 %v4438
    %v4441 = vsel %vm2086, %v4439, 0
    %4443 = vmatpush.msra.mxu0 0.0
    %4444 = vmatpush.msra.mxu0 0.0
    %4445 = vmatpush.msra.mxu0 0.0
    %4446 = vmatpush.msra.mxu0 0.0
    %4447 = vmatpush.msra.mxu0 0.0
    %4448 = vmatpush.msra.mxu0 0.0
    %4449 = vmatpush.msra.mxu0 0.0
    %4450 = vmatpush.msra.mxu0 0.0
    %4451 = vmatpush.msra.mxu0 %v4431
    %4452 = vmatpush.msra.mxu0 %v4430
    %4453 = vmatpush.msra.mxu0 %v4429
    %4454 = vmatpush.msra.mxu0 %v4428
    %4455 = vmatpush.msra.mxu0 %v4427
    %4456 = vmatpush.msra.mxu0 %v4426
    %4457 = vmatpush.msra.mxu0 %v4425
    %4458 = vmatpush.msra.mxu0 %v4424
    %4459 = vmatmul.f32.gmra.mxu0 %v4441
    %v4460 = vpop.f32.mrf.mxu0
    %v4461 = vadd.f32 0.0, %v4460
    %4462 = vdwg.mxu0
    %v4463 = vld [vmem:[%s9] sm:$0xff]
    %v4464 = vld [vmem:[%s9 + $0x8] sm:$0xff]
    %v4465 = vld [vmem:[%s9 + $0x10] sm:$0xff]
    %v4466 = vld [vmem:[%s9 + $0x18] sm:$0xff]
    %v4467 = vperm.slane %v42, 2
    %v4469 = vsel %vm52, %v4461, 0
    %4471 = vmatpush.msra.mxu0 0.0
    %4472 = vmatpush.msra.mxu0 0.0
    %4473 = vmatpush.msra.mxu0 0.0
    %4474 = vmatpush.msra.mxu0 0.0
    %4475 = vmatpush.msra.mxu0 0.0
    %4476 = vmatpush.msra.mxu0 0.0
    %4477 = vmatpush.msra.mxu0 0.0
    %4478 = vmatpush.msra.mxu0 0.0
    %4479 = vmatpush.msra.mxu0 0.0
    %4480 = vmatpush.msra.mxu0 0.0
    %4481 = vmatpush.msra.mxu0 0.0
    %4482 = vmatpush.msra.mxu0 0.0
    %4483 = vmatpush.msra.mxu0 %v4466
    %4484 = vmatpush.msra.mxu0 %v4465
    %4485 = vmatpush.msra.mxu0 %v4464
    %4486 = vmatpush.msra.mxu0 %v4463
    %4487 = vmatmul.f32.gmra.mxu0 %v4469
    %v4488 = vpop.f32.mrf.mxu0
    %v4489 = vadd.f32 %v4467, %v4488
    %4490 = vdwg.mxu0
    %v4491 = vtanh.pop %v4489
    %v4492 = vld [vmem:[%s10] sm:$0xff]
    %v4493 = vld [vmem:[%s10 + $0x8] sm:$0xff]
    %v4494 = vld [vmem:[%s10 + $0x10] sm:$0xff]
    %v4495 = vld [vmem:[%s10 + $0x18] sm:$0xff]
    %v4496 = vperm.slane %v42, 3
    %v4498 = vsel %vm52, %v4491, 0
    %4500 = vmatpush.msra.mxu0 0.0
    %4501 = vmatpush.msra.mxu0 0.0
    %4502 = vmatpush.msra.mxu0 0.0
    %4503 = vmatpush.msra.mxu0 0.0
    %4504 = vmatpush.msra.mxu0 0.0
    %4505 = vmatpush.msra.mxu0 0.0
    %4506 = vmatpush.msra.mxu0 0.0
    %4507 = vmatpush.msra.mxu0 0.0
    %4508 = vmatpush.msra.mxu0 0.0
    %4509 = vmatpush.msra.mxu0 0.0
    %4510 = vmatpush.msra.mxu0 0.0
    %4511 = vmatpush.msra.mxu0 0.0
    %4512 = vmatpush.msra.mxu0 %v4495
    %4513 = vmatpush.msra.mxu0 %v4494
    %4514 = vmatpush.msra.mxu0 %v4493
    %4515 = vmatpush.msra.mxu0 %v4492
    %4516 = vmatmul.f32.gmra.mxu0 %v4498
    %v4517 = vpop.f32.mrf.mxu0
    %v4518 = vadd.f32 %v4496, %v4517
    %4519 = vdwg.mxu0
    %4520 = vst [vmem:[#allocation2] sm:$0xff] %v4518
    %vm4521 = vcmp.lt.s32.totalorder %v4435, 5
    %v4522 = vsel %vm4521, %v4518, -1e+30
    %4523 = vmax.xlane.f32.xlu0 %v4522
    %v4524 = vpop.xlane.xlu0 %4523
    %v4525 = vsub.f32 %v4522, %v4524
    %v4526 = vmul.f32 %v4525, 1.442695
    %v4527 = vpow.pop %v4526
    %v4528 = vsel %vm4521, %v4527, 0.0
    %4529 = vadd.xlane.f32.xlu0 %v4528
    %v4530 = vpop.xlane.xlu0 %4529
    %v4531 = vlog2.pop %v4530
    %v4532 = vmul.f32 %v4531, 0.6931472
    %v4533 = vadd.f32 %v4532, %v4524
    %v4534 = vld [vmem:[%s2] sm:$0xff]
    %4535 = vset.pattern.permute.xlu0 0
    %4536 = vperm.xlu0 %4535, %v4534
    %v4537 = vpop.permute.xlu0 %4536
    %vm4538 = vcmp.eq.s32.totalorder %v4435, %v4537
    %v4539 = vsel %vm4538, 1, 0
    %v4540 = vcvt.s32.f32 %v4539
    %v4541 = vmul.f32 %v4540, %v4518
    %4542 = vadd.xlane.f32.xlu0 %v4541
    %v4543 = vpop.xlane.xlu0 %4542
    %v4544 = vsub.f32 %v4533, %v4543
    %vm4545 = vcmask 7168
    %v4546 = vsel %vm4545, %v4544, 0.0
    %4547 = vadd.xlane.f32.xlu0 %v4546
    %v4548 = vpop.xlane.xlu0 %4547
    %v4549 = vrot.slane %v4548, 4
    %v4550 = vadd.f32 %v4548, %v4549
    %v4551 = vrot.slane %v4550, 2
    %v4552 = vadd.f32 %v4550, %v4551
    %v4553 = vrot.slane %v4552, 1
    %v4554 = vadd.f32 %v4552, %v4553
    %s4555 = vtos %v4554
    %s4556 = smul.f32 %s4555, 0.125
    %v4557 = vstv %s4556
    %v4558 = vadd.f32 %v4557, 0.0
    %4559 = vst [vmem:[#allocation4] sm:$0x1] %v4558
    // Predicated region
    $region46: #{_forward_core.1} parent=1 // pred_check
      _
    $region47: #{_forward_core.1} parent=1 // pred_check_branch
      %4561 = sbr.rel (0) target = $region49
    $region48: #{_forward_core.1} parent=1 // pred_region
      %4563 = vsyncadd [#allocation3], 0
      %s4565 = sshll.u32 [#allocation2], 4
      %s4566 = int_to_ptr.vmem [resolvable:$true] %s4565
      %s4567 = sshll.u32 %s11, 4
      %s4568 = int_to_ptr.hbm [resolvable:$true] %s4567
      %4570 = dma.vmem_to_hbm [thread:$0]  %s4566, 128, %s4568, [#allocation3]
    $region49: #{_forward_core.1} parent=1 // pred_fallthru
      _
    // Predicated region
    $region50: #{_forward_core.1} parent=1 // pred_check
      _
    $region51: #{_forward_core.1} parent=1 // pred_check_branch
      %4572 = sbr.rel (0) target = $region53
    $region52: #{_forward_core.1} parent=1 // pred_region
      %4574 = vsyncadd [#allocation5], 0
      %s4576 = sshll.u32 [#allocation4], 4
      %s4577 = int_to_ptr.vmem [resolvable:$true] %s4576
      %s4578 = sshll.u32 %s12, 4
      %s4579 = int_to_ptr.hbm [resolvable:$true] %s4578
      %4581 = dma.vmem_to_hbm [thread:$0]  %s4577, 16, %s4579, [#allocation5]
    $region53: #{_forward_core.1} parent=1 // pred_fallthru
      _
    // Predicated region
    $region54: #{_forward_core.1} parent=1 // pred_check
      _
    $region55: #{_forward_core.1} parent=1 // pred_check_branch
      %4583 = sbr.rel (0) target = $region57
    $region56: #{_forward_core.1} parent=1 // pred_region
      %4585 = dma.done [#allocation3], 128
    $region57: #{_forward_core.1} parent=1 // pred_fallthru
      _
    // Predicated region
    $region58: #{_forward_core.1} parent=1 // pred_check
      _
    $region59: #{_forward_core.1} parent=1 // pred_check_branch
      %4587 = sbr.rel (0) target = $region61
    $region60: #{_forward_core.1} parent=1 // pred_region
      %4589 = dma.done [#allocation5], 16
    $region61: #{_forward_core.1} parent=1 // pred_fallthru
      _
    %4590 = vsyncpa [#allocation3], 1
    %4591 = vsyncpa [#allocation5], 1

</llo_original>
